<compile_context>
chip_gen: v7x
topology: tpu7x:2x2x1
jax: 0.10.0
libtpu: 0.0.40
codegen_flags: <defaults>
</compile_context>

<pallas_src>
import jax
import jax.numpy as jnp
from jax.experimental import pallas as pl
from jax.experimental.pallas import tpu as pltpu

# ----- small synthetic hyperparameters (module defaults scaled down) -----
VOCAB = 50
EMBED_DIM = 32           # embedding_dim
NUM_CLASSES = 4          # num_classes
KERNEL_NUM = 8           # kernel_num (default 100, shrunk for a small example)
KERNEL_SIZES = (3, 4, 5)
SEQ_LEN = 16
BATCH = 16

KMAX = max(KERNEL_SIZES)
KMIN = min(KERNEL_SIZES)
LOUT = SEQ_LEN - KMIN + 1            # 14 : longest conv output length
LP = LOUT + KMAX - 1                 # 18 : padded token length
VP = 64                              # per-tap vocab padded up (50 -> 64)
KTOT = KMAX * VP                     # 320: im2col contraction depth
NCOLS = 128                          # 3*KERNEL_NUM padded to one lane width
NCLS_PAD = 128                       # NUM_CLASSES padded to one lane width


def _grid_steps_for_device():
    """1 step on single-TC chips (v5e/v6e); 2 steps on v7x (one per TensorCore)."""
    try:
        kind = jax.devices()[0].device_kind.lower()
    except Exception:
        return 1
    if "v7" in kind or "7x" in kind:
        return 2
    return 1


def textcnn_kernel(tok_ref, twc_ref, bconv_ref, mask_ref, wlin_ref, blin_ref,
                   out_ref):
    """One grid step = BLOCK_B batch elements.

    tok_ref   : (Bt, Lp)            int32  padded token ids (lane-dense)
    twc_ref   : (KTOT, NCOLS)       bf16   table-folded im2col conv weights
    bconv_ref : (1, NCOLS)          f32    packed conv bias (zeros in the pad)
    mask_ref  : (LOUT, NCOLS)       f32    1.0 where time pos valid for that column
    wlin_ref  : (NCOLS, NCLS_PAD)   bf16   padded linear weight
    blin_ref  : (1, NCLS_PAD)       f32    padded linear bias
    out_ref   : (Bt, NCLS_PAD)      f32    padded logits (lane-dense store)
    """
    Bt, Lp = tok_ref.shape
    ktot, ncols = twc_ref.shape
    lout = mask_ref.shape[0]
    kmax = Lp - lout + 1
    vp = ktot // kmax

    tok = tok_ref[...]                                              # (Bt, Lp) int32

    # ---- im2col one-hot: columns = (tap k, vocab id v), rows = (batch, time) ----
    # hit[b, t, k*vp + v] == 1  iff  tok[b, t + k] == v   (exact 0/1 -> exact gather)
    iota_c = jax.lax.broadcasted_iota(jnp.int32, (Bt, lout, ktot), 2)
    oh = None
    for k in range(kmax):                                           # static unroll (5)
        tok_k = tok[:, k:k + lout]                                  # tiny int32 slice
        hit = (tok_k[:, :, None] + (k * vp)) == iota_c
        oh = hit if oh is None else jnp.logical_or(oh, hit)
    oh = oh.astype(twc_ref.dtype).reshape(Bt * lout, ktot)          # bf16, lead-dim merge

    # ---- all conv branches in ONE deep-contraction MXU pass ----
    acc = jnp.dot(oh, twc_ref[...],
                  preferred_element_type=jnp.float32)               # (Bt*LOUT, NCOLS) f32
    acc = jnp.maximum(acc + bconv_ref[...], 0.0)                    # bias + ReLU (f32)

    # mask per-branch invalid tail time positions, then max_pool1d over time.
    # Post-ReLU values are >= 0, so multiplying invalid slots to 0 is exact.
    acc = acc.reshape(Bt, lout, ncols) * mask_ref[...][None]
    feat = jnp.max(acc, axis=1)                                     # (Bt, NCOLS)

    # TODO(synk): nn.Dropout is identity in eval mode; training-mode dropout not implemented.

    # feature2label on the packed/padded feature vector (pad rows of W are zero).
    logits = jnp.dot(feat.astype(wlin_ref.dtype), wlin_ref[...],
                     preferred_element_type=jnp.float32) + blin_ref[...]
    out_ref[...] = logits                                           # (Bt, 128) lane-dense


def textcnn_forward(tokens, params, *, block_b=None):
    emb_table, w3, b3, w4, b4, w5, b5, wl, bl = params
    B, L = tokens.shape
    V, E = emb_table.shape
    C = w3.shape[-1]
    kmax, kmin = max(KERNEL_SIZES), min(KERNEL_SIZES)
    lout = L - kmin + 1
    lp = lout + kmax - 1
    ktot = kmax * VP

    if block_b is None:
        block_b = B // _grid_steps_for_device()
    assert B % block_b == 0 and (block_b % 8 == 0 or block_b == B)

    # ---- pack / pad parameters (zeros in all pads -> mathematically inert) ----
    w_all = jnp.zeros((kmax, E, NCOLS), jnp.float32)
    b_all = jnp.zeros((1, NCOLS), jnp.float32)
    mask = jnp.zeros((lout, NCOLS), jnp.float32)
    for bi, (K, w, b) in enumerate(zip(KERNEL_SIZES, (w3, w4, w5), (b3, b4, b5))):
        w_all = w_all.at[:K, :, bi * C:(bi + 1) * C].set(w)
        b_all = b_all.at[:, bi * C:(bi + 1) * C].set(b)
        mask = mask.at[:L - K + 1, bi * C:(bi + 1) * C].set(1.0)

    # Fold the embedding table into the conv weights: TW[k] = table_pad @ W[k].
    # TODO(synk): at realistic vocab (tens of thousands) this folded slab no longer
    # fits VMEM (v7x first); switch to a token-driven row gather via
    # PrefetchScalarGridSpec / pl.Element instead of the in-kernel one-hot.
    table_pad = jnp.zeros((VP, E), jnp.float32).at[:V].set(emb_table)
    twc = jnp.einsum('ve,kec->kvc', table_pad, w_all,
                     precision=jax.lax.Precision.HIGHEST)           # (KMAX, VP, NCOLS) f32
    twc = twc.astype(jnp.bfloat16).reshape(ktot, NCOLS)

    wl_pad = (jnp.zeros((NCOLS, NCLS_PAD), jnp.float32)
              .at[:3 * C, :NUM_CLASSES].set(wl).astype(jnp.bfloat16))
    bl_pad = jnp.zeros((1, NCLS_PAD), jnp.float32).at[:, :NUM_CLASSES].set(bl)

    tokens_pad = jnp.pad(tokens, ((0, 0), (0, lp - L)))              # (B, Lp) int32

    flops = 2 * B * (lout * ktot * NCOLS + NCOLS * NCLS_PAD)
    bytes_accessed = (tokens_pad.size * 4 + twc.size * 2 + b_all.size * 4
                      + mask.size * 4 + wl_pad.size * 2 + bl_pad.size * 4
                      + B * NCLS_PAD * 4)

    out = pl.pallas_call(
        textcnn_kernel,
        out_shape=jax.ShapeDtypeStruct((B, NCLS_PAD), jnp.float32),
        grid=(B // block_b,),
        in_specs=[
            pl.BlockSpec((block_b, lp), lambda i: (i, 0)),
            # grid-invariant weight blocks (constant index_map -> kept resident)
            pl.BlockSpec((ktot, NCOLS), lambda i: (0, 0)),
            pl.BlockSpec((1, NCOLS), lambda i: (0, 0)),
            pl.BlockSpec((lout, NCOLS), lambda i: (0, 0)),
            pl.BlockSpec((NCOLS, NCLS_PAD), lambda i: (0, 0)),
            pl.BlockSpec((1, NCLS_PAD), lambda i: (0, 0)),
        ],
        out_specs=pl.BlockSpec((block_b, NCLS_PAD), lambda i: (i, 0)),
        compiler_params=pltpu.CompilerParams(
            dimension_semantics=("parallel",)),
        cost_estimate=pl.CostEstimate(
            flops=flops, transcendentals=0, bytes_accessed=bytes_accessed),
    )(tokens_pad, twc, b_all, mask, wl_pad, bl_pad)
    return out[:, :NUM_CLASSES]


def reference_forward(tokens, params):
    """Pure-JAX reference reproducing the PyTorch forward semantics (eval mode).
    Matmul weights are mirrored at bf16 (as fed to the MXU); all accumulation and
    elementwise math is f32, matching the kernel."""
    emb_table, w3, b3, w4, b4, w5, b5, wl, bl = params
    B, L = tokens.shape
    feats = []
    for K, w, b in zip(KERNEL_SIZES, (w3, w4, w5), (b3, b4, b5)):
        lout = L - K + 1
        # conv(embed(x))[t] == sum_k table[tok[t+k]] @ W[k]  (table folded into W)
        tw = jnp.einsum('ve,kec->kvc', emb_table, w,
                        precision=jax.lax.Precision.HIGHEST).astype(jnp.bfloat16)
        conv = sum(tw[k][tokens[:, k:k + lout]].astype(jnp.float32)
                   for k in range(K)) + b[None]                      # (B, lout, C)
        conv = jnp.maximum(conv, 0.0)                                # ReLU
        feats.append(jnp.max(conv, axis=1))                          # max over time
    feat = jnp.concatenate(feats, axis=1)                            # (B, 3C)
    return jnp.dot(feat.astype(jnp.bfloat16), wl.astype(jnp.bfloat16),
                   preferred_element_type=jnp.float32) + bl          # (B, NUM_CLASSES)


def init_params(key):
    C = KERNEL_NUM
    keys = jax.random.split(key, 9)
    emb_table = jax.random.normal(keys[0], (VOCAB, EMBED_DIM), jnp.float32) * 0.1
    w3 = jax.random.normal(keys[1], (3, EMBED_DIM, C), jnp.float32) * 0.1
    b3 = jax.random.normal(keys[2], (1, C), jnp.float32) * 0.1
    w4 = jax.random.normal(keys[3], (4, EMBED_DIM, C), jnp.float32) * 0.1
    b4 = jax.random.normal(keys[4], (1, C), jnp.float32) * 0.1
    w5 = jax.random.normal(keys[5], (5, EMBED_DIM, C), jnp.float32) * 0.1
    b5 = jax.random.normal(keys[6], (1, C), jnp.float32) * 0.1
    wl = jax.random.normal(keys[7], (3 * C, NUM_CLASSES), jnp.float32) * 0.1
    bl = jax.random.normal(keys[8], (1, NUM_CLASSES), jnp.float32) * 0.1
    return (emb_table, w3, b3, w4, b4, w5, b5, wl, bl)


if __name__ == "__main__":
    key = jax.random.PRNGKey(0)
    k_tok, k_par = jax.random.split(key)
    tokens = jax.random.randint(k_tok, (BATCH, SEQ_LEN), 0, VOCAB, dtype=jnp.int32)
    params = init_params(k_par)

    logits = textcnn_forward(tokens, params)
    logits = jax.block_until_ready(logits)

    ref = reference_forward(tokens, params)
    assert logits.shape == (BATCH, NUM_CLASSES)
    assert jnp.allclose(logits, ref, atol=2e-3, rtol=2e-3), (logits, ref)
    print("KERNEL_OK")
</pallas_src>

<mosaic_0001>
module attributes {stable_mosaic.version = 11 : i64} {
  func.func @textcnn_kernel(%arg0: i32, %arg1: memref<16x18xi32, #tpu.memory_space<vmem>>, %arg2: memref<320x128xbf16, #tpu.memory_space<vmem>>, %arg3: memref<1x128xf32, #tpu.memory_space<vmem>>, %arg4: memref<14x128xf32, #tpu.memory_space<vmem>>, %arg5: memref<128x128xbf16, #tpu.memory_space<vmem>>, %arg6: memref<1x128xf32, #tpu.memory_space<vmem>>, %arg7: memref<16x128xf32, #tpu.memory_space<vmem>>) attributes {dimension_semantics = [#tpu.dimension_semantics<parallel>], iteration_bounds = array<i64: 1>, scalar_prefetch = 0 : i64, scratch_operands = 0 : i64, tpu.core_type = #tpu.core_type<tc>, window_params = [{transform_indices = @transform_0, window_bounds = array<i64: 16, 18>}, {pipeline_mode = #tpu.pipeline_mode<synchronous>, transform_indices = @transform_1, window_bounds = array<i64: 320, 128>}, {pipeline_mode = #tpu.pipeline_mode<synchronous>, transform_indices = @transform_2, window_bounds = array<i64: 1, 128>}, {pipeline_mode = #tpu.pipeline_mode<synchronous>, transform_indices = @transform_3, window_bounds = array<i64: 14, 128>}, {pipeline_mode = #tpu.pipeline_mode<synchronous>, transform_indices = @transform_4, window_bounds = array<i64: 128, 128>}, {pipeline_mode = #tpu.pipeline_mode<synchronous>, transform_indices = @transform_5, window_bounds = array<i64: 1, 128>}, {transform_indices = @transform_6, window_bounds = array<i64: 16, 128>}]} {
    %c0 = arith.constant 0 : index
    %c0_0 = arith.constant 0 : index
    %0 = vector.load %arg1[%c0, %c0_0] : memref<16x18xi32, #tpu.memory_space<vmem>>, vector<16x18xi32>
    %1 = tpu.iota {dimensions = array<i32: 2>} : vector<16x14x320xi32>
    %2 = vector.extract_strided_slice %0 {offsets = [0, 0], sizes = [16, 14], strides = [1, 1]} : vector<16x18xi32> to vector<16x14xi32>
    %3 = vector.shape_cast %2 : vector<16x14xi32> to vector<16x14x1xi32>
    %c0_i32 = arith.constant 0 : i32
    %4 = vector.broadcast %c0_i32 : i32 to vector<16x14x1xi32>
    %5 = arith.addi %3, %4 : vector<16x14x1xi32>
    %6 = vector.broadcast %5 : vector<16x14x1xi32> to vector<16x14x320xi32>
    %7 = arith.cmpi eq, %6, %1 : vector<16x14x320xi32>
    %8 = vector.extract_strided_slice %0 {offsets = [0, 1], sizes = [16, 14], strides = [1, 1]} : vector<16x18xi32> to vector<16x14xi32>
    %9 = vector.shape_cast %8 : vector<16x14xi32> to vector<16x14x1xi32>
    %c64_i32 = arith.constant 64 : i32
    %10 = vector.broadcast %c64_i32 : i32 to vector<16x14x1xi32>
    %11 = arith.addi %9, %10 : vector<16x14x1xi32>
    %12 = vector.broadcast %11 : vector<16x14x1xi32> to vector<16x14x320xi32>
    %13 = arith.cmpi eq, %12, %1 : vector<16x14x320xi32>
    %14 = arith.ori %7, %13 : vector<16x14x320xi1>
    %15 = vector.extract_strided_slice %0 {offsets = [0, 2], sizes = [16, 14], strides = [1, 1]} : vector<16x18xi32> to vector<16x14xi32>
    %16 = vector.shape_cast %15 : vector<16x14xi32> to vector<16x14x1xi32>
    %c128_i32 = arith.constant 128 : i32
    %17 = vector.broadcast %c128_i32 : i32 to vector<16x14x1xi32>
    %18 = arith.addi %16, %17 : vector<16x14x1xi32>
    %19 = vector.broadcast %18 : vector<16x14x1xi32> to vector<16x14x320xi32>
    %20 = arith.cmpi eq, %19, %1 : vector<16x14x320xi32>
    %21 = arith.ori %14, %20 : vector<16x14x320xi1>
    %22 = vector.extract_strided_slice %0 {offsets = [0, 3], sizes = [16, 14], strides = [1, 1]} : vector<16x18xi32> to vector<16x14xi32>
    %23 = vector.shape_cast %22 : vector<16x14xi32> to vector<16x14x1xi32>
    %c192_i32 = arith.constant 192 : i32
    %24 = vector.broadcast %c192_i32 : i32 to vector<16x14x1xi32>
    %25 = arith.addi %23, %24 : vector<16x14x1xi32>
    %26 = vector.broadcast %25 : vector<16x14x1xi32> to vector<16x14x320xi32>
    %27 = arith.cmpi eq, %26, %1 : vector<16x14x320xi32>
    %28 = arith.ori %21, %27 : vector<16x14x320xi1>
    %29 = vector.extract_strided_slice %0 {offsets = [0, 4], sizes = [16, 14], strides = [1, 1]} : vector<16x18xi32> to vector<16x14xi32>
    %30 = vector.shape_cast %29 : vector<16x14xi32> to vector<16x14x1xi32>
    %c256_i32 = arith.constant 256 : i32
    %31 = vector.broadcast %c256_i32 : i32 to vector<16x14x1xi32>
    %32 = arith.addi %30, %31 : vector<16x14x1xi32>
    %33 = vector.broadcast %32 : vector<16x14x1xi32> to vector<16x14x320xi32>
    %34 = arith.cmpi eq, %33, %1 : vector<16x14x320xi32>
    %35 = arith.ori %28, %34 : vector<16x14x320xi1>
    %36 = arith.extui %35 : vector<16x14x320xi1> to vector<16x14x320xi32>
    %37 = arith.sitofp %36 : vector<16x14x320xi32> to vector<16x14x320xf32>
    %38 = arith.truncf %37 : vector<16x14x320xf32> to vector<16x14x320xbf16>
    %39 = vector.shape_cast %38 : vector<16x14x320xbf16> to vector<224x320xbf16>
    %c0_1 = arith.constant 0 : index
    %c0_2 = arith.constant 0 : index
    %40 = vector.load %arg2[%c0_1, %c0_2] : memref<320x128xbf16, #tpu.memory_space<vmem>>, vector<320x128xbf16>
    %cst = arith.constant dense<0.000000e+00> : vector<224x128xf32>
    %41 = tpu.matmul %39, %40, %cst {dimension_numbers = #tpu.dot_dimension_numbers<[1], [0], [0], [1], [0, 0, 1, 1], [], []>} : vector<224x320xbf16>, vector<320x128xbf16>, vector<224x128xf32> -> vector<224x128xf32>
    %c0_3 = arith.constant 0 : index
    %c0_4 = arith.constant 0 : index
    %42 = vector.load %arg3[%c0_3, %c0_4] : memref<1x128xf32, #tpu.memory_space<vmem>>, vector<1x128xf32>
    %43 = vector.broadcast %42 : vector<1x128xf32> to vector<224x128xf32>
    %44 = arith.addf %41, %43 : vector<224x128xf32>
    %cst_5 = arith.constant 0.000000e+00 : f32
    %45 = vector.broadcast %cst_5 : f32 to vector<224x128xf32>
    %46 = arith.maximumf %44, %45 : vector<224x128xf32>
    %47 = vector.shape_cast %46 : vector<224x128xf32> to vector<16x14x128xf32>
    %c0_6 = arith.constant 0 : index
    %c0_7 = arith.constant 0 : index
    %48 = vector.load %arg4[%c0_6, %c0_7] : memref<14x128xf32, #tpu.memory_space<vmem>>, vector<14x128xf32>
    %49 = vector.shape_cast %48 : vector<14x128xf32> to vector<1x14x128xf32>
    %50 = vector.broadcast %49 : vector<1x14x128xf32> to vector<16x14x128xf32>
    %51 = arith.mulf %47, %50 : vector<16x14x128xf32>
    %cst_8 = arith.constant dense<0xFF800000> : vector<16x128xf32>
    %52 = vector.multi_reduction <maximumf>, %51, %cst_8 [1] : vector<16x14x128xf32> to vector<16x128xf32>
    %53 = arith.truncf %52 : vector<16x128xf32> to vector<16x128xbf16>
    %c0_9 = arith.constant 0 : index
    %c0_10 = arith.constant 0 : index
    %54 = vector.load %arg5[%c0_9, %c0_10] : memref<128x128xbf16, #tpu.memory_space<vmem>>, vector<128x128xbf16>
    %cst_11 = arith.constant dense<0.000000e+00> : vector<16x128xf32>
    %55 = tpu.matmul %53, %54, %cst_11 {dimension_numbers = #tpu.dot_dimension_numbers<[1], [0], [0], [1], [0, 0, 1, 1], [], []>} : vector<16x128xbf16>, vector<128x128xbf16>, vector<16x128xf32> -> vector<16x128xf32>
    %c0_12 = arith.constant 0 : index
    %c0_13 = arith.constant 0 : index
    %56 = vector.load %arg6[%c0_12, %c0_13] : memref<1x128xf32, #tpu.memory_space<vmem>>, vector<1x128xf32>
    %57 = vector.broadcast %56 : vector<1x128xf32> to vector<16x128xf32>
    %58 = arith.addf %55, %57 : vector<16x128xf32>
    %c0_14 = arith.constant 0 : index
    %c0_15 = arith.constant 0 : index
    %59 = vector.load %arg7[%c0_14, %c0_15] : memref<16x128xf32, #tpu.memory_space<vmem>>, vector<16x128xf32>
    tpu.vector_store %arg7[%c0_14, %c0_15], %58 {strides = array<i32>} : memref<16x128xf32, #tpu.memory_space<vmem>>, vector<16x128xf32>,
    return
  }
  func.func @transform_0(%arg0: i32) -> (i32, i32) {
    %c0_i32 = arith.constant 0 : i32
    %c0_i32_0 = arith.constant 0 : i32
    return %arg0, %c0_i32 : i32, i32
  }
  func.func @transform_1(%arg0: i32) -> (i32, i32) {
    %c0_i32 = arith.constant 0 : i32
    %c0_i32_0 = arith.constant 0 : i32
    %c0_i32_1 = arith.constant 0 : i32
    return %c0_i32, %c0_i32_0 : i32, i32
  }
  func.func @transform_2(%arg0: i32) -> (i32, i32) {
    %c0_i32 = arith.constant 0 : i32
    %c0_i32_0 = arith.constant 0 : i32
    %c0_i32_1 = arith.constant 0 : i32
    return %c0_i32, %c0_i32_0 : i32, i32
  }
  func.func @transform_3(%arg0: i32) -> (i32, i32) {
    %c0_i32 = arith.constant 0 : i32
    %c0_i32_0 = arith.constant 0 : i32
    %c0_i32_1 = arith.constant 0 : i32
    return %c0_i32, %c0_i32_0 : i32, i32
  }
  func.func @transform_4(%arg0: i32) -> (i32, i32) {
    %c0_i32 = arith.constant 0 : i32
    %c0_i32_0 = arith.constant 0 : i32
    %c0_i32_1 = arith.constant 0 : i32
    return %c0_i32, %c0_i32_0 : i32, i32
  }
  func.func @transform_5(%arg0: i32) -> (i32, i32) {
    %c0_i32 = arith.constant 0 : i32
    %c0_i32_0 = arith.constant 0 : i32
    %c0_i32_1 = arith.constant 0 : i32
    return %c0_i32, %c0_i32_0 : i32, i32
  }
  func.func @transform_6(%arg0: i32) -> (i32, i32) {
    %c0_i32 = arith.constant 0 : i32
    %c0_i32_0 = arith.constant 0 : i32
    return %arg0, %c0_i32 : i32, i32
  }
}

</mosaic_0001>

<llo_original>
// kernel: tpu_custom_call.1
$region0: #{tpu_custom_call.1}
  #allocation0 [shape = 'u32[]', space=smem, size = 0x4, offset = 0x4, fixed_abs, tag = 'smem constant byte address 0x4 - core index']
  #allocation1 [shape = 'u32[144,128]{1,0:T(1,128)}', space=vmem, size = 0x12000, scoped, tag = 'internal scratch']
  %s0 = inlined_call_operand.hbm [shape: s32[16,18], index: 0, kind: input, shape index: {}]
  %s1 = inlined_call_operand.hbm [shape: bf16[320,128], index: 1, kind: input, shape index: {}]
  %s2 = inlined_call_operand.vmem [shape: f32[1,128], index: 2, kind: input, shape index: {}]
  %s3 = inlined_call_operand.hbm [shape: f32[14,128], index: 3, kind: input, shape index: {}]
  %s4 = inlined_call_operand.hbm [shape: bf16[128,128], index: 4, kind: input, shape index: {}]
  %s5 = inlined_call_operand.vmem [shape: f32[1,128], index: 5, kind: input, shape index: {}]
  %s6 = inlined_call_operand.hbm [shape: f32[16,128], index: 6, kind: output, shape index: {}]
  %s7 = sld [smem:[#allocation0]]
  $region50: #{tpu_custom_call.1} parent=0
    _
  %s9 = ssub.s32 1, %s7
  %s10 = scalar_select 0, %s9, %s7
  $region1: #{tpu_custom_call.1} parent=0
    #allocation2 [shape = 'u8[8192]{0}', space=vmem, size = 0x2000, scoped, tag = 'input window, operand 0, single buffered']
    #allocation3 [shape = 's32[1]{0}', space=sflag, size = 0x4, scoped, tag = 'scoped memory for tpu_custom_call.1']
    #allocation4 [shape = 's32[1]{0}', space=sflag, size = 0x4, scoped, tag = 'scoped memory for tpu_custom_call.1']
    #allocation5 [shape = 'u8[81920]{0}', space=vmem, size = 0x14000, scoped, tag = 'input window, operand 1, single buffered']
    #allocation6 [shape = 's32[1]{0}', space=sflag, size = 0x4, scoped, tag = 'scoped memory for tpu_custom_call.1']
    #allocation7 [shape = 'u8[8192]{0}', space=vmem, size = 0x2000, scoped, tag = 'input window, operand 3, single buffered']
    #allocation8 [shape = 'u8[32768]{0}', space=vmem, size = 0x8000, scoped, tag = 'input window, operand 4, single buffered']
    #allocation9 [shape = 's32[1]{0}', space=sflag, size = 0x4, scoped, tag = 'scoped memory for tpu_custom_call.1']
    #allocation10 [shape = 'u8[8192]{0}', space=vmem, size = 0x2000, scoped, tag = 'output window, operand 0, single buffered']
    %11 = vsyncpa [#allocation3], 0
    %12 = vsyncpa [#allocation6], 0
    %13 = vsyncpa [#allocation9], 0
    %14 = vsyncpa [#allocation4], 0
    // Predicated region
    $region2: #{tpu_custom_call.1} parent=1 // pred_check
      _
    $region3: #{tpu_custom_call.1} parent=1 // pred_check_branch
      %16 = sbr.rel (0) target = $region5
    $region4: #{tpu_custom_call.1} parent=1 // pred_region
      %s18 = ssub.s32 256, 256
      %19 = vsyncadd [#allocation3], %s18
      %s20 = sshll.u32 [#allocation2], 4
      %s21 = int_to_ptr.vmem [resolvable:$true] %s20
      %26 = dma.hbm_to_vmem [thread:$0]  %s0, 256, %s21, [#allocation3], 128, 128, 8
    $region5: #{tpu_custom_call.1} parent=1 // pred_fallthru
      _
    // Predicated region
    $region6: #{tpu_custom_call.1} parent=1 // pred_check
      _
    $region7: #{tpu_custom_call.1} parent=1 // pred_check_branch
      %28 = sbr.rel (0) target = $region9
    $region8: #{tpu_custom_call.1} parent=1 // pred_region
      %s30 = ssub.s32 2560, 2560
      %31 = vsyncadd [#allocation6], %s30
      %s32 = sshll.u32 [#allocation5], 4
      %s33 = int_to_ptr.vmem [resolvable:$true] %s32
      %38 = dma.hbm_to_vmem [thread:$0]  %s1, 2560, %s33, [#allocation6], 64, 64, 4
    $region9: #{tpu_custom_call.1} parent=1 // pred_fallthru
      _
    // Predicated region
    $region10: #{tpu_custom_call.1} parent=1 // pred_check
      _
    $region11: #{tpu_custom_call.1} parent=1 // pred_check_branch
      %40 = sbr.rel (0) target = $region13
    $region12: #{tpu_custom_call.1} parent=1 // pred_region
      _
    $region13: #{tpu_custom_call.1} parent=1 // pred_fallthru
      _
    // Predicated region
    $region14: #{tpu_custom_call.1} parent=1 // pred_check
      _
    $region15: #{tpu_custom_call.1} parent=1 // pred_check_branch
      %42 = sbr.rel (0) target = $region17
    $region16: #{tpu_custom_call.1} parent=1 // pred_region
      %s44 = ssub.s32 256, 256
      %45 = vsyncadd [#allocation6], %s44
      %s46 = sshll.u32 [#allocation7], 4
      %s47 = int_to_ptr.vmem [resolvable:$true] %s46
      %52 = dma.hbm_to_vmem [thread:$0]  %s3, 256, %s47, [#allocation6], 128, 128, 8
    $region17: #{tpu_custom_call.1} parent=1 // pred_fallthru
      _
    // Predicated region
    $region18: #{tpu_custom_call.1} parent=1 // pred_check
      _
    $region19: #{tpu_custom_call.1} parent=1 // pred_check_branch
      %54 = sbr.rel (0) target = $region21
    $region20: #{tpu_custom_call.1} parent=1 // pred_region
      %s56 = ssub.s32 1024, 1024
      %57 = vsyncadd [#allocation9], %s56
      %s58 = sshll.u32 [#allocation8], 4
      %s59 = int_to_ptr.vmem [resolvable:$true] %s58
      %64 = dma.hbm_to_vmem [thread:$0]  %s4, 1024, %s59, [#allocation9], 64, 64, 4
    $region21: #{tpu_custom_call.1} parent=1 // pred_fallthru
      _
    // Predicated region
    $region22: #{tpu_custom_call.1} parent=1 // pred_check
      _
    $region23: #{tpu_custom_call.1} parent=1 // pred_check_branch
      %66 = sbr.rel (0) target = $region25
    $region24: #{tpu_custom_call.1} parent=1 // pred_region
      _
    $region25: #{tpu_custom_call.1} parent=1 // pred_fallthru
      _
    // Predicated region
    $region26: #{tpu_custom_call.1} parent=1 // pred_check
      _
    $region27: #{tpu_custom_call.1} parent=1 // pred_check_branch
      %68 = sbr.rel (0) target = $region29
    $region28: #{tpu_custom_call.1} parent=1 // pred_region
      %69 = dma.done [#allocation3], 256
    $region29: #{tpu_custom_call.1} parent=1 // pred_fallthru
      _
    // Predicated region
    $region30: #{tpu_custom_call.1} parent=1 // pred_check
      _
    $region31: #{tpu_custom_call.1} parent=1 // pred_check_branch
      %71 = sbr.rel (0) target = $region33
    $region32: #{tpu_custom_call.1} parent=1 // pred_region
      %72 = dma.done [#allocation6], 2560
    $region33: #{tpu_custom_call.1} parent=1 // pred_fallthru
      _
    // Predicated region
    $region34: #{tpu_custom_call.1} parent=1 // pred_check
      _
    $region35: #{tpu_custom_call.1} parent=1 // pred_check_branch
      %74 = sbr.rel (0) target = $region37
    $region36: #{tpu_custom_call.1} parent=1 // pred_region
      %75 = dma.done [#allocation6], 256
    $region37: #{tpu_custom_call.1} parent=1 // pred_fallthru
      _
    // Predicated region
    $region38: #{tpu_custom_call.1} parent=1 // pred_check
      _
    $region39: #{tpu_custom_call.1} parent=1 // pred_check_branch
      %77 = sbr.rel (0) target = $region41
    $region40: #{tpu_custom_call.1} parent=1 // pred_region
      %78 = dma.done [#allocation9], 1024
    $region41: #{tpu_custom_call.1} parent=1 // pred_fallthru
      _
    %v80 = vld [vmem:[#allocation2] sm:$0xff]
    %v81 = vld [vmem:[#allocation2 + $0x8] sm:$0xff]
    %v82 = vlaneseq
    %v83 = vand.u32 %v82, 127
    %v84 = vadd.s32 %v83, 128
    %v85 = vadd.s32 %v83, 256
    %v86 = vlaneseq
    %v87 = vshrl.u32 %v86, 7
    %v88 = vsub.s32 0, %v87
    %v89 = vrot.slane %v80, %v88
    %91 = vbcast.lane.b32.xlu0 %v89, 256
    %v92 = vpop.permute.xlu0 %91
    %s94 = sor.u32 256, 8
    %95 = vbcast.lane.b32.xlu0 %v89, %s94
    %v96 = vpop.permute.xlu0 %95
    %v97 = vlaneseq
    %v98 = vshrl.u32 %v97, 7
    %v99 = vsub.s32 1, %v98
    %v100 = vrot.slane %v80, %v99
    %102 = vbcast.lane.b32.xlu0 %v100, 256
    %v103 = vpop.permute.xlu0 %102
    %s105 = sor.u32 256, 8
    %106 = vbcast.lane.b32.xlu0 %v100, %s105
    %v107 = vpop.permute.xlu0 %106
    %v108 = vlaneseq
    %v109 = vshrl.u32 %v108, 7
    %v110 = vsub.s32 2, %v109
    %v111 = vrot.slane %v80, %v110
    %113 = vbcast.lane.b32.xlu0 %v111, 256
    %v114 = vpop.permute.xlu0 %113
    %s116 = sor.u32 256, 8
    %117 = vbcast.lane.b32.xlu0 %v111, %s116
    %v118 = vpop.permute.xlu0 %117
    %v119 = vlaneseq
    %v120 = vshrl.u32 %v119, 7
    %v121 = vsub.s32 3, %v120
    %v122 = vrot.slane %v80, %v121
    %124 = vbcast.lane.b32.xlu0 %v122, 256
    %v125 = vpop.permute.xlu0 %124
    %s127 = sor.u32 256, 8
    %128 = vbcast.lane.b32.xlu0 %v122, %s127
    %v129 = vpop.permute.xlu0 %128
    %v130 = vlaneseq
    %v131 = vshrl.u32 %v130, 7
    %v132 = vsub.s32 4, %v131
    %v133 = vrot.slane %v80, %v132
    %135 = vbcast.lane.b32.xlu0 %v133, 256
    %v136 = vpop.permute.xlu0 %135
    %s138 = sor.u32 256, 8
    %139 = vbcast.lane.b32.xlu0 %v133, %s138
    %v140 = vpop.permute.xlu0 %139
    %v141 = vlaneseq
    %v142 = vshrl.u32 %v141, 7
    %v143 = vsub.s32 5, %v142
    %v144 = vrot.slane %v80, %v143
    %146 = vbcast.lane.b32.xlu0 %v144, 256
    %v147 = vpop.permute.xlu0 %146
    %s149 = sor.u32 256, 8
    %150 = vbcast.lane.b32.xlu0 %v144, %s149
    %v151 = vpop.permute.xlu0 %150
    %v152 = vlaneseq
    %v153 = vshrl.u32 %v152, 7
    %v154 = vsub.s32 6, %v153
    %v155 = vrot.slane %v80, %v154
    %157 = vbcast.lane.b32.xlu0 %v155, 256
    %v158 = vpop.permute.xlu0 %157
    %s160 = sor.u32 256, 8
    %161 = vbcast.lane.b32.xlu0 %v155, %s160
    %v162 = vpop.permute.xlu0 %161
    %v163 = vlaneseq
    %v164 = vshrl.u32 %v163, 7
    %v165 = vsub.s32 7, %v164
    %v166 = vrot.slane %v80, %v165
    %168 = vbcast.lane.b32.xlu0 %v166, 256
    %v169 = vpop.permute.xlu0 %168
    %s171 = sor.u32 256, 8
    %172 = vbcast.lane.b32.xlu0 %v166, %s171
    %v173 = vpop.permute.xlu0 %172
    %v174 = vlaneseq
    %v175 = vshrl.u32 %v174, 7
    %v176 = vsub.s32 0, %v175
    %v177 = vrot.slane %v81, %v176
    %179 = vbcast.lane.b32.xlu0 %v177, 256
    %v180 = vpop.permute.xlu0 %179
    %s182 = sor.u32 256, 8
    %183 = vbcast.lane.b32.xlu0 %v177, %s182
    %v184 = vpop.permute.xlu0 %183
    %v185 = vlaneseq
    %v186 = vshrl.u32 %v185, 7
    %v187 = vsub.s32 1, %v186
    %v188 = vrot.slane %v81, %v187
    %190 = vbcast.lane.b32.xlu0 %v188, 256
    %v191 = vpop.permute.xlu0 %190
    %s193 = sor.u32 256, 8
    %194 = vbcast.lane.b32.xlu0 %v188, %s193
    %v195 = vpop.permute.xlu0 %194
    %v196 = vlaneseq
    %v197 = vshrl.u32 %v196, 7
    %v198 = vsub.s32 2, %v197
    %v199 = vrot.slane %v81, %v198
    %201 = vbcast.lane.b32.xlu0 %v199, 256
    %v202 = vpop.permute.xlu0 %201
    %s204 = sor.u32 256, 8
    %205 = vbcast.lane.b32.xlu0 %v199, %s204
    %v206 = vpop.permute.xlu0 %205
    %v207 = vlaneseq
    %v208 = vshrl.u32 %v207, 7
    %v209 = vsub.s32 3, %v208
    %v210 = vrot.slane %v81, %v209
    %212 = vbcast.lane.b32.xlu0 %v210, 256
    %v213 = vpop.permute.xlu0 %212
    %s215 = sor.u32 256, 8
    %216 = vbcast.lane.b32.xlu0 %v210, %s215
    %v217 = vpop.permute.xlu0 %216
    %v218 = vlaneseq
    %v219 = vshrl.u32 %v218, 7
    %v220 = vsub.s32 4, %v219
    %v221 = vrot.slane %v81, %v220
    %223 = vbcast.lane.b32.xlu0 %v221, 256
    %v224 = vpop.permute.xlu0 %223
    %s226 = sor.u32 256, 8
    %227 = vbcast.lane.b32.xlu0 %v221, %s226
    %v228 = vpop.permute.xlu0 %227
    %v229 = vlaneseq
    %v230 = vshrl.u32 %v229, 7
    %v231 = vsub.s32 5, %v230
    %v232 = vrot.slane %v81, %v231
    %234 = vbcast.lane.b32.xlu0 %v232, 256
    %v235 = vpop.permute.xlu0 %234
    %s237 = sor.u32 256, 8
    %238 = vbcast.lane.b32.xlu0 %v232, %s237
    %v239 = vpop.permute.xlu0 %238
    %v240 = vlaneseq
    %v241 = vshrl.u32 %v240, 7
    %v242 = vsub.s32 6, %v241
    %v243 = vrot.slane %v81, %v242
    %245 = vbcast.lane.b32.xlu0 %v243, 256
    %v246 = vpop.permute.xlu0 %245
    %s248 = sor.u32 256, 8
    %249 = vbcast.lane.b32.xlu0 %v243, %s248
    %v250 = vpop.permute.xlu0 %249
    %v251 = vlaneseq
    %v252 = vshrl.u32 %v251, 7
    %v253 = vsub.s32 7, %v252
    %v254 = vrot.slane %v81, %v253
    %256 = vbcast.lane.b32.xlu0 %v254, 256
    %v257 = vpop.permute.xlu0 %256
    %s259 = sor.u32 256, 8
    %260 = vbcast.lane.b32.xlu0 %v254, %s259
    %v261 = vpop.permute.xlu0 %260
    %vm262 = vcmp.eq.s32.totalorder %v92, %v83
    %vm263 = vcmp.eq.s32.totalorder %v92, %v84
    %vm264 = vcmp.eq.s32.totalorder %v92, %v85
    %vm265 = vcmp.eq.s32.totalorder %v96, %v83
    %vm266 = vcmp.eq.s32.totalorder %v96, %v84
    %vm267 = vcmp.eq.s32.totalorder %v96, %v85
    %vm268 = vcmp.eq.s32.totalorder %v103, %v83
    %vm269 = vcmp.eq.s32.totalorder %v103, %v84
    %vm270 = vcmp.eq.s32.totalorder %v103, %v85
    %vm271 = vcmp.eq.s32.totalorder %v107, %v83
    %vm272 = vcmp.eq.s32.totalorder %v107, %v84
    %vm273 = vcmp.eq.s32.totalorder %v107, %v85
    %vm274 = vcmp.eq.s32.totalorder %v114, %v83
    %vm275 = vcmp.eq.s32.totalorder %v114, %v84
    %vm276 = vcmp.eq.s32.totalorder %v114, %v85
    %vm277 = vcmp.eq.s32.totalorder %v118, %v83
    %vm278 = vcmp.eq.s32.totalorder %v118, %v84
    %vm279 = vcmp.eq.s32.totalorder %v118, %v85
    %vm280 = vcmp.eq.s32.totalorder %v125, %v83
    %vm281 = vcmp.eq.s32.totalorder %v125, %v84
    %vm282 = vcmp.eq.s32.totalorder %v125, %v85
    %vm283 = vcmp.eq.s32.totalorder %v129, %v83
    %vm284 = vcmp.eq.s32.totalorder %v129, %v84
    %vm285 = vcmp.eq.s32.totalorder %v129, %v85
    %vm286 = vcmp.eq.s32.totalorder %v136, %v83
    %vm287 = vcmp.eq.s32.totalorder %v136, %v84
    %vm288 = vcmp.eq.s32.totalorder %v136, %v85
    %vm289 = vcmp.eq.s32.totalorder %v140, %v83
    %vm290 = vcmp.eq.s32.totalorder %v140, %v84
    %vm291 = vcmp.eq.s32.totalorder %v140, %v85
    %vm292 = vcmp.eq.s32.totalorder %v147, %v83
    %vm293 = vcmp.eq.s32.totalorder %v147, %v84
    %vm294 = vcmp.eq.s32.totalorder %v147, %v85
    %vm295 = vcmp.eq.s32.totalorder %v151, %v83
    %vm296 = vcmp.eq.s32.totalorder %v151, %v84
    %vm297 = vcmp.eq.s32.totalorder %v151, %v85
    %vm298 = vcmp.eq.s32.totalorder %v158, %v83
    %vm299 = vcmp.eq.s32.totalorder %v158, %v84
    %vm300 = vcmp.eq.s32.totalorder %v158, %v85
    %vm301 = vcmp.eq.s32.totalorder %v162, %v83
    %vm302 = vcmp.eq.s32.totalorder %v162, %v84
    %vm303 = vcmp.eq.s32.totalorder %v162, %v85
    %vm304 = vcmp.eq.s32.totalorder %v169, %v83
    %vm305 = vcmp.eq.s32.totalorder %v169, %v84
    %vm306 = vcmp.eq.s32.totalorder %v169, %v85
    %vm307 = vcmp.eq.s32.totalorder %v173, %v83
    %vm308 = vcmp.eq.s32.totalorder %v173, %v84
    %vm309 = vcmp.eq.s32.totalorder %v173, %v85
    %vm310 = vcmp.eq.s32.totalorder %v180, %v83
    %vm311 = vcmp.eq.s32.totalorder %v180, %v84
    %vm312 = vcmp.eq.s32.totalorder %v180, %v85
    %vm313 = vcmp.eq.s32.totalorder %v184, %v83
    %vm314 = vcmp.eq.s32.totalorder %v184, %v84
    %vm315 = vcmp.eq.s32.totalorder %v184, %v85
    %vm316 = vcmp.eq.s32.totalorder %v191, %v83
    %vm317 = vcmp.eq.s32.totalorder %v191, %v84
    %vm318 = vcmp.eq.s32.totalorder %v191, %v85
    %vm319 = vcmp.eq.s32.totalorder %v195, %v83
    %vm320 = vcmp.eq.s32.totalorder %v195, %v84
    %vm321 = vcmp.eq.s32.totalorder %v195, %v85
    %vm322 = vcmp.eq.s32.totalorder %v202, %v83
    %vm323 = vcmp.eq.s32.totalorder %v202, %v84
    %vm324 = vcmp.eq.s32.totalorder %v202, %v85
    %vm325 = vcmp.eq.s32.totalorder %v206, %v83
    %vm326 = vcmp.eq.s32.totalorder %v206, %v84
    %vm327 = vcmp.eq.s32.totalorder %v206, %v85
    %vm328 = vcmp.eq.s32.totalorder %v213, %v83
    %vm329 = vcmp.eq.s32.totalorder %v213, %v84
    %vm330 = vcmp.eq.s32.totalorder %v213, %v85
    %vm331 = vcmp.eq.s32.totalorder %v217, %v83
    %vm332 = vcmp.eq.s32.totalorder %v217, %v84
    %vm333 = vcmp.eq.s32.totalorder %v217, %v85
    %vm334 = vcmp.eq.s32.totalorder %v224, %v83
    %vm335 = vcmp.eq.s32.totalorder %v224, %v84
    %vm336 = vcmp.eq.s32.totalorder %v224, %v85
    %vm337 = vcmp.eq.s32.totalorder %v228, %v83
    %vm338 = vcmp.eq.s32.totalorder %v228, %v84
    %vm339 = vcmp.eq.s32.totalorder %v228, %v85
    %vm340 = vcmp.eq.s32.totalorder %v235, %v83
    %vm341 = vcmp.eq.s32.totalorder %v235, %v84
    %vm342 = vcmp.eq.s32.totalorder %v235, %v85
    %vm343 = vcmp.eq.s32.totalorder %v239, %v83
    %vm344 = vcmp.eq.s32.totalorder %v239, %v84
    %vm345 = vcmp.eq.s32.totalorder %v239, %v85
    %vm346 = vcmp.eq.s32.totalorder %v246, %v83
    %vm347 = vcmp.eq.s32.totalorder %v246, %v84
    %vm348 = vcmp.eq.s32.totalorder %v246, %v85
    %vm349 = vcmp.eq.s32.totalorder %v250, %v83
    %vm350 = vcmp.eq.s32.totalorder %v250, %v84
    %vm351 = vcmp.eq.s32.totalorder %v250, %v85
    %vm352 = vcmp.eq.s32.totalorder %v257, %v83
    %vm353 = vcmp.eq.s32.totalorder %v257, %v84
    %vm354 = vcmp.eq.s32.totalorder %v257, %v85
    %vm355 = vcmp.eq.s32.totalorder %v261, %v83
    %vm356 = vcmp.eq.s32.totalorder %v261, %v84
    %vm357 = vcmp.eq.s32.totalorder %v261, %v85
    %s359 = sor.u32 256, 1
    %360 = vbcast.lane.b32.xlu0 %v89, %s359
    %v361 = vpop.permute.xlu0 %360
    %s363 = sor.u32 256, 9
    %364 = vbcast.lane.b32.xlu0 %v89, %s363
    %v365 = vpop.permute.xlu0 %364
    %s367 = sor.u32 256, 1
    %368 = vbcast.lane.b32.xlu0 %v100, %s367
    %v369 = vpop.permute.xlu0 %368
    %s371 = sor.u32 256, 9
    %372 = vbcast.lane.b32.xlu0 %v100, %s371
    %v373 = vpop.permute.xlu0 %372
    %s375 = sor.u32 256, 1
    %376 = vbcast.lane.b32.xlu0 %v111, %s375
    %v377 = vpop.permute.xlu0 %376
    %s379 = sor.u32 256, 9
    %380 = vbcast.lane.b32.xlu0 %v111, %s379
    %v381 = vpop.permute.xlu0 %380
    %s383 = sor.u32 256, 1
    %384 = vbcast.lane.b32.xlu0 %v122, %s383
    %v385 = vpop.permute.xlu0 %384
    %s387 = sor.u32 256, 9
    %388 = vbcast.lane.b32.xlu0 %v122, %s387
    %v389 = vpop.permute.xlu0 %388
    %s391 = sor.u32 256, 1
    %392 = vbcast.lane.b32.xlu0 %v133, %s391
    %v393 = vpop.permute.xlu0 %392
    %s395 = sor.u32 256, 9
    %396 = vbcast.lane.b32.xlu0 %v133, %s395
    %v397 = vpop.permute.xlu0 %396
    %s399 = sor.u32 256, 1
    %400 = vbcast.lane.b32.xlu0 %v144, %s399
    %v401 = vpop.permute.xlu0 %400
    %s403 = sor.u32 256, 9
    %404 = vbcast.lane.b32.xlu0 %v144, %s403
    %v405 = vpop.permute.xlu0 %404
    %s407 = sor.u32 256, 1
    %408 = vbcast.lane.b32.xlu0 %v155, %s407
    %v409 = vpop.permute.xlu0 %408
    %s411 = sor.u32 256, 9
    %412 = vbcast.lane.b32.xlu0 %v155, %s411
    %v413 = vpop.permute.xlu0 %412
    %s415 = sor.u32 256, 1
    %416 = vbcast.lane.b32.xlu0 %v166, %s415
    %v417 = vpop.permute.xlu0 %416
    %s419 = sor.u32 256, 9
    %420 = vbcast.lane.b32.xlu0 %v166, %s419
    %v421 = vpop.permute.xlu0 %420
    %s423 = sor.u32 256, 1
    %424 = vbcast.lane.b32.xlu0 %v177, %s423
    %v425 = vpop.permute.xlu0 %424
    %s427 = sor.u32 256, 9
    %428 = vbcast.lane.b32.xlu0 %v177, %s427
    %v429 = vpop.permute.xlu0 %428
    %s431 = sor.u32 256, 1
    %432 = vbcast.lane.b32.xlu0 %v188, %s431
    %v433 = vpop.permute.xlu0 %432
    %s435 = sor.u32 256, 9
    %436 = vbcast.lane.b32.xlu0 %v188, %s435
    %v437 = vpop.permute.xlu0 %436
    %s439 = sor.u32 256, 1
    %440 = vbcast.lane.b32.xlu0 %v199, %s439
    %v441 = vpop.permute.xlu0 %440
    %s443 = sor.u32 256, 9
    %444 = vbcast.lane.b32.xlu0 %v199, %s443
    %v445 = vpop.permute.xlu0 %444
    %s447 = sor.u32 256, 1
    %448 = vbcast.lane.b32.xlu0 %v210, %s447
    %v449 = vpop.permute.xlu0 %448
    %s451 = sor.u32 256, 9
    %452 = vbcast.lane.b32.xlu0 %v210, %s451
    %v453 = vpop.permute.xlu0 %452
    %s455 = sor.u32 256, 1
    %456 = vbcast.lane.b32.xlu0 %v221, %s455
    %v457 = vpop.permute.xlu0 %456
    %s459 = sor.u32 256, 9
    %460 = vbcast.lane.b32.xlu0 %v221, %s459
    %v461 = vpop.permute.xlu0 %460
    %s463 = sor.u32 256, 1
    %464 = vbcast.lane.b32.xlu0 %v232, %s463
    %v465 = vpop.permute.xlu0 %464
    %s467 = sor.u32 256, 9
    %468 = vbcast.lane.b32.xlu0 %v232, %s467
    %v469 = vpop.permute.xlu0 %468
    %s471 = sor.u32 256, 1
    %472 = vbcast.lane.b32.xlu0 %v243, %s471
    %v473 = vpop.permute.xlu0 %472
    %s475 = sor.u32 256, 9
    %476 = vbcast.lane.b32.xlu0 %v243, %s475
    %v477 = vpop.permute.xlu0 %476
    %s479 = sor.u32 256, 1
    %480 = vbcast.lane.b32.xlu0 %v254, %s479
    %v481 = vpop.permute.xlu0 %480
    %s483 = sor.u32 256, 9
    %484 = vbcast.lane.b32.xlu0 %v254, %s483
    %v485 = vpop.permute.xlu0 %484
    %v486 = vadd.s32 %v361, 64
    %v487 = vadd.s32 %v365, 64
    %v488 = vadd.s32 %v369, 64
    %v489 = vadd.s32 %v373, 64
    %v490 = vadd.s32 %v377, 64
    %v491 = vadd.s32 %v381, 64
    %v492 = vadd.s32 %v385, 64
    %v493 = vadd.s32 %v389, 64
    %v494 = vadd.s32 %v393, 64
    %v495 = vadd.s32 %v397, 64
    %v496 = vadd.s32 %v401, 64
    %v497 = vadd.s32 %v405, 64
    %v498 = vadd.s32 %v409, 64
    %v499 = vadd.s32 %v413, 64
    %v500 = vadd.s32 %v417, 64
    %v501 = vadd.s32 %v421, 64
    %v502 = vadd.s32 %v425, 64
    %v503 = vadd.s32 %v429, 64
    %v504 = vadd.s32 %v433, 64
    %v505 = vadd.s32 %v437, 64
    %v506 = vadd.s32 %v441, 64
    %v507 = vadd.s32 %v445, 64
    %v508 = vadd.s32 %v449, 64
    %v509 = vadd.s32 %v453, 64
    %v510 = vadd.s32 %v457, 64
    %v511 = vadd.s32 %v461, 64
    %v512 = vadd.s32 %v465, 64
    %v513 = vadd.s32 %v469, 64
    %v514 = vadd.s32 %v473, 64
    %v515 = vadd.s32 %v477, 64
    %v516 = vadd.s32 %v481, 64
    %v517 = vadd.s32 %v485, 64
    %vm518 = vcmp.eq.s32.totalorder %v486, %v83
    %vm519 = vcmp.eq.s32.totalorder %v486, %v84
    %vm520 = vcmp.eq.s32.totalorder %v486, %v85
    %vm521 = vcmp.eq.s32.totalorder %v487, %v83
    %vm522 = vcmp.eq.s32.totalorder %v487, %v84
    %vm523 = vcmp.eq.s32.totalorder %v487, %v85
    %vm524 = vcmp.eq.s32.totalorder %v488, %v83
    %vm525 = vcmp.eq.s32.totalorder %v488, %v84
    %vm526 = vcmp.eq.s32.totalorder %v488, %v85
    %vm527 = vcmp.eq.s32.totalorder %v489, %v83
    %vm528 = vcmp.eq.s32.totalorder %v489, %v84
    %vm529 = vcmp.eq.s32.totalorder %v489, %v85
    %vm530 = vcmp.eq.s32.totalorder %v490, %v83
    %vm531 = vcmp.eq.s32.totalorder %v490, %v84
    %vm532 = vcmp.eq.s32.totalorder %v490, %v85
    %vm533 = vcmp.eq.s32.totalorder %v491, %v83
    %vm534 = vcmp.eq.s32.totalorder %v491, %v84
    %vm535 = vcmp.eq.s32.totalorder %v491, %v85
    %vm536 = vcmp.eq.s32.totalorder %v492, %v83
    %vm537 = vcmp.eq.s32.totalorder %v492, %v84
    %vm538 = vcmp.eq.s32.totalorder %v492, %v85
    %vm539 = vcmp.eq.s32.totalorder %v493, %v83
    %vm540 = vcmp.eq.s32.totalorder %v493, %v84
    %vm541 = vcmp.eq.s32.totalorder %v493, %v85
    %vm542 = vcmp.eq.s32.totalorder %v494, %v83
    %vm543 = vcmp.eq.s32.totalorder %v494, %v84
    %vm544 = vcmp.eq.s32.totalorder %v494, %v85
    %vm545 = vcmp.eq.s32.totalorder %v495, %v83
    %vm546 = vcmp.eq.s32.totalorder %v495, %v84
    %vm547 = vcmp.eq.s32.totalorder %v495, %v85
    %vm548 = vcmp.eq.s32.totalorder %v496, %v83
    %vm549 = vcmp.eq.s32.totalorder %v496, %v84
    %vm550 = vcmp.eq.s32.totalorder %v496, %v85
    %vm551 = vcmp.eq.s32.totalorder %v497, %v83
    %vm552 = vcmp.eq.s32.totalorder %v497, %v84
    %vm553 = vcmp.eq.s32.totalorder %v497, %v85
    %vm554 = vcmp.eq.s32.totalorder %v498, %v83
    %vm555 = vcmp.eq.s32.totalorder %v498, %v84
    %vm556 = vcmp.eq.s32.totalorder %v498, %v85
    %vm557 = vcmp.eq.s32.totalorder %v499, %v83
    %vm558 = vcmp.eq.s32.totalorder %v499, %v84
    %vm559 = vcmp.eq.s32.totalorder %v499, %v85
    %vm560 = vcmp.eq.s32.totalorder %v500, %v83
    %vm561 = vcmp.eq.s32.totalorder %v500, %v84
    %vm562 = vcmp.eq.s32.totalorder %v500, %v85
    %vm563 = vcmp.eq.s32.totalorder %v501, %v83
    %vm564 = vcmp.eq.s32.totalorder %v501, %v84
    %vm565 = vcmp.eq.s32.totalorder %v501, %v85
    %vm566 = vcmp.eq.s32.totalorder %v502, %v83
    %vm567 = vcmp.eq.s32.totalorder %v502, %v84
    %vm568 = vcmp.eq.s32.totalorder %v502, %v85
    %vm569 = vcmp.eq.s32.totalorder %v503, %v83
    %vm570 = vcmp.eq.s32.totalorder %v503, %v84
    %vm571 = vcmp.eq.s32.totalorder %v503, %v85
    %vm572 = vcmp.eq.s32.totalorder %v504, %v83
    %vm573 = vcmp.eq.s32.totalorder %v504, %v84
    %vm574 = vcmp.eq.s32.totalorder %v504, %v85
    %vm575 = vcmp.eq.s32.totalorder %v505, %v83
    %vm576 = vcmp.eq.s32.totalorder %v505, %v84
    %vm577 = vcmp.eq.s32.totalorder %v505, %v85
    %vm578 = vcmp.eq.s32.totalorder %v506, %v83
    %vm579 = vcmp.eq.s32.totalorder %v506, %v84
    %vm580 = vcmp.eq.s32.totalorder %v506, %v85
    %vm581 = vcmp.eq.s32.totalorder %v507, %v83
    %vm582 = vcmp.eq.s32.totalorder %v507, %v84
    %vm583 = vcmp.eq.s32.totalorder %v507, %v85
    %vm584 = vcmp.eq.s32.totalorder %v508, %v83
    %vm585 = vcmp.eq.s32.totalorder %v508, %v84
    %vm586 = vcmp.eq.s32.totalorder %v508, %v85
    %vm587 = vcmp.eq.s32.totalorder %v509, %v83
    %vm588 = vcmp.eq.s32.totalorder %v509, %v84
    %vm589 = vcmp.eq.s32.totalorder %v509, %v85
    %vm590 = vcmp.eq.s32.totalorder %v510, %v83
    %vm591 = vcmp.eq.s32.totalorder %v510, %v84
    %vm592 = vcmp.eq.s32.totalorder %v510, %v85
    %vm593 = vcmp.eq.s32.totalorder %v511, %v83
    %vm594 = vcmp.eq.s32.totalorder %v511, %v84
    %vm595 = vcmp.eq.s32.totalorder %v511, %v85
    %vm596 = vcmp.eq.s32.totalorder %v512, %v83
    %vm597 = vcmp.eq.s32.totalorder %v512, %v84
    %vm598 = vcmp.eq.s32.totalorder %v512, %v85
    %vm599 = vcmp.eq.s32.totalorder %v513, %v83
    %vm600 = vcmp.eq.s32.totalorder %v513, %v84
    %vm601 = vcmp.eq.s32.totalorder %v513, %v85
    %vm602 = vcmp.eq.s32.totalorder %v514, %v83
    %vm603 = vcmp.eq.s32.totalorder %v514, %v84
    %vm604 = vcmp.eq.s32.totalorder %v514, %v85
    %vm605 = vcmp.eq.s32.totalorder %v515, %v83
    %vm606 = vcmp.eq.s32.totalorder %v515, %v84
    %vm607 = vcmp.eq.s32.totalorder %v515, %v85
    %vm608 = vcmp.eq.s32.totalorder %v516, %v83
    %vm609 = vcmp.eq.s32.totalorder %v516, %v84
    %vm610 = vcmp.eq.s32.totalorder %v516, %v85
    %vm611 = vcmp.eq.s32.totalorder %v517, %v83
    %vm612 = vcmp.eq.s32.totalorder %v517, %v84
    %vm613 = vcmp.eq.s32.totalorder %v517, %v85
    %vm614 = vmor %vm262, %vm518
    %vm615 = vmor %vm263, %vm519
    %vm616 = vmor %vm264, %vm520
    %vm617 = vmor %vm265, %vm521
    %vm618 = vmor %vm266, %vm522
    %vm619 = vmor %vm267, %vm523
    %vm620 = vmor %vm268, %vm524
    %vm621 = vmor %vm269, %vm525
    %vm622 = vmor %vm270, %vm526
    %vm623 = vmor %vm271, %vm527
    %vm624 = vmor %vm272, %vm528
    %vm625 = vmor %vm273, %vm529
    %vm626 = vmor %vm274, %vm530
    %vm627 = vmor %vm275, %vm531
    %vm628 = vmor %vm276, %vm532
    %vm629 = vmor %vm277, %vm533
    %vm630 = vmor %vm278, %vm534
    %vm631 = vmor %vm279, %vm535
    %vm632 = vmor %vm280, %vm536
    %vm633 = vmor %vm281, %vm537
    %vm634 = vmor %vm282, %vm538
    %vm635 = vmor %vm283, %vm539
    %vm636 = vmor %vm284, %vm540
    %vm637 = vmor %vm285, %vm541
    %vm638 = vmor %vm286, %vm542
    %vm639 = vmor %vm287, %vm543
    %vm640 = vmor %vm288, %vm544
    %vm641 = vmor %vm289, %vm545
    %vm642 = vmor %vm290, %vm546
    %vm643 = vmor %vm291, %vm547
    %vm644 = vmor %vm292, %vm548
    %vm645 = vmor %vm293, %vm549
    %vm646 = vmor %vm294, %vm550
    %vm647 = vmor %vm295, %vm551
    %vm648 = vmor %vm296, %vm552
    %vm649 = vmor %vm297, %vm553
    %vm650 = vmor %vm298, %vm554
    %vm651 = vmor %vm299, %vm555
    %vm652 = vmor %vm300, %vm556
    %vm653 = vmor %vm301, %vm557
    %vm654 = vmor %vm302, %vm558
    %vm655 = vmor %vm303, %vm559
    %vm656 = vmor %vm304, %vm560
    %vm657 = vmor %vm305, %vm561
    %vm658 = vmor %vm306, %vm562
    %vm659 = vmor %vm307, %vm563
    %vm660 = vmor %vm308, %vm564
    %vm661 = vmor %vm309, %vm565
    %vm662 = vmor %vm310, %vm566
    %vm663 = vmor %vm311, %vm567
    %vm664 = vmor %vm312, %vm568
    %vm665 = vmor %vm313, %vm569
    %vm666 = vmor %vm314, %vm570
    %vm667 = vmor %vm315, %vm571
    %vm668 = vmor %vm316, %vm572
    %vm669 = vmor %vm317, %vm573
    %vm670 = vmor %vm318, %vm574
    %vm671 = vmor %vm319, %vm575
    %vm672 = vmor %vm320, %vm576
    %vm673 = vmor %vm321, %vm577
    %vm674 = vmor %vm322, %vm578
    %vm675 = vmor %vm323, %vm579
    %vm676 = vmor %vm324, %vm580
    %vm677 = vmor %vm325, %vm581
    %vm678 = vmor %vm326, %vm582
    %vm679 = vmor %vm327, %vm583
    %vm680 = vmor %vm328, %vm584
    %vm681 = vmor %vm329, %vm585
    %vm682 = vmor %vm330, %vm586
    %vm683 = vmor %vm331, %vm587
    %vm684 = vmor %vm332, %vm588
    %vm685 = vmor %vm333, %vm589
    %vm686 = vmor %vm334, %vm590
    %vm687 = vmor %vm335, %vm591
    %vm688 = vmor %vm336, %vm592
    %vm689 = vmor %vm337, %vm593
    %vm690 = vmor %vm338, %vm594
    %vm691 = vmor %vm339, %vm595
    %vm692 = vmor %vm340, %vm596
    %vm693 = vmor %vm341, %vm597
    %vm694 = vmor %vm342, %vm598
    %vm695 = vmor %vm343, %vm599
    %vm696 = vmor %vm344, %vm600
    %vm697 = vmor %vm345, %vm601
    %vm698 = vmor %vm346, %vm602
    %vm699 = vmor %vm347, %vm603
    %vm700 = vmor %vm348, %vm604
    %vm701 = vmor %vm349, %vm605
    %vm702 = vmor %vm350, %vm606
    %vm703 = vmor %vm351, %vm607
    %vm704 = vmor %vm352, %vm608
    %vm705 = vmor %vm353, %vm609
    %vm706 = vmor %vm354, %vm610
    %vm707 = vmor %vm355, %vm611
    %vm708 = vmor %vm356, %vm612
    %vm709 = vmor %vm357, %vm613
    %s711 = sor.u32 256, 2
    %712 = vbcast.lane.b32.xlu0 %v89, %s711
    %v713 = vpop.permute.xlu0 %712
    %s715 = sor.u32 256, 10
    %716 = vbcast.lane.b32.xlu0 %v89, %s715
    %v717 = vpop.permute.xlu0 %716
    %s719 = sor.u32 256, 2
    %720 = vbcast.lane.b32.xlu0 %v100, %s719
    %v721 = vpop.permute.xlu0 %720
    %s723 = sor.u32 256, 10
    %724 = vbcast.lane.b32.xlu0 %v100, %s723
    %v725 = vpop.permute.xlu0 %724
    %s727 = sor.u32 256, 2
    %728 = vbcast.lane.b32.xlu0 %v111, %s727
    %v729 = vpop.permute.xlu0 %728
    %s731 = sor.u32 256, 10
    %732 = vbcast.lane.b32.xlu0 %v111, %s731
    %v733 = vpop.permute.xlu0 %732
    %s735 = sor.u32 256, 2
    %736 = vbcast.lane.b32.xlu0 %v122, %s735
    %v737 = vpop.permute.xlu0 %736
    %s739 = sor.u32 256, 10
    %740 = vbcast.lane.b32.xlu0 %v122, %s739
    %v741 = vpop.permute.xlu0 %740
    %s743 = sor.u32 256, 2
    %744 = vbcast.lane.b32.xlu0 %v133, %s743
    %v745 = vpop.permute.xlu0 %744
    %s747 = sor.u32 256, 10
    %748 = vbcast.lane.b32.xlu0 %v133, %s747
    %v749 = vpop.permute.xlu0 %748
    %s751 = sor.u32 256, 2
    %752 = vbcast.lane.b32.xlu0 %v144, %s751
    %v753 = vpop.permute.xlu0 %752
    %s755 = sor.u32 256, 10
    %756 = vbcast.lane.b32.xlu0 %v144, %s755
    %v757 = vpop.permute.xlu0 %756
    %s759 = sor.u32 256, 2
    %760 = vbcast.lane.b32.xlu0 %v155, %s759
    %v761 = vpop.permute.xlu0 %760
    %s763 = sor.u32 256, 10
    %764 = vbcast.lane.b32.xlu0 %v155, %s763
    %v765 = vpop.permute.xlu0 %764
    %s767 = sor.u32 256, 2
    %768 = vbcast.lane.b32.xlu0 %v166, %s767
    %v769 = vpop.permute.xlu0 %768
    %s771 = sor.u32 256, 10
    %772 = vbcast.lane.b32.xlu0 %v166, %s771
    %v773 = vpop.permute.xlu0 %772
    %s775 = sor.u32 256, 2
    %776 = vbcast.lane.b32.xlu0 %v177, %s775
    %v777 = vpop.permute.xlu0 %776
    %s779 = sor.u32 256, 10
    %780 = vbcast.lane.b32.xlu0 %v177, %s779
    %v781 = vpop.permute.xlu0 %780
    %s783 = sor.u32 256, 2
    %784 = vbcast.lane.b32.xlu0 %v188, %s783
    %v785 = vpop.permute.xlu0 %784
    %s787 = sor.u32 256, 10
    %788 = vbcast.lane.b32.xlu0 %v188, %s787
    %v789 = vpop.permute.xlu0 %788
    %s791 = sor.u32 256, 2
    %792 = vbcast.lane.b32.xlu0 %v199, %s791
    %v793 = vpop.permute.xlu0 %792
    %s795 = sor.u32 256, 10
    %796 = vbcast.lane.b32.xlu0 %v199, %s795
    %v797 = vpop.permute.xlu0 %796
    %s799 = sor.u32 256, 2
    %800 = vbcast.lane.b32.xlu0 %v210, %s799
    %v801 = vpop.permute.xlu0 %800
    %s803 = sor.u32 256, 10
    %804 = vbcast.lane.b32.xlu0 %v210, %s803
    %v805 = vpop.permute.xlu0 %804
    %s807 = sor.u32 256, 2
    %808 = vbcast.lane.b32.xlu0 %v221, %s807
    %v809 = vpop.permute.xlu0 %808
    %s811 = sor.u32 256, 10
    %812 = vbcast.lane.b32.xlu0 %v221, %s811
    %v813 = vpop.permute.xlu0 %812
    %s815 = sor.u32 256, 2
    %816 = vbcast.lane.b32.xlu0 %v232, %s815
    %v817 = vpop.permute.xlu0 %816
    %s819 = sor.u32 256, 10
    %820 = vbcast.lane.b32.xlu0 %v232, %s819
    %v821 = vpop.permute.xlu0 %820
    %s823 = sor.u32 256, 2
    %824 = vbcast.lane.b32.xlu0 %v243, %s823
    %v825 = vpop.permute.xlu0 %824
    %s827 = sor.u32 256, 10
    %828 = vbcast.lane.b32.xlu0 %v243, %s827
    %v829 = vpop.permute.xlu0 %828
    %s831 = sor.u32 256, 2
    %832 = vbcast.lane.b32.xlu0 %v254, %s831
    %v833 = vpop.permute.xlu0 %832
    %s835 = sor.u32 256, 10
    %836 = vbcast.lane.b32.xlu0 %v254, %s835
    %v837 = vpop.permute.xlu0 %836
    %v838 = vadd.s32 %v713, 128
    %v839 = vadd.s32 %v717, 128
    %v840 = vadd.s32 %v721, 128
    %v841 = vadd.s32 %v725, 128
    %v842 = vadd.s32 %v729, 128
    %v843 = vadd.s32 %v733, 128
    %v844 = vadd.s32 %v737, 128
    %v845 = vadd.s32 %v741, 128
    %v846 = vadd.s32 %v745, 128
    %v847 = vadd.s32 %v749, 128
    %v848 = vadd.s32 %v753, 128
    %v849 = vadd.s32 %v757, 128
    %v850 = vadd.s32 %v761, 128
    %v851 = vadd.s32 %v765, 128
    %v852 = vadd.s32 %v769, 128
    %v853 = vadd.s32 %v773, 128
    %v854 = vadd.s32 %v777, 128
    %v855 = vadd.s32 %v781, 128
    %v856 = vadd.s32 %v785, 128
    %v857 = vadd.s32 %v789, 128
    %v858 = vadd.s32 %v793, 128
    %v859 = vadd.s32 %v797, 128
    %v860 = vadd.s32 %v801, 128
    %v861 = vadd.s32 %v805, 128
    %v862 = vadd.s32 %v809, 128
    %v863 = vadd.s32 %v813, 128
    %v864 = vadd.s32 %v817, 128
    %v865 = vadd.s32 %v821, 128
    %v866 = vadd.s32 %v825, 128
    %v867 = vadd.s32 %v829, 128
    %v868 = vadd.s32 %v833, 128
    %v869 = vadd.s32 %v837, 128
    %vm870 = vcmp.eq.s32.totalorder %v838, %v83
    %vm871 = vcmp.eq.s32.totalorder %v838, %v84
    %vm872 = vcmp.eq.s32.totalorder %v838, %v85
    %vm873 = vcmp.eq.s32.totalorder %v839, %v83
    %vm874 = vcmp.eq.s32.totalorder %v839, %v84
    %vm875 = vcmp.eq.s32.totalorder %v839, %v85
    %vm876 = vcmp.eq.s32.totalorder %v840, %v83
    %vm877 = vcmp.eq.s32.totalorder %v840, %v84
    %vm878 = vcmp.eq.s32.totalorder %v840, %v85
    %vm879 = vcmp.eq.s32.totalorder %v841, %v83
    %vm880 = vcmp.eq.s32.totalorder %v841, %v84
    %vm881 = vcmp.eq.s32.totalorder %v841, %v85
    %vm882 = vcmp.eq.s32.totalorder %v842, %v83
    %vm883 = vcmp.eq.s32.totalorder %v842, %v84
    %vm884 = vcmp.eq.s32.totalorder %v842, %v85
    %vm885 = vcmp.eq.s32.totalorder %v843, %v83
    %vm886 = vcmp.eq.s32.totalorder %v843, %v84
    %vm887 = vcmp.eq.s32.totalorder %v843, %v85
    %vm888 = vcmp.eq.s32.totalorder %v844, %v83
    %vm889 = vcmp.eq.s32.totalorder %v844, %v84
    %vm890 = vcmp.eq.s32.totalorder %v844, %v85
    %vm891 = vcmp.eq.s32.totalorder %v845, %v83
    %vm892 = vcmp.eq.s32.totalorder %v845, %v84
    %vm893 = vcmp.eq.s32.totalorder %v845, %v85
    %vm894 = vcmp.eq.s32.totalorder %v846, %v83
    %vm895 = vcmp.eq.s32.totalorder %v846, %v84
    %vm896 = vcmp.eq.s32.totalorder %v846, %v85
    %vm897 = vcmp.eq.s32.totalorder %v847, %v83
    %vm898 = vcmp.eq.s32.totalorder %v847, %v84
    %vm899 = vcmp.eq.s32.totalorder %v847, %v85
    %vm900 = vcmp.eq.s32.totalorder %v848, %v83
    %vm901 = vcmp.eq.s32.totalorder %v848, %v84
    %vm902 = vcmp.eq.s32.totalorder %v848, %v85
    %vm903 = vcmp.eq.s32.totalorder %v849, %v83
    %vm904 = vcmp.eq.s32.totalorder %v849, %v84
    %vm905 = vcmp.eq.s32.totalorder %v849, %v85
    %vm906 = vcmp.eq.s32.totalorder %v850, %v83
    %vm907 = vcmp.eq.s32.totalorder %v850, %v84
    %vm908 = vcmp.eq.s32.totalorder %v850, %v85
    %vm909 = vcmp.eq.s32.totalorder %v851, %v83
    %vm910 = vcmp.eq.s32.totalorder %v851, %v84
    %vm911 = vcmp.eq.s32.totalorder %v851, %v85
    %vm912 = vcmp.eq.s32.totalorder %v852, %v83
    %vm913 = vcmp.eq.s32.totalorder %v852, %v84
    %vm914 = vcmp.eq.s32.totalorder %v852, %v85
    %vm915 = vcmp.eq.s32.totalorder %v853, %v83
    %vm916 = vcmp.eq.s32.totalorder %v853, %v84
    %vm917 = vcmp.eq.s32.totalorder %v853, %v85
    %vm918 = vcmp.eq.s32.totalorder %v854, %v83
    %vm919 = vcmp.eq.s32.totalorder %v854, %v84
    %vm920 = vcmp.eq.s32.totalorder %v854, %v85
    %vm921 = vcmp.eq.s32.totalorder %v855, %v83
    %vm922 = vcmp.eq.s32.totalorder %v855, %v84
    %vm923 = vcmp.eq.s32.totalorder %v855, %v85
    %vm924 = vcmp.eq.s32.totalorder %v856, %v83
    %vm925 = vcmp.eq.s32.totalorder %v856, %v84
    %vm926 = vcmp.eq.s32.totalorder %v856, %v85
    %vm927 = vcmp.eq.s32.totalorder %v857, %v83
    %vm928 = vcmp.eq.s32.totalorder %v857, %v84
    %vm929 = vcmp.eq.s32.totalorder %v857, %v85
    %vm930 = vcmp.eq.s32.totalorder %v858, %v83
    %vm931 = vcmp.eq.s32.totalorder %v858, %v84
    %vm932 = vcmp.eq.s32.totalorder %v858, %v85
    %vm933 = vcmp.eq.s32.totalorder %v859, %v83
    %vm934 = vcmp.eq.s32.totalorder %v859, %v84
    %vm935 = vcmp.eq.s32.totalorder %v859, %v85
    %vm936 = vcmp.eq.s32.totalorder %v860, %v83
    %vm937 = vcmp.eq.s32.totalorder %v860, %v84
    %vm938 = vcmp.eq.s32.totalorder %v860, %v85
    %vm939 = vcmp.eq.s32.totalorder %v861, %v83
    %vm940 = vcmp.eq.s32.totalorder %v861, %v84
    %vm941 = vcmp.eq.s32.totalorder %v861, %v85
    %vm942 = vcmp.eq.s32.totalorder %v862, %v83
    %vm943 = vcmp.eq.s32.totalorder %v862, %v84
    %vm944 = vcmp.eq.s32.totalorder %v862, %v85
    %vm945 = vcmp.eq.s32.totalorder %v863, %v83
    %vm946 = vcmp.eq.s32.totalorder %v863, %v84
    %vm947 = vcmp.eq.s32.totalorder %v863, %v85
    %vm948 = vcmp.eq.s32.totalorder %v864, %v83
    %vm949 = vcmp.eq.s32.totalorder %v864, %v84
    %vm950 = vcmp.eq.s32.totalorder %v864, %v85
    %vm951 = vcmp.eq.s32.totalorder %v865, %v83
    %vm952 = vcmp.eq.s32.totalorder %v865, %v84
    %vm953 = vcmp.eq.s32.totalorder %v865, %v85
    %vm954 = vcmp.eq.s32.totalorder %v866, %v83
    %vm955 = vcmp.eq.s32.totalorder %v866, %v84
    %vm956 = vcmp.eq.s32.totalorder %v866, %v85
    %vm957 = vcmp.eq.s32.totalorder %v867, %v83
    %vm958 = vcmp.eq.s32.totalorder %v867, %v84
    %vm959 = vcmp.eq.s32.totalorder %v867, %v85
    %vm960 = vcmp.eq.s32.totalorder %v868, %v83
    %vm961 = vcmp.eq.s32.totalorder %v868, %v84
    %vm962 = vcmp.eq.s32.totalorder %v868, %v85
    %vm963 = vcmp.eq.s32.totalorder %v869, %v83
    %vm964 = vcmp.eq.s32.totalorder %v869, %v84
    %vm965 = vcmp.eq.s32.totalorder %v869, %v85
    %vm966 = vmor %vm614, %vm870
    %vm967 = vmor %vm615, %vm871
    %vm968 = vmor %vm616, %vm872
    %vm969 = vmor %vm617, %vm873
    %vm970 = vmor %vm618, %vm874
    %vm971 = vmor %vm619, %vm875
    %vm972 = vmor %vm620, %vm876
    %vm973 = vmor %vm621, %vm877
    %vm974 = vmor %vm622, %vm878
    %vm975 = vmor %vm623, %vm879
    %vm976 = vmor %vm624, %vm880
    %vm977 = vmor %vm625, %vm881
    %vm978 = vmor %vm626, %vm882
    %vm979 = vmor %vm627, %vm883
    %vm980 = vmor %vm628, %vm884
    %vm981 = vmor %vm629, %vm885
    %vm982 = vmor %vm630, %vm886
    %vm983 = vmor %vm631, %vm887
    %vm984 = vmor %vm632, %vm888
    %vm985 = vmor %vm633, %vm889
    %vm986 = vmor %vm634, %vm890
    %vm987 = vmor %vm635, %vm891
    %vm988 = vmor %vm636, %vm892
    %vm989 = vmor %vm637, %vm893
    %vm990 = vmor %vm638, %vm894
    %vm991 = vmor %vm639, %vm895
    %vm992 = vmor %vm640, %vm896
    %vm993 = vmor %vm641, %vm897
    %vm994 = vmor %vm642, %vm898
    %vm995 = vmor %vm643, %vm899
    %vm996 = vmor %vm644, %vm900
    %vm997 = vmor %vm645, %vm901
    %vm998 = vmor %vm646, %vm902
    %vm999 = vmor %vm647, %vm903
    %vm1000 = vmor %vm648, %vm904
    %vm1001 = vmor %vm649, %vm905
    %vm1002 = vmor %vm650, %vm906
    %vm1003 = vmor %vm651, %vm907
    %vm1004 = vmor %vm652, %vm908
    %vm1005 = vmor %vm653, %vm909
    %vm1006 = vmor %vm654, %vm910
    %vm1007 = vmor %vm655, %vm911
    %vm1008 = vmor %vm656, %vm912
    %vm1009 = vmor %vm657, %vm913
    %vm1010 = vmor %vm658, %vm914
    %vm1011 = vmor %vm659, %vm915
    %vm1012 = vmor %vm660, %vm916
    %vm1013 = vmor %vm661, %vm917
    %vm1014 = vmor %vm662, %vm918
    %vm1015 = vmor %vm663, %vm919
    %vm1016 = vmor %vm664, %vm920
    %vm1017 = vmor %vm665, %vm921
    %vm1018 = vmor %vm666, %vm922
    %vm1019 = vmor %vm667, %vm923
    %vm1020 = vmor %vm668, %vm924
    %vm1021 = vmor %vm669, %vm925
    %vm1022 = vmor %vm670, %vm926
    %vm1023 = vmor %vm671, %vm927
    %vm1024 = vmor %vm672, %vm928
    %vm1025 = vmor %vm673, %vm929
    %vm1026 = vmor %vm674, %vm930
    %vm1027 = vmor %vm675, %vm931
    %vm1028 = vmor %vm676, %vm932
    %vm1029 = vmor %vm677, %vm933
    %vm1030 = vmor %vm678, %vm934
    %vm1031 = vmor %vm679, %vm935
    %vm1032 = vmor %vm680, %vm936
    %vm1033 = vmor %vm681, %vm937
    %vm1034 = vmor %vm682, %vm938
    %vm1035 = vmor %vm683, %vm939
    %vm1036 = vmor %vm684, %vm940
    %vm1037 = vmor %vm685, %vm941
    %vm1038 = vmor %vm686, %vm942
    %vm1039 = vmor %vm687, %vm943
    %vm1040 = vmor %vm688, %vm944
    %vm1041 = vmor %vm689, %vm945
    %vm1042 = vmor %vm690, %vm946
    %vm1043 = vmor %vm691, %vm947
    %vm1044 = vmor %vm692, %vm948
    %vm1045 = vmor %vm693, %vm949
    %vm1046 = vmor %vm694, %vm950
    %vm1047 = vmor %vm695, %vm951
    %vm1048 = vmor %vm696, %vm952
    %vm1049 = vmor %vm697, %vm953
    %vm1050 = vmor %vm698, %vm954
    %vm1051 = vmor %vm699, %vm955
    %vm1052 = vmor %vm700, %vm956
    %vm1053 = vmor %vm701, %vm957
    %vm1054 = vmor %vm702, %vm958
    %vm1055 = vmor %vm703, %vm959
    %vm1056 = vmor %vm704, %vm960
    %vm1057 = vmor %vm705, %vm961
    %vm1058 = vmor %vm706, %vm962
    %vm1059 = vmor %vm707, %vm963
    %vm1060 = vmor %vm708, %vm964
    %vm1061 = vmor %vm709, %vm965
    %s1063 = sor.u32 256, 3
    %1064 = vbcast.lane.b32.xlu0 %v89, %s1063
    %v1065 = vpop.permute.xlu0 %1064
    %s1067 = sor.u32 256, 11
    %1068 = vbcast.lane.b32.xlu0 %v89, %s1067
    %v1069 = vpop.permute.xlu0 %1068
    %s1071 = sor.u32 256, 3
    %1072 = vbcast.lane.b32.xlu0 %v100, %s1071
    %v1073 = vpop.permute.xlu0 %1072
    %s1075 = sor.u32 256, 11
    %1076 = vbcast.lane.b32.xlu0 %v100, %s1075
    %v1077 = vpop.permute.xlu0 %1076
    %s1079 = sor.u32 256, 3
    %1080 = vbcast.lane.b32.xlu0 %v111, %s1079
    %v1081 = vpop.permute.xlu0 %1080
    %s1083 = sor.u32 256, 11
    %1084 = vbcast.lane.b32.xlu0 %v111, %s1083
    %v1085 = vpop.permute.xlu0 %1084
    %s1087 = sor.u32 256, 3
    %1088 = vbcast.lane.b32.xlu0 %v122, %s1087
    %v1089 = vpop.permute.xlu0 %1088
    %s1091 = sor.u32 256, 11
    %1092 = vbcast.lane.b32.xlu0 %v122, %s1091
    %v1093 = vpop.permute.xlu0 %1092
    %s1095 = sor.u32 256, 3
    %1096 = vbcast.lane.b32.xlu0 %v133, %s1095
    %v1097 = vpop.permute.xlu0 %1096
    %s1099 = sor.u32 256, 11
    %1100 = vbcast.lane.b32.xlu0 %v133, %s1099
    %v1101 = vpop.permute.xlu0 %1100
    %s1103 = sor.u32 256, 3
    %1104 = vbcast.lane.b32.xlu0 %v144, %s1103
    %v1105 = vpop.permute.xlu0 %1104
    %s1107 = sor.u32 256, 11
    %1108 = vbcast.lane.b32.xlu0 %v144, %s1107
    %v1109 = vpop.permute.xlu0 %1108
    %s1111 = sor.u32 256, 3
    %1112 = vbcast.lane.b32.xlu0 %v155, %s1111
    %v1113 = vpop.permute.xlu0 %1112
    %s1115 = sor.u32 256, 11
    %1116 = vbcast.lane.b32.xlu0 %v155, %s1115
    %v1117 = vpop.permute.xlu0 %1116
    %s1119 = sor.u32 256, 3
    %1120 = vbcast.lane.b32.xlu0 %v166, %s1119
    %v1121 = vpop.permute.xlu0 %1120
    %s1123 = sor.u32 256, 11
    %1124 = vbcast.lane.b32.xlu0 %v166, %s1123
    %v1125 = vpop.permute.xlu0 %1124
    %s1127 = sor.u32 256, 3
    %1128 = vbcast.lane.b32.xlu0 %v177, %s1127
    %v1129 = vpop.permute.xlu0 %1128
    %s1131 = sor.u32 256, 11
    %1132 = vbcast.lane.b32.xlu0 %v177, %s1131
    %v1133 = vpop.permute.xlu0 %1132
    %s1135 = sor.u32 256, 3
    %1136 = vbcast.lane.b32.xlu0 %v188, %s1135
    %v1137 = vpop.permute.xlu0 %1136
    %s1139 = sor.u32 256, 11
    %1140 = vbcast.lane.b32.xlu0 %v188, %s1139
    %v1141 = vpop.permute.xlu0 %1140
    %s1143 = sor.u32 256, 3
    %1144 = vbcast.lane.b32.xlu0 %v199, %s1143
    %v1145 = vpop.permute.xlu0 %1144
    %s1147 = sor.u32 256, 11
    %1148 = vbcast.lane.b32.xlu0 %v199, %s1147
    %v1149 = vpop.permute.xlu0 %1148
    %s1151 = sor.u32 256, 3
    %1152 = vbcast.lane.b32.xlu0 %v210, %s1151
    %v1153 = vpop.permute.xlu0 %1152
    %s1155 = sor.u32 256, 11
    %1156 = vbcast.lane.b32.xlu0 %v210, %s1155
    %v1157 = vpop.permute.xlu0 %1156
    %s1159 = sor.u32 256, 3
    %1160 = vbcast.lane.b32.xlu0 %v221, %s1159
    %v1161 = vpop.permute.xlu0 %1160
    %s1163 = sor.u32 256, 11
    %1164 = vbcast.lane.b32.xlu0 %v221, %s1163
    %v1165 = vpop.permute.xlu0 %1164
    %s1167 = sor.u32 256, 3
    %1168 = vbcast.lane.b32.xlu0 %v232, %s1167
    %v1169 = vpop.permute.xlu0 %1168
    %s1171 = sor.u32 256, 11
    %1172 = vbcast.lane.b32.xlu0 %v232, %s1171
    %v1173 = vpop.permute.xlu0 %1172
    %s1175 = sor.u32 256, 3
    %1176 = vbcast.lane.b32.xlu0 %v243, %s1175
    %v1177 = vpop.permute.xlu0 %1176
    %s1179 = sor.u32 256, 11
    %1180 = vbcast.lane.b32.xlu0 %v243, %s1179
    %v1181 = vpop.permute.xlu0 %1180
    %s1183 = sor.u32 256, 3
    %1184 = vbcast.lane.b32.xlu0 %v254, %s1183
    %v1185 = vpop.permute.xlu0 %1184
    %s1187 = sor.u32 256, 11
    %1188 = vbcast.lane.b32.xlu0 %v254, %s1187
    %v1189 = vpop.permute.xlu0 %1188
    %v1190 = vadd.s32 %v1065, 192
    %v1191 = vadd.s32 %v1069, 192
    %v1192 = vadd.s32 %v1073, 192
    %v1193 = vadd.s32 %v1077, 192
    %v1194 = vadd.s32 %v1081, 192
    %v1195 = vadd.s32 %v1085, 192
    %v1196 = vadd.s32 %v1089, 192
    %v1197 = vadd.s32 %v1093, 192
    %v1198 = vadd.s32 %v1097, 192
    %v1199 = vadd.s32 %v1101, 192
    %v1200 = vadd.s32 %v1105, 192
    %v1201 = vadd.s32 %v1109, 192
    %v1202 = vadd.s32 %v1113, 192
    %v1203 = vadd.s32 %v1117, 192
    %v1204 = vadd.s32 %v1121, 192
    %v1205 = vadd.s32 %v1125, 192
    %v1206 = vadd.s32 %v1129, 192
    %v1207 = vadd.s32 %v1133, 192
    %v1208 = vadd.s32 %v1137, 192
    %v1209 = vadd.s32 %v1141, 192
    %v1210 = vadd.s32 %v1145, 192
    %v1211 = vadd.s32 %v1149, 192
    %v1212 = vadd.s32 %v1153, 192
    %v1213 = vadd.s32 %v1157, 192
    %v1214 = vadd.s32 %v1161, 192
    %v1215 = vadd.s32 %v1165, 192
    %v1216 = vadd.s32 %v1169, 192
    %v1217 = vadd.s32 %v1173, 192
    %v1218 = vadd.s32 %v1177, 192
    %v1219 = vadd.s32 %v1181, 192
    %v1220 = vadd.s32 %v1185, 192
    %v1221 = vadd.s32 %v1189, 192
    %vm1222 = vcmp.eq.s32.totalorder %v1190, %v83
    %vm1223 = vcmp.eq.s32.totalorder %v1190, %v84
    %vm1224 = vcmp.eq.s32.totalorder %v1190, %v85
    %vm1225 = vcmp.eq.s32.totalorder %v1191, %v83
    %vm1226 = vcmp.eq.s32.totalorder %v1191, %v84
    %vm1227 = vcmp.eq.s32.totalorder %v1191, %v85
    %vm1228 = vcmp.eq.s32.totalorder %v1192, %v83
    %vm1229 = vcmp.eq.s32.totalorder %v1192, %v84
    %vm1230 = vcmp.eq.s32.totalorder %v1192, %v85
    %vm1231 = vcmp.eq.s32.totalorder %v1193, %v83
    %vm1232 = vcmp.eq.s32.totalorder %v1193, %v84
    %vm1233 = vcmp.eq.s32.totalorder %v1193, %v85
    %vm1234 = vcmp.eq.s32.totalorder %v1194, %v83
    %vm1235 = vcmp.eq.s32.totalorder %v1194, %v84
    %vm1236 = vcmp.eq.s32.totalorder %v1194, %v85
    %vm1237 = vcmp.eq.s32.totalorder %v1195, %v83
    %vm1238 = vcmp.eq.s32.totalorder %v1195, %v84
    %vm1239 = vcmp.eq.s32.totalorder %v1195, %v85
    %vm1240 = vcmp.eq.s32.totalorder %v1196, %v83
    %vm1241 = vcmp.eq.s32.totalorder %v1196, %v84
    %vm1242 = vcmp.eq.s32.totalorder %v1196, %v85
    %vm1243 = vcmp.eq.s32.totalorder %v1197, %v83
    %vm1244 = vcmp.eq.s32.totalorder %v1197, %v84
    %vm1245 = vcmp.eq.s32.totalorder %v1197, %v85
    %vm1246 = vcmp.eq.s32.totalorder %v1198, %v83
    %vm1247 = vcmp.eq.s32.totalorder %v1198, %v84
    %vm1248 = vcmp.eq.s32.totalorder %v1198, %v85
    %vm1249 = vcmp.eq.s32.totalorder %v1199, %v83
    %vm1250 = vcmp.eq.s32.totalorder %v1199, %v84
    %vm1251 = vcmp.eq.s32.totalorder %v1199, %v85
    %vm1252 = vcmp.eq.s32.totalorder %v1200, %v83
    %vm1253 = vcmp.eq.s32.totalorder %v1200, %v84
    %vm1254 = vcmp.eq.s32.totalorder %v1200, %v85
    %vm1255 = vcmp.eq.s32.totalorder %v1201, %v83
    %vm1256 = vcmp.eq.s32.totalorder %v1201, %v84
    %vm1257 = vcmp.eq.s32.totalorder %v1201, %v85
    %vm1258 = vcmp.eq.s32.totalorder %v1202, %v83
    %vm1259 = vcmp.eq.s32.totalorder %v1202, %v84
    %vm1260 = vcmp.eq.s32.totalorder %v1202, %v85
    %vm1261 = vcmp.eq.s32.totalorder %v1203, %v83
    %vm1262 = vcmp.eq.s32.totalorder %v1203, %v84
    %vm1263 = vcmp.eq.s32.totalorder %v1203, %v85
    %vm1264 = vcmp.eq.s32.totalorder %v1204, %v83
    %vm1265 = vcmp.eq.s32.totalorder %v1204, %v84
    %vm1266 = vcmp.eq.s32.totalorder %v1204, %v85
    %vm1267 = vcmp.eq.s32.totalorder %v1205, %v83
    %vm1268 = vcmp.eq.s32.totalorder %v1205, %v84
    %vm1269 = vcmp.eq.s32.totalorder %v1205, %v85
    %vm1270 = vcmp.eq.s32.totalorder %v1206, %v83
    %vm1271 = vcmp.eq.s32.totalorder %v1206, %v84
    %vm1272 = vcmp.eq.s32.totalorder %v1206, %v85
    %vm1273 = vcmp.eq.s32.totalorder %v1207, %v83
    %vm1274 = vcmp.eq.s32.totalorder %v1207, %v84
    %vm1275 = vcmp.eq.s32.totalorder %v1207, %v85
    %vm1276 = vcmp.eq.s32.totalorder %v1208, %v83
    %vm1277 = vcmp.eq.s32.totalorder %v1208, %v84
    %vm1278 = vcmp.eq.s32.totalorder %v1208, %v85
    %vm1279 = vcmp.eq.s32.totalorder %v1209, %v83
    %vm1280 = vcmp.eq.s32.totalorder %v1209, %v84
    %vm1281 = vcmp.eq.s32.totalorder %v1209, %v85
    %vm1282 = vcmp.eq.s32.totalorder %v1210, %v83
    %vm1283 = vcmp.eq.s32.totalorder %v1210, %v84
    %vm1284 = vcmp.eq.s32.totalorder %v1210, %v85
    %vm1285 = vcmp.eq.s32.totalorder %v1211, %v83
    %vm1286 = vcmp.eq.s32.totalorder %v1211, %v84
    %vm1287 = vcmp.eq.s32.totalorder %v1211, %v85
    %vm1288 = vcmp.eq.s32.totalorder %v1212, %v83
    %vm1289 = vcmp.eq.s32.totalorder %v1212, %v84
    %vm1290 = vcmp.eq.s32.totalorder %v1212, %v85
    %vm1291 = vcmp.eq.s32.totalorder %v1213, %v83
    %vm1292 = vcmp.eq.s32.totalorder %v1213, %v84
    %vm1293 = vcmp.eq.s32.totalorder %v1213, %v85
    %vm1294 = vcmp.eq.s32.totalorder %v1214, %v83
    %vm1295 = vcmp.eq.s32.totalorder %v1214, %v84
    %vm1296 = vcmp.eq.s32.totalorder %v1214, %v85
    %vm1297 = vcmp.eq.s32.totalorder %v1215, %v83
    %vm1298 = vcmp.eq.s32.totalorder %v1215, %v84
    %vm1299 = vcmp.eq.s32.totalorder %v1215, %v85
    %vm1300 = vcmp.eq.s32.totalorder %v1216, %v83
    %vm1301 = vcmp.eq.s32.totalorder %v1216, %v84
    %vm1302 = vcmp.eq.s32.totalorder %v1216, %v85
    %vm1303 = vcmp.eq.s32.totalorder %v1217, %v83
    %vm1304 = vcmp.eq.s32.totalorder %v1217, %v84
    %vm1305 = vcmp.eq.s32.totalorder %v1217, %v85
    %vm1306 = vcmp.eq.s32.totalorder %v1218, %v83
    %vm1307 = vcmp.eq.s32.totalorder %v1218, %v84
    %vm1308 = vcmp.eq.s32.totalorder %v1218, %v85
    %vm1309 = vcmp.eq.s32.totalorder %v1219, %v83
    %vm1310 = vcmp.eq.s32.totalorder %v1219, %v84
    %vm1311 = vcmp.eq.s32.totalorder %v1219, %v85
    %vm1312 = vcmp.eq.s32.totalorder %v1220, %v83
    %vm1313 = vcmp.eq.s32.totalorder %v1220, %v84
    %vm1314 = vcmp.eq.s32.totalorder %v1220, %v85
    %vm1315 = vcmp.eq.s32.totalorder %v1221, %v83
    %vm1316 = vcmp.eq.s32.totalorder %v1221, %v84
    %vm1317 = vcmp.eq.s32.totalorder %v1221, %v85
    %vm1318 = vmor %vm966, %vm1222
    %vm1319 = vmor %vm967, %vm1223
    %vm1320 = vmor %vm968, %vm1224
    %vm1321 = vmor %vm969, %vm1225
    %vm1322 = vmor %vm970, %vm1226
    %vm1323 = vmor %vm971, %vm1227
    %vm1324 = vmor %vm972, %vm1228
    %vm1325 = vmor %vm973, %vm1229
    %vm1326 = vmor %vm974, %vm1230
    %vm1327 = vmor %vm975, %vm1231
    %vm1328 = vmor %vm976, %vm1232
    %vm1329 = vmor %vm977, %vm1233
    %vm1330 = vmor %vm978, %vm1234
    %vm1331 = vmor %vm979, %vm1235
    %vm1332 = vmor %vm980, %vm1236
    %vm1333 = vmor %vm981, %vm1237
    %vm1334 = vmor %vm982, %vm1238
    %vm1335 = vmor %vm983, %vm1239
    %vm1336 = vmor %vm984, %vm1240
    %vm1337 = vmor %vm985, %vm1241
    %vm1338 = vmor %vm986, %vm1242
    %vm1339 = vmor %vm987, %vm1243
    %vm1340 = vmor %vm988, %vm1244
    %vm1341 = vmor %vm989, %vm1245
    %vm1342 = vmor %vm990, %vm1246
    %vm1343 = vmor %vm991, %vm1247
    %vm1344 = vmor %vm992, %vm1248
    %vm1345 = vmor %vm993, %vm1249
    %vm1346 = vmor %vm994, %vm1250
    %vm1347 = vmor %vm995, %vm1251
    %vm1348 = vmor %vm996, %vm1252
    %vm1349 = vmor %vm997, %vm1253
    %vm1350 = vmor %vm998, %vm1254
    %vm1351 = vmor %vm999, %vm1255
    %vm1352 = vmor %vm1000, %vm1256
    %vm1353 = vmor %vm1001, %vm1257
    %vm1354 = vmor %vm1002, %vm1258
    %vm1355 = vmor %vm1003, %vm1259
    %vm1356 = vmor %vm1004, %vm1260
    %vm1357 = vmor %vm1005, %vm1261
    %vm1358 = vmor %vm1006, %vm1262
    %vm1359 = vmor %vm1007, %vm1263
    %vm1360 = vmor %vm1008, %vm1264
    %vm1361 = vmor %vm1009, %vm1265
    %vm1362 = vmor %vm1010, %vm1266
    %vm1363 = vmor %vm1011, %vm1267
    %vm1364 = vmor %vm1012, %vm1268
    %vm1365 = vmor %vm1013, %vm1269
    %vm1366 = vmor %vm1014, %vm1270
    %vm1367 = vmor %vm1015, %vm1271
    %vm1368 = vmor %vm1016, %vm1272
    %vm1369 = vmor %vm1017, %vm1273
    %vm1370 = vmor %vm1018, %vm1274
    %vm1371 = vmor %vm1019, %vm1275
    %vm1372 = vmor %vm1020, %vm1276
    %vm1373 = vmor %vm1021, %vm1277
    %vm1374 = vmor %vm1022, %vm1278
    %vm1375 = vmor %vm1023, %vm1279
    %vm1376 = vmor %vm1024, %vm1280
    %vm1377 = vmor %vm1025, %vm1281
    %vm1378 = vmor %vm1026, %vm1282
    %vm1379 = vmor %vm1027, %vm1283
    %vm1380 = vmor %vm1028, %vm1284
    %vm1381 = vmor %vm1029, %vm1285
    %vm1382 = vmor %vm1030, %vm1286
    %vm1383 = vmor %vm1031, %vm1287
    %vm1384 = vmor %vm1032, %vm1288
    %vm1385 = vmor %vm1033, %vm1289
    %vm1386 = vmor %vm1034, %vm1290
    %vm1387 = vmor %vm1035, %vm1291
    %vm1388 = vmor %vm1036, %vm1292
    %vm1389 = vmor %vm1037, %vm1293
    %vm1390 = vmor %vm1038, %vm1294
    %vm1391 = vmor %vm1039, %vm1295
    %vm1392 = vmor %vm1040, %vm1296
    %vm1393 = vmor %vm1041, %vm1297
    %vm1394 = vmor %vm1042, %vm1298
    %vm1395 = vmor %vm1043, %vm1299
    %vm1396 = vmor %vm1044, %vm1300
    %vm1397 = vmor %vm1045, %vm1301
    %vm1398 = vmor %vm1046, %vm1302
    %vm1399 = vmor %vm1047, %vm1303
    %vm1400 = vmor %vm1048, %vm1304
    %vm1401 = vmor %vm1049, %vm1305
    %vm1402 = vmor %vm1050, %vm1306
    %vm1403 = vmor %vm1051, %vm1307
    %vm1404 = vmor %vm1052, %vm1308
    %vm1405 = vmor %vm1053, %vm1309
    %vm1406 = vmor %vm1054, %vm1310
    %vm1407 = vmor %vm1055, %vm1311
    %vm1408 = vmor %vm1056, %vm1312
    %vm1409 = vmor %vm1057, %vm1313
    %vm1410 = vmor %vm1058, %vm1314
    %vm1411 = vmor %vm1059, %vm1315
    %vm1412 = vmor %vm1060, %vm1316
    %vm1413 = vmor %vm1061, %vm1317
    %s1415 = sor.u32 256, 4
    %1416 = vbcast.lane.b32.xlu0 %v89, %s1415
    %v1417 = vpop.permute.xlu0 %1416
    %s1419 = sor.u32 256, 12
    %1420 = vbcast.lane.b32.xlu0 %v89, %s1419
    %v1421 = vpop.permute.xlu0 %1420
    %s1423 = sor.u32 256, 4
    %1424 = vbcast.lane.b32.xlu0 %v100, %s1423
    %v1425 = vpop.permute.xlu0 %1424
    %s1427 = sor.u32 256, 12
    %1428 = vbcast.lane.b32.xlu0 %v100, %s1427
    %v1429 = vpop.permute.xlu0 %1428
    %s1431 = sor.u32 256, 4
    %1432 = vbcast.lane.b32.xlu0 %v111, %s1431
    %v1433 = vpop.permute.xlu0 %1432
    %s1435 = sor.u32 256, 12
    %1436 = vbcast.lane.b32.xlu0 %v111, %s1435
    %v1437 = vpop.permute.xlu0 %1436
    %s1439 = sor.u32 256, 4
    %1440 = vbcast.lane.b32.xlu0 %v122, %s1439
    %v1441 = vpop.permute.xlu0 %1440
    %s1443 = sor.u32 256, 12
    %1444 = vbcast.lane.b32.xlu0 %v122, %s1443
    %v1445 = vpop.permute.xlu0 %1444
    %s1447 = sor.u32 256, 4
    %1448 = vbcast.lane.b32.xlu0 %v133, %s1447
    %v1449 = vpop.permute.xlu0 %1448
    %s1451 = sor.u32 256, 12
    %1452 = vbcast.lane.b32.xlu0 %v133, %s1451
    %v1453 = vpop.permute.xlu0 %1452
    %s1455 = sor.u32 256, 4
    %1456 = vbcast.lane.b32.xlu0 %v144, %s1455
    %v1457 = vpop.permute.xlu0 %1456
    %s1459 = sor.u32 256, 12
    %1460 = vbcast.lane.b32.xlu0 %v144, %s1459
    %v1461 = vpop.permute.xlu0 %1460
    %s1463 = sor.u32 256, 4
    %1464 = vbcast.lane.b32.xlu0 %v155, %s1463
    %v1465 = vpop.permute.xlu0 %1464
    %s1467 = sor.u32 256, 12
    %1468 = vbcast.lane.b32.xlu0 %v155, %s1467
    %v1469 = vpop.permute.xlu0 %1468
    %s1471 = sor.u32 256, 4
    %1472 = vbcast.lane.b32.xlu0 %v166, %s1471
    %v1473 = vpop.permute.xlu0 %1472
    %s1475 = sor.u32 256, 12
    %1476 = vbcast.lane.b32.xlu0 %v166, %s1475
    %v1477 = vpop.permute.xlu0 %1476
    %s1479 = sor.u32 256, 4
    %1480 = vbcast.lane.b32.xlu0 %v177, %s1479
    %v1481 = vpop.permute.xlu0 %1480
    %s1483 = sor.u32 256, 12
    %1484 = vbcast.lane.b32.xlu0 %v177, %s1483
    %v1485 = vpop.permute.xlu0 %1484
    %s1487 = sor.u32 256, 4
    %1488 = vbcast.lane.b32.xlu0 %v188, %s1487
    %v1489 = vpop.permute.xlu0 %1488
    %s1491 = sor.u32 256, 12
    %1492 = vbcast.lane.b32.xlu0 %v188, %s1491
    %v1493 = vpop.permute.xlu0 %1492
    %s1495 = sor.u32 256, 4
    %1496 = vbcast.lane.b32.xlu0 %v199, %s1495
    %v1497 = vpop.permute.xlu0 %1496
    %s1499 = sor.u32 256, 12
    %1500 = vbcast.lane.b32.xlu0 %v199, %s1499
    %v1501 = vpop.permute.xlu0 %1500
    %s1503 = sor.u32 256, 4
    %1504 = vbcast.lane.b32.xlu0 %v210, %s1503
    %v1505 = vpop.permute.xlu0 %1504
    %s1507 = sor.u32 256, 12
    %1508 = vbcast.lane.b32.xlu0 %v210, %s1507
    %v1509 = vpop.permute.xlu0 %1508
    %s1511 = sor.u32 256, 4
    %1512 = vbcast.lane.b32.xlu0 %v221, %s1511
    %v1513 = vpop.permute.xlu0 %1512
    %s1515 = sor.u32 256, 12
    %1516 = vbcast.lane.b32.xlu0 %v221, %s1515
    %v1517 = vpop.permute.xlu0 %1516
    %s1519 = sor.u32 256, 4
    %1520 = vbcast.lane.b32.xlu0 %v232, %s1519
    %v1521 = vpop.permute.xlu0 %1520
    %s1523 = sor.u32 256, 12
    %1524 = vbcast.lane.b32.xlu0 %v232, %s1523
    %v1525 = vpop.permute.xlu0 %1524
    %s1527 = sor.u32 256, 4
    %1528 = vbcast.lane.b32.xlu0 %v243, %s1527
    %v1529 = vpop.permute.xlu0 %1528
    %s1531 = sor.u32 256, 12
    %1532 = vbcast.lane.b32.xlu0 %v243, %s1531
    %v1533 = vpop.permute.xlu0 %1532
    %s1535 = sor.u32 256, 4
    %1536 = vbcast.lane.b32.xlu0 %v254, %s1535
    %v1537 = vpop.permute.xlu0 %1536
    %s1539 = sor.u32 256, 12
    %1540 = vbcast.lane.b32.xlu0 %v254, %s1539
    %v1541 = vpop.permute.xlu0 %1540
    %v1542 = vadd.s32 %v1417, 256
    %v1543 = vadd.s32 %v1421, 256
    %v1544 = vadd.s32 %v1425, 256
    %v1545 = vadd.s32 %v1429, 256
    %v1546 = vadd.s32 %v1433, 256
    %v1547 = vadd.s32 %v1437, 256
    %v1548 = vadd.s32 %v1441, 256
    %v1549 = vadd.s32 %v1445, 256
    %v1550 = vadd.s32 %v1449, 256
    %v1551 = vadd.s32 %v1453, 256
    %v1552 = vadd.s32 %v1457, 256
    %v1553 = vadd.s32 %v1461, 256
    %v1554 = vadd.s32 %v1465, 256
    %v1555 = vadd.s32 %v1469, 256
    %v1556 = vadd.s32 %v1473, 256
    %v1557 = vadd.s32 %v1477, 256
    %v1558 = vadd.s32 %v1481, 256
    %v1559 = vadd.s32 %v1485, 256
    %v1560 = vadd.s32 %v1489, 256
    %v1561 = vadd.s32 %v1493, 256
    %v1562 = vadd.s32 %v1497, 256
    %v1563 = vadd.s32 %v1501, 256
    %v1564 = vadd.s32 %v1505, 256
    %v1565 = vadd.s32 %v1509, 256
    %v1566 = vadd.s32 %v1513, 256
    %v1567 = vadd.s32 %v1517, 256
    %v1568 = vadd.s32 %v1521, 256
    %v1569 = vadd.s32 %v1525, 256
    %v1570 = vadd.s32 %v1529, 256
    %v1571 = vadd.s32 %v1533, 256
    %v1572 = vadd.s32 %v1537, 256
    %v1573 = vadd.s32 %v1541, 256
    %vm1574 = vcmp.eq.s32.totalorder %v1542, %v83
    %vm1575 = vcmp.eq.s32.totalorder %v1542, %v84
    %vm1576 = vcmp.eq.s32.totalorder %v1542, %v85
    %vm1577 = vcmp.eq.s32.totalorder %v1543, %v83
    %vm1578 = vcmp.eq.s32.totalorder %v1543, %v84
    %vm1579 = vcmp.eq.s32.totalorder %v1543, %v85
    %vm1580 = vcmp.eq.s32.totalorder %v1544, %v83
    %vm1581 = vcmp.eq.s32.totalorder %v1544, %v84
    %vm1582 = vcmp.eq.s32.totalorder %v1544, %v85
    %vm1583 = vcmp.eq.s32.totalorder %v1545, %v83
    %vm1584 = vcmp.eq.s32.totalorder %v1545, %v84
    %vm1585 = vcmp.eq.s32.totalorder %v1545, %v85
    %vm1586 = vcmp.eq.s32.totalorder %v1546, %v83
    %vm1587 = vcmp.eq.s32.totalorder %v1546, %v84
    %vm1588 = vcmp.eq.s32.totalorder %v1546, %v85
    %vm1589 = vcmp.eq.s32.totalorder %v1547, %v83
    %vm1590 = vcmp.eq.s32.totalorder %v1547, %v84
    %vm1591 = vcmp.eq.s32.totalorder %v1547, %v85
    %vm1592 = vcmp.eq.s32.totalorder %v1548, %v83
    %vm1593 = vcmp.eq.s32.totalorder %v1548, %v84
    %vm1594 = vcmp.eq.s32.totalorder %v1548, %v85
    %vm1595 = vcmp.eq.s32.totalorder %v1549, %v83
    %vm1596 = vcmp.eq.s32.totalorder %v1549, %v84
    %vm1597 = vcmp.eq.s32.totalorder %v1549, %v85
    %vm1598 = vcmp.eq.s32.totalorder %v1550, %v83
    %vm1599 = vcmp.eq.s32.totalorder %v1550, %v84
    %vm1600 = vcmp.eq.s32.totalorder %v1550, %v85
    %vm1601 = vcmp.eq.s32.totalorder %v1551, %v83
    %vm1602 = vcmp.eq.s32.totalorder %v1551, %v84
    %vm1603 = vcmp.eq.s32.totalorder %v1551, %v85
    %vm1604 = vcmp.eq.s32.totalorder %v1552, %v83
    %vm1605 = vcmp.eq.s32.totalorder %v1552, %v84
    %vm1606 = vcmp.eq.s32.totalorder %v1552, %v85
    %vm1607 = vcmp.eq.s32.totalorder %v1553, %v83
    %vm1608 = vcmp.eq.s32.totalorder %v1553, %v84
    %vm1609 = vcmp.eq.s32.totalorder %v1553, %v85
    %vm1610 = vcmp.eq.s32.totalorder %v1554, %v83
    %vm1611 = vcmp.eq.s32.totalorder %v1554, %v84
    %vm1612 = vcmp.eq.s32.totalorder %v1554, %v85
    %vm1613 = vcmp.eq.s32.totalorder %v1555, %v83
    %vm1614 = vcmp.eq.s32.totalorder %v1555, %v84
    %vm1615 = vcmp.eq.s32.totalorder %v1555, %v85
    %vm1616 = vcmp.eq.s32.totalorder %v1556, %v83
    %vm1617 = vcmp.eq.s32.totalorder %v1556, %v84
    %vm1618 = vcmp.eq.s32.totalorder %v1556, %v85
    %vm1619 = vcmp.eq.s32.totalorder %v1557, %v83
    %vm1620 = vcmp.eq.s32.totalorder %v1557, %v84
    %vm1621 = vcmp.eq.s32.totalorder %v1557, %v85
    %vm1622 = vcmp.eq.s32.totalorder %v1558, %v83
    %vm1623 = vcmp.eq.s32.totalorder %v1558, %v84
    %vm1624 = vcmp.eq.s32.totalorder %v1558, %v85
    %vm1625 = vcmp.eq.s32.totalorder %v1559, %v83
    %vm1626 = vcmp.eq.s32.totalorder %v1559, %v84
    %vm1627 = vcmp.eq.s32.totalorder %v1559, %v85
    %vm1628 = vcmp.eq.s32.totalorder %v1560, %v83
    %vm1629 = vcmp.eq.s32.totalorder %v1560, %v84
    %vm1630 = vcmp.eq.s32.totalorder %v1560, %v85
    %vm1631 = vcmp.eq.s32.totalorder %v1561, %v83
    %vm1632 = vcmp.eq.s32.totalorder %v1561, %v84
    %vm1633 = vcmp.eq.s32.totalorder %v1561, %v85
    %vm1634 = vcmp.eq.s32.totalorder %v1562, %v83
    %vm1635 = vcmp.eq.s32.totalorder %v1562, %v84
    %vm1636 = vcmp.eq.s32.totalorder %v1562, %v85
    %vm1637 = vcmp.eq.s32.totalorder %v1563, %v83
    %vm1638 = vcmp.eq.s32.totalorder %v1563, %v84
    %vm1639 = vcmp.eq.s32.totalorder %v1563, %v85
    %vm1640 = vcmp.eq.s32.totalorder %v1564, %v83
    %vm1641 = vcmp.eq.s32.totalorder %v1564, %v84
    %vm1642 = vcmp.eq.s32.totalorder %v1564, %v85
    %vm1643 = vcmp.eq.s32.totalorder %v1565, %v83
    %vm1644 = vcmp.eq.s32.totalorder %v1565, %v84
    %vm1645 = vcmp.eq.s32.totalorder %v1565, %v85
    %vm1646 = vcmp.eq.s32.totalorder %v1566, %v83
    %vm1647 = vcmp.eq.s32.totalorder %v1566, %v84
    %vm1648 = vcmp.eq.s32.totalorder %v1566, %v85
    %vm1649 = vcmp.eq.s32.totalorder %v1567, %v83
    %vm1650 = vcmp.eq.s32.totalorder %v1567, %v84
    %vm1651 = vcmp.eq.s32.totalorder %v1567, %v85
    %vm1652 = vcmp.eq.s32.totalorder %v1568, %v83
    %vm1653 = vcmp.eq.s32.totalorder %v1568, %v84
    %vm1654 = vcmp.eq.s32.totalorder %v1568, %v85
    %vm1655 = vcmp.eq.s32.totalorder %v1569, %v83
    %vm1656 = vcmp.eq.s32.totalorder %v1569, %v84
    %vm1657 = vcmp.eq.s32.totalorder %v1569, %v85
    %vm1658 = vcmp.eq.s32.totalorder %v1570, %v83
    %vm1659 = vcmp.eq.s32.totalorder %v1570, %v84
    %vm1660 = vcmp.eq.s32.totalorder %v1570, %v85
    %vm1661 = vcmp.eq.s32.totalorder %v1571, %v83
    %vm1662 = vcmp.eq.s32.totalorder %v1571, %v84
    %vm1663 = vcmp.eq.s32.totalorder %v1571, %v85
    %vm1664 = vcmp.eq.s32.totalorder %v1572, %v83
    %vm1665 = vcmp.eq.s32.totalorder %v1572, %v84
    %vm1666 = vcmp.eq.s32.totalorder %v1572, %v85
    %vm1667 = vcmp.eq.s32.totalorder %v1573, %v83
    %vm1668 = vcmp.eq.s32.totalorder %v1573, %v84
    %vm1669 = vcmp.eq.s32.totalorder %v1573, %v85
    %vm1670 = vmor %vm1318, %vm1574
    %vm1671 = vmor %vm1319, %vm1575
    %vm1672 = vmor %vm1320, %vm1576
    %vm1673 = vmor %vm1321, %vm1577
    %vm1674 = vmor %vm1322, %vm1578
    %vm1675 = vmor %vm1323, %vm1579
    %vm1676 = vmor %vm1324, %vm1580
    %vm1677 = vmor %vm1325, %vm1581
    %vm1678 = vmor %vm1326, %vm1582
    %vm1679 = vmor %vm1327, %vm1583
    %vm1680 = vmor %vm1328, %vm1584
    %vm1681 = vmor %vm1329, %vm1585
    %vm1682 = vmor %vm1330, %vm1586
    %vm1683 = vmor %vm1331, %vm1587
    %vm1684 = vmor %vm1332, %vm1588
    %vm1685 = vmor %vm1333, %vm1589
    %vm1686 = vmor %vm1334, %vm1590
    %vm1687 = vmor %vm1335, %vm1591
    %vm1688 = vmor %vm1336, %vm1592
    %vm1689 = vmor %vm1337, %vm1593
    %vm1690 = vmor %vm1338, %vm1594
    %vm1691 = vmor %vm1339, %vm1595
    %vm1692 = vmor %vm1340, %vm1596
    %vm1693 = vmor %vm1341, %vm1597
    %vm1694 = vmor %vm1342, %vm1598
    %vm1695 = vmor %vm1343, %vm1599
    %vm1696 = vmor %vm1344, %vm1600
    %vm1697 = vmor %vm1345, %vm1601
    %vm1698 = vmor %vm1346, %vm1602
    %vm1699 = vmor %vm1347, %vm1603
    %vm1700 = vmor %vm1348, %vm1604
    %vm1701 = vmor %vm1349, %vm1605
    %vm1702 = vmor %vm1350, %vm1606
    %vm1703 = vmor %vm1351, %vm1607
    %vm1704 = vmor %vm1352, %vm1608
    %vm1705 = vmor %vm1353, %vm1609
    %vm1706 = vmor %vm1354, %vm1610
    %vm1707 = vmor %vm1355, %vm1611
    %vm1708 = vmor %vm1356, %vm1612
    %vm1709 = vmor %vm1357, %vm1613
    %vm1710 = vmor %vm1358, %vm1614
    %vm1711 = vmor %vm1359, %vm1615
    %vm1712 = vmor %vm1360, %vm1616
    %vm1713 = vmor %vm1361, %vm1617
    %vm1714 = vmor %vm1362, %vm1618
    %vm1715 = vmor %vm1363, %vm1619
    %vm1716 = vmor %vm1364, %vm1620
    %vm1717 = vmor %vm1365, %vm1621
    %vm1718 = vmor %vm1366, %vm1622
    %vm1719 = vmor %vm1367, %vm1623
    %vm1720 = vmor %vm1368, %vm1624
    %vm1721 = vmor %vm1369, %vm1625
    %vm1722 = vmor %vm1370, %vm1626
    %vm1723 = vmor %vm1371, %vm1627
    %vm1724 = vmor %vm1372, %vm1628
    %vm1725 = vmor %vm1373, %vm1629
    %vm1726 = vmor %vm1374, %vm1630
    %vm1727 = vmor %vm1375, %vm1631
    %vm1728 = vmor %vm1376, %vm1632
    %vm1729 = vmor %vm1377, %vm1633
    %vm1730 = vmor %vm1378, %vm1634
    %vm1731 = vmor %vm1379, %vm1635
    %vm1732 = vmor %vm1380, %vm1636
    %vm1733 = vmor %vm1381, %vm1637
    %vm1734 = vmor %vm1382, %vm1638
    %vm1735 = vmor %vm1383, %vm1639
    %vm1736 = vmor %vm1384, %vm1640
    %vm1737 = vmor %vm1385, %vm1641
    %vm1738 = vmor %vm1386, %vm1642
    %vm1739 = vmor %vm1387, %vm1643
    %vm1740 = vmor %vm1388, %vm1644
    %vm1741 = vmor %vm1389, %vm1645
    %vm1742 = vmor %vm1390, %vm1646
    %vm1743 = vmor %vm1391, %vm1647
    %vm1744 = vmor %vm1392, %vm1648
    %vm1745 = vmor %vm1393, %vm1649
    %vm1746 = vmor %vm1394, %vm1650
    %vm1747 = vmor %vm1395, %vm1651
    %vm1748 = vmor %vm1396, %vm1652
    %vm1749 = vmor %vm1397, %vm1653
    %vm1750 = vmor %vm1398, %vm1654
    %vm1751 = vmor %vm1399, %vm1655
    %vm1752 = vmor %vm1400, %vm1656
    %vm1753 = vmor %vm1401, %vm1657
    %vm1754 = vmor %vm1402, %vm1658
    %vm1755 = vmor %vm1403, %vm1659
    %vm1756 = vmor %vm1404, %vm1660
    %vm1757 = vmor %vm1405, %vm1661
    %vm1758 = vmor %vm1406, %vm1662
    %vm1759 = vmor %vm1407, %vm1663
    %vm1760 = vmor %vm1408, %vm1664
    %vm1761 = vmor %vm1409, %vm1665
    %vm1762 = vmor %vm1410, %vm1666
    %vm1763 = vmor %vm1411, %vm1667
    %vm1764 = vmor %vm1412, %vm1668
    %vm1765 = vmor %vm1413, %vm1669
    %v1766 = vsel %vm1670, 1, 0
    %v1767 = vsel %vm1671, 1, 0
    %v1768 = vsel %vm1672, 1, 0
    %v1769 = vsel %vm1673, 1, 0
    %v1770 = vsel %vm1674, 1, 0
    %v1771 = vsel %vm1675, 1, 0
    %v1772 = vsel %vm1676, 1, 0
    %v1773 = vsel %vm1677, 1, 0
    %v1774 = vsel %vm1678, 1, 0
    %v1775 = vsel %vm1679, 1, 0
    %v1776 = vsel %vm1680, 1, 0
    %v1777 = vsel %vm1681, 1, 0
    %v1778 = vsel %vm1682, 1, 0
    %v1779 = vsel %vm1683, 1, 0
    %v1780 = vsel %vm1684, 1, 0
    %v1781 = vsel %vm1685, 1, 0
    %v1782 = vsel %vm1686, 1, 0
    %v1783 = vsel %vm1687, 1, 0
    %v1784 = vsel %vm1688, 1, 0
    %v1785 = vsel %vm1689, 1, 0
    %v1786 = vsel %vm1690, 1, 0
    %v1787 = vsel %vm1691, 1, 0
    %v1788 = vsel %vm1692, 1, 0
    %v1789 = vsel %vm1693, 1, 0
    %v1790 = vsel %vm1694, 1, 0
    %v1791 = vsel %vm1695, 1, 0
    %v1792 = vsel %vm1696, 1, 0
    %v1793 = vsel %vm1697, 1, 0
    %v1794 = vsel %vm1698, 1, 0
    %v1795 = vsel %vm1699, 1, 0
    %v1796 = vsel %vm1700, 1, 0
    %v1797 = vsel %vm1701, 1, 0
    %v1798 = vsel %vm1702, 1, 0
    %v1799 = vsel %vm1703, 1, 0
    %v1800 = vsel %vm1704, 1, 0
    %v1801 = vsel %vm1705, 1, 0
    %v1802 = vsel %vm1706, 1, 0
    %v1803 = vsel %vm1707, 1, 0
    %v1804 = vsel %vm1708, 1, 0
    %v1805 = vsel %vm1709, 1, 0
    %v1806 = vsel %vm1710, 1, 0
    %v1807 = vsel %vm1711, 1, 0
    %v1808 = vsel %vm1712, 1, 0
    %v1809 = vsel %vm1713, 1, 0
    %v1810 = vsel %vm1714, 1, 0
    %v1811 = vsel %vm1715, 1, 0
    %v1812 = vsel %vm1716, 1, 0
    %v1813 = vsel %vm1717, 1, 0
    %v1814 = vsel %vm1718, 1, 0
    %v1815 = vsel %vm1719, 1, 0
    %v1816 = vsel %vm1720, 1, 0
    %v1817 = vsel %vm1721, 1, 0
    %v1818 = vsel %vm1722, 1, 0
    %v1819 = vsel %vm1723, 1, 0
    %v1820 = vsel %vm1724, 1, 0
    %v1821 = vsel %vm1725, 1, 0
    %v1822 = vsel %vm1726, 1, 0
    %v1823 = vsel %vm1727, 1, 0
    %v1824 = vsel %vm1728, 1, 0
    %v1825 = vsel %vm1729, 1, 0
    %v1826 = vsel %vm1730, 1, 0
    %v1827 = vsel %vm1731, 1, 0
    %v1828 = vsel %vm1732, 1, 0
    %v1829 = vsel %vm1733, 1, 0
    %v1830 = vsel %vm1734, 1, 0
    %v1831 = vsel %vm1735, 1, 0
    %v1832 = vsel %vm1736, 1, 0
    %v1833 = vsel %vm1737, 1, 0
    %v1834 = vsel %vm1738, 1, 0
    %v1835 = vsel %vm1739, 1, 0
    %v1836 = vsel %vm1740, 1, 0
    %v1837 = vsel %vm1741, 1, 0
    %v1838 = vsel %vm1742, 1, 0
    %v1839 = vsel %vm1743, 1, 0
    %v1840 = vsel %vm1744, 1, 0
    %v1841 = vsel %vm1745, 1, 0
    %v1842 = vsel %vm1746, 1, 0
    %v1843 = vsel %vm1747, 1, 0
    %v1844 = vsel %vm1748, 1, 0
    %v1845 = vsel %vm1749, 1, 0
    %v1846 = vsel %vm1750, 1, 0
    %v1847 = vsel %vm1751, 1, 0
    %v1848 = vsel %vm1752, 1, 0
    %v1849 = vsel %vm1753, 1, 0
    %v1850 = vsel %vm1754, 1, 0
    %v1851 = vsel %vm1755, 1, 0
    %v1852 = vsel %vm1756, 1, 0
    %v1853 = vsel %vm1757, 1, 0
    %v1854 = vsel %vm1758, 1, 0
    %v1855 = vsel %vm1759, 1, 0
    %v1856 = vsel %vm1760, 1, 0
    %v1857 = vsel %vm1761, 1, 0
    %v1858 = vsel %vm1762, 1, 0
    %v1859 = vsel %vm1763, 1, 0
    %v1860 = vsel %vm1764, 1, 0
    %v1861 = vsel %vm1765, 1, 0
    %v1862 = vcvt.s32.f32 %v1766
    %v1863 = vcvt.s32.f32 %v1767
    %v1864 = vcvt.s32.f32 %v1768
    %v1865 = vcvt.s32.f32 %v1769
    %v1866 = vcvt.s32.f32 %v1770
    %v1867 = vcvt.s32.f32 %v1771
    %v1868 = vcvt.s32.f32 %v1772
    %v1869 = vcvt.s32.f32 %v1773
    %v1870 = vcvt.s32.f32 %v1774
    %v1871 = vcvt.s32.f32 %v1775
    %v1872 = vcvt.s32.f32 %v1776
    %v1873 = vcvt.s32.f32 %v1777
    %v1874 = vcvt.s32.f32 %v1778
    %v1875 = vcvt.s32.f32 %v1779
    %v1876 = vcvt.s32.f32 %v1780
    %v1877 = vcvt.s32.f32 %v1781
    %v1878 = vcvt.s32.f32 %v1782
    %v1879 = vcvt.s32.f32 %v1783
    %v1880 = vcvt.s32.f32 %v1784
    %v1881 = vcvt.s32.f32 %v1785
    %v1882 = vcvt.s32.f32 %v1786
    %v1883 = vcvt.s32.f32 %v1787
    %v1884 = vcvt.s32.f32 %v1788
    %v1885 = vcvt.s32.f32 %v1789
    %v1886 = vcvt.s32.f32 %v1790
    %v1887 = vcvt.s32.f32 %v1791
    %v1888 = vcvt.s32.f32 %v1792
    %v1889 = vcvt.s32.f32 %v1793
    %v1890 = vcvt.s32.f32 %v1794
    %v1891 = vcvt.s32.f32 %v1795
    %v1892 = vcvt.s32.f32 %v1796
    %v1893 = vcvt.s32.f32 %v1797
    %v1894 = vcvt.s32.f32 %v1798
    %v1895 = vcvt.s32.f32 %v1799
    %v1896 = vcvt.s32.f32 %v1800
    %v1897 = vcvt.s32.f32 %v1801
    %v1898 = vcvt.s32.f32 %v1802
    %v1899 = vcvt.s32.f32 %v1803
    %v1900 = vcvt.s32.f32 %v1804
    %v1901 = vcvt.s32.f32 %v1805
    %v1902 = vcvt.s32.f32 %v1806
    %v1903 = vcvt.s32.f32 %v1807
    %v1904 = vcvt.s32.f32 %v1808
    %v1905 = vcvt.s32.f32 %v1809
    %v1906 = vcvt.s32.f32 %v1810
    %v1907 = vcvt.s32.f32 %v1811
    %v1908 = vcvt.s32.f32 %v1812
    %v1909 = vcvt.s32.f32 %v1813
    %v1910 = vcvt.s32.f32 %v1814
    %v1911 = vcvt.s32.f32 %v1815
    %v1912 = vcvt.s32.f32 %v1816
    %v1913 = vcvt.s32.f32 %v1817
    %v1914 = vcvt.s32.f32 %v1818
    %v1915 = vcvt.s32.f32 %v1819
    %v1916 = vcvt.s32.f32 %v1820
    %v1917 = vcvt.s32.f32 %v1821
    %v1918 = vcvt.s32.f32 %v1822
    %v1919 = vcvt.s32.f32 %v1823
    %v1920 = vcvt.s32.f32 %v1824
    %v1921 = vcvt.s32.f32 %v1825
    %v1922 = vcvt.s32.f32 %v1826
    %v1923 = vcvt.s32.f32 %v1827
    %v1924 = vcvt.s32.f32 %v1828
    %v1925 = vcvt.s32.f32 %v1829
    %v1926 = vcvt.s32.f32 %v1830
    %v1927 = vcvt.s32.f32 %v1831
    %v1928 = vcvt.s32.f32 %v1832
    %v1929 = vcvt.s32.f32 %v1833
    %v1930 = vcvt.s32.f32 %v1834
    %v1931 = vcvt.s32.f32 %v1835
    %v1932 = vcvt.s32.f32 %v1836
    %v1933 = vcvt.s32.f32 %v1837
    %v1934 = vcvt.s32.f32 %v1838
    %v1935 = vcvt.s32.f32 %v1839
    %v1936 = vcvt.s32.f32 %v1840
    %v1937 = vcvt.s32.f32 %v1841
    %v1938 = vcvt.s32.f32 %v1842
    %v1939 = vcvt.s32.f32 %v1843
    %v1940 = vcvt.s32.f32 %v1844
    %v1941 = vcvt.s32.f32 %v1845
    %v1942 = vcvt.s32.f32 %v1846
    %v1943 = vcvt.s32.f32 %v1847
    %v1944 = vcvt.s32.f32 %v1848
    %v1945 = vcvt.s32.f32 %v1849
    %v1946 = vcvt.s32.f32 %v1850
    %v1947 = vcvt.s32.f32 %v1851
    %v1948 = vcvt.s32.f32 %v1852
    %v1949 = vcvt.s32.f32 %v1853
    %v1950 = vcvt.s32.f32 %v1854
    %v1951 = vcvt.s32.f32 %v1855
    %v1952 = vcvt.s32.f32 %v1856
    %v1953 = vcvt.s32.f32 %v1857
    %v1954 = vcvt.s32.f32 %v1858
    %v1955 = vcvt.s32.f32 %v1859
    %v1956 = vcvt.s32.f32 %v1860
    %v1957 = vcvt.s32.f32 %v1861
    %v1958 = vpack.c.bf16 %v1865, %v1862
    %v1959 = vpack.c.bf16 %v1866, %v1863
    %v1960 = vpack.c.bf16 %v1867, %v1864
    %v1961 = vpack.c.bf16 %v1871, %v1868
    %v1962 = vpack.c.bf16 %v1872, %v1869
    %v1963 = vpack.c.bf16 %v1873, %v1870
    %v1964 = vpack.c.bf16 %v1877, %v1874
    %v1965 = vpack.c.bf16 %v1878, %v1875
    %v1966 = vpack.c.bf16 %v1879, %v1876
    %v1967 = vpack.c.bf16 %v1883, %v1880
    %v1968 = vpack.c.bf16 %v1884, %v1881
    %v1969 = vpack.c.bf16 %v1885, %v1882
    %v1970 = vpack.c.bf16 %v1889, %v1886
    %v1971 = vpack.c.bf16 %v1890, %v1887
    %v1972 = vpack.c.bf16 %v1891, %v1888
    %v1973 = vpack.c.bf16 %v1895, %v1892
    %v1974 = vpack.c.bf16 %v1896, %v1893
    %v1975 = vpack.c.bf16 %v1897, %v1894
    %v1976 = vpack.c.bf16 %v1901, %v1898
    %v1977 = vpack.c.bf16 %v1902, %v1899
    %v1978 = vpack.c.bf16 %v1903, %v1900
    %v1979 = vpack.c.bf16 %v1907, %v1904
    %v1980 = vpack.c.bf16 %v1908, %v1905
    %v1981 = vpack.c.bf16 %v1909, %v1906
    %v1982 = vpack.c.bf16 %v1913, %v1910
    %v1983 = vpack.c.bf16 %v1914, %v1911
    %v1984 = vpack.c.bf16 %v1915, %v1912
    %v1985 = vpack.c.bf16 %v1919, %v1916
    %v1986 = vpack.c.bf16 %v1920, %v1917
    %v1987 = vpack.c.bf16 %v1921, %v1918
    %v1988 = vpack.c.bf16 %v1925, %v1922
    %v1989 = vpack.c.bf16 %v1926, %v1923
    %v1990 = vpack.c.bf16 %v1927, %v1924
    %v1991 = vpack.c.bf16 %v1931, %v1928
    %v1992 = vpack.c.bf16 %v1932, %v1929
    %v1993 = vpack.c.bf16 %v1933, %v1930
    %v1994 = vpack.c.bf16 %v1937, %v1934
    %v1995 = vpack.c.bf16 %v1938, %v1935
    %v1996 = vpack.c.bf16 %v1939, %v1936
    %v1997 = vpack.c.bf16 %v1943, %v1940
    %v1998 = vpack.c.bf16 %v1944, %v1941
    %v1999 = vpack.c.bf16 %v1945, %v1942
    %v2000 = vpack.c.bf16 %v1949, %v1946
    %v2001 = vpack.c.bf16 %v1950, %v1947
    %v2002 = vpack.c.bf16 %v1951, %v1948
    %v2003 = vpack.c.bf16 %v1955, %v1952
    %v2004 = vpack.c.bf16 %v1956, %v1953
    %v2005 = vpack.c.bf16 %v1957, %v1954
    %v2054 = vcombine.low %v1958, %v1959
    %v2055 = vcombine.high %v1958, %v1959
    %v2056 = vcombine.high %v1960, %v1960
    %v2058 = vunpack.c.l.s4 1966171168
    %v2059 = vunpack.c.0.s8 %v2058
    %v2060 = vlaneseq
    %v2061 = vshrl.u32 %v2060, 7
    %v2062 = vsub.s32 %v2059, %v2061
    %v2063 = vrot.slane %v2054, %v2062
    %v2065 = vunpack.c.l.s4 1966171168
    %v2066 = vunpack.c.0.s8 %v2065
    %v2067 = vlaneseq
    %v2068 = vshrl.u32 %v2067, 7
    %v2069 = vsub.s32 %v2066, %v2068
    %v2070 = vrot.slane %v2055, %v2069
    %v2072 = vunpack.c.l.s4 1966171168
    %v2073 = vunpack.c.0.s8 %v2072
    %v2074 = vlaneseq
    %v2075 = vshrl.u32 %v2074, 7
    %v2076 = vsub.s32 %v2073, %v2075
    %v2077 = vrot.slane %v1960, %v2076
    %v2079 = vunpack.c.l.s4 1966171168
    %v2080 = vunpack.c.0.s8 %v2079
    %v2081 = vlaneseq
    %v2082 = vshrl.u32 %v2081, 7
    %v2083 = vsub.s32 %v2080, %v2082
    %v2084 = vrot.slane %v2056, %v2083
    %v2085 = vcombine.low %v2063, %v2077
    %v2086 = vcombine.high %v2063, %v2077
    %v2087 = vcombine.low %v2070, %v2084
    %v2088 = vcombine.high %v2070, %v2084
    %v2090 = vunpack.c.l.s4 1966171168
    %v2091 = vunpack.c.0.s8 %v2090
    %v2092 = vlaneseq
    %v2093 = vshrl.u32 %v2092, 7
    %v2094 = vsub.s32 %v2091, %v2093
    %v2095 = vrot.slane %v2085, %v2094
    %v2097 = vunpack.c.l.s4 1966171168
    %v2098 = vunpack.c.0.s8 %v2097
    %v2099 = vlaneseq
    %v2100 = vshrl.u32 %v2099, 7
    %v2101 = vsub.s32 %v2098, %v2100
    %v2102 = vrot.slane %v2087, %v2101
    %v2104 = vunpack.c.l.s4 1966171168
    %v2105 = vunpack.c.0.s8 %v2104
    %v2106 = vlaneseq
    %v2107 = vshrl.u32 %v2106, 7
    %v2108 = vsub.s32 %v2105, %v2107
    %v2109 = vrot.slane %v2086, %v2108
    %v2111 = vunpack.c.l.s4 1966171168
    %v2112 = vunpack.c.0.s8 %v2111
    %v2113 = vlaneseq
    %v2114 = vshrl.u32 %v2113, 7
    %v2115 = vsub.s32 %v2112, %v2114
    %v2116 = vrot.slane %v2088, %v2115
    %v2117 = vcombine.high %v2095, %v2095
    %v2118 = vcombine.high %v2102, %v2102
    %v2119 = vcombine.high %v2109, %v2109
    %v2120 = vcombine.low %v1961, %v1962
    %v2121 = vcombine.high %v1961, %v1962
    %v2122 = vcombine.high %v1963, %v1963
    %v2124 = vunpack.c.l.s4 1966171168
    %v2125 = vunpack.c.0.s8 %v2124
    %v2126 = vlaneseq
    %v2127 = vshrl.u32 %v2126, 7
    %v2128 = vsub.s32 %v2125, %v2127
    %v2129 = vrot.slane %v2120, %v2128
    %v2131 = vunpack.c.l.s4 1966171168
    %v2132 = vunpack.c.0.s8 %v2131
    %v2133 = vlaneseq
    %v2134 = vshrl.u32 %v2133, 7
    %v2135 = vsub.s32 %v2132, %v2134
    %v2136 = vrot.slane %v2121, %v2135
    %v2138 = vunpack.c.l.s4 1966171168
    %v2139 = vunpack.c.0.s8 %v2138
    %v2140 = vlaneseq
    %v2141 = vshrl.u32 %v2140, 7
    %v2142 = vsub.s32 %v2139, %v2141
    %v2143 = vrot.slane %v1963, %v2142
    %v2145 = vunpack.c.l.s4 1966171168
    %v2146 = vunpack.c.0.s8 %v2145
    %v2147 = vlaneseq
    %v2148 = vshrl.u32 %v2147, 7
    %v2149 = vsub.s32 %v2146, %v2148
    %v2150 = vrot.slane %v2122, %v2149
    %v2151 = vcombine.low %v2129, %v2143
    %v2152 = vcombine.high %v2129, %v2143
    %v2153 = vcombine.low %v2136, %v2150
    %v2154 = vcombine.high %v2136, %v2150
    %v2156 = vunpack.c.l.s4 1966171168
    %v2157 = vunpack.c.0.s8 %v2156
    %v2158 = vlaneseq
    %v2159 = vshrl.u32 %v2158, 7
    %v2160 = vsub.s32 %v2157, %v2159
    %v2161 = vrot.slane %v2151, %v2160
    %v2163 = vunpack.c.l.s4 1966171168
    %v2164 = vunpack.c.0.s8 %v2163
    %v2165 = vlaneseq
    %v2166 = vshrl.u32 %v2165, 7
    %v2167 = vsub.s32 %v2164, %v2166
    %v2168 = vrot.slane %v2153, %v2167
    %v2170 = vunpack.c.l.s4 1966171168
    %v2171 = vunpack.c.0.s8 %v2170
    %v2172 = vlaneseq
    %v2173 = vshrl.u32 %v2172, 7
    %v2174 = vsub.s32 %v2171, %v2173
    %v2175 = vrot.slane %v2152, %v2174
    %v2177 = vunpack.c.l.s4 1966171168
    %v2178 = vunpack.c.0.s8 %v2177
    %v2179 = vlaneseq
    %v2180 = vshrl.u32 %v2179, 7
    %v2181 = vsub.s32 %v2178, %v2180
    %v2182 = vrot.slane %v2154, %v2181
    %v2183 = vcombine.high %v2161, %v2161
    %v2184 = vcombine.high %v2168, %v2168
    %v2185 = vcombine.high %v2175, %v2175
    %v2186 = vcombine.low %v1964, %v1965
    %v2187 = vcombine.high %v1964, %v1965
    %v2188 = vcombine.high %v1966, %v1966
    %v2190 = vunpack.c.l.s4 1966171168
    %v2191 = vunpack.c.0.s8 %v2190
    %v2192 = vlaneseq
    %v2193 = vshrl.u32 %v2192, 7
    %v2194 = vsub.s32 %v2191, %v2193
    %v2195 = vrot.slane %v2186, %v2194
    %v2197 = vunpack.c.l.s4 1966171168
    %v2198 = vunpack.c.0.s8 %v2197
    %v2199 = vlaneseq
    %v2200 = vshrl.u32 %v2199, 7
    %v2201 = vsub.s32 %v2198, %v2200
    %v2202 = vrot.slane %v2187, %v2201
    %v2204 = vunpack.c.l.s4 1966171168
    %v2205 = vunpack.c.0.s8 %v2204
    %v2206 = vlaneseq
    %v2207 = vshrl.u32 %v2206, 7
    %v2208 = vsub.s32 %v2205, %v2207
    %v2209 = vrot.slane %v1966, %v2208
    %v2211 = vunpack.c.l.s4 1966171168
    %v2212 = vunpack.c.0.s8 %v2211
    %v2213 = vlaneseq
    %v2214 = vshrl.u32 %v2213, 7
    %v2215 = vsub.s32 %v2212, %v2214
    %v2216 = vrot.slane %v2188, %v2215
    %v2217 = vcombine.low %v2195, %v2209
    %v2218 = vcombine.high %v2195, %v2209
    %v2219 = vcombine.low %v2202, %v2216
    %v2220 = vcombine.high %v2202, %v2216
    %v2222 = vunpack.c.l.s4 1966171168
    %v2223 = vunpack.c.0.s8 %v2222
    %v2224 = vlaneseq
    %v2225 = vshrl.u32 %v2224, 7
    %v2226 = vsub.s32 %v2223, %v2225
    %v2227 = vrot.slane %v2217, %v2226
    %v2229 = vunpack.c.l.s4 1966171168
    %v2230 = vunpack.c.0.s8 %v2229
    %v2231 = vlaneseq
    %v2232 = vshrl.u32 %v2231, 7
    %v2233 = vsub.s32 %v2230, %v2232
    %v2234 = vrot.slane %v2219, %v2233
    %v2236 = vunpack.c.l.s4 1966171168
    %v2237 = vunpack.c.0.s8 %v2236
    %v2238 = vlaneseq
    %v2239 = vshrl.u32 %v2238, 7
    %v2240 = vsub.s32 %v2237, %v2239
    %v2241 = vrot.slane %v2218, %v2240
    %v2243 = vunpack.c.l.s4 1966171168
    %v2244 = vunpack.c.0.s8 %v2243
    %v2245 = vlaneseq
    %v2246 = vshrl.u32 %v2245, 7
    %v2247 = vsub.s32 %v2244, %v2246
    %v2248 = vrot.slane %v2220, %v2247
    %v2249 = vcombine.high %v2227, %v2227
    %v2250 = vcombine.high %v2234, %v2234
    %v2251 = vcombine.high %v2241, %v2241
    %v2252 = vcombine.low %v1967, %v1968
    %v2253 = vcombine.high %v1967, %v1968
    %v2254 = vcombine.high %v1969, %v1969
    %v2256 = vunpack.c.l.s4 1966171168
    %v2257 = vunpack.c.0.s8 %v2256
    %v2258 = vlaneseq
    %v2259 = vshrl.u32 %v2258, 7
    %v2260 = vsub.s32 %v2257, %v2259
    %v2261 = vrot.slane %v2252, %v2260
    %v2263 = vunpack.c.l.s4 1966171168
    %v2264 = vunpack.c.0.s8 %v2263
    %v2265 = vlaneseq
    %v2266 = vshrl.u32 %v2265, 7
    %v2267 = vsub.s32 %v2264, %v2266
    %v2268 = vrot.slane %v2253, %v2267
    %v2270 = vunpack.c.l.s4 1966171168
    %v2271 = vunpack.c.0.s8 %v2270
    %v2272 = vlaneseq
    %v2273 = vshrl.u32 %v2272, 7
    %v2274 = vsub.s32 %v2271, %v2273
    %v2275 = vrot.slane %v1969, %v2274
    %v2277 = vunpack.c.l.s4 1966171168
    %v2278 = vunpack.c.0.s8 %v2277
    %v2279 = vlaneseq
    %v2280 = vshrl.u32 %v2279, 7
    %v2281 = vsub.s32 %v2278, %v2280
    %v2282 = vrot.slane %v2254, %v2281
    %v2283 = vcombine.low %v2261, %v2275
    %v2284 = vcombine.high %v2261, %v2275
    %v2285 = vcombine.low %v2268, %v2282
    %v2286 = vcombine.high %v2268, %v2282
    %v2288 = vunpack.c.l.s4 1966171168
    %v2289 = vunpack.c.0.s8 %v2288
    %v2290 = vlaneseq
    %v2291 = vshrl.u32 %v2290, 7
    %v2292 = vsub.s32 %v2289, %v2291
    %v2293 = vrot.slane %v2283, %v2292
    %v2295 = vunpack.c.l.s4 1966171168
    %v2296 = vunpack.c.0.s8 %v2295
    %v2297 = vlaneseq
    %v2298 = vshrl.u32 %v2297, 7
    %v2299 = vsub.s32 %v2296, %v2298
    %v2300 = vrot.slane %v2285, %v2299
    %v2302 = vunpack.c.l.s4 1966171168
    %v2303 = vunpack.c.0.s8 %v2302
    %v2304 = vlaneseq
    %v2305 = vshrl.u32 %v2304, 7
    %v2306 = vsub.s32 %v2303, %v2305
    %v2307 = vrot.slane %v2284, %v2306
    %v2309 = vunpack.c.l.s4 1966171168
    %v2310 = vunpack.c.0.s8 %v2309
    %v2311 = vlaneseq
    %v2312 = vshrl.u32 %v2311, 7
    %v2313 = vsub.s32 %v2310, %v2312
    %v2314 = vrot.slane %v2286, %v2313
    %v2315 = vcombine.high %v2293, %v2293
    %v2316 = vcombine.high %v2300, %v2300
    %v2317 = vcombine.high %v2307, %v2307
    %v2318 = vcombine.low %v1970, %v1971
    %v2319 = vcombine.high %v1970, %v1971
    %v2320 = vcombine.high %v1972, %v1972
    %v2322 = vunpack.c.l.s4 1966171168
    %v2323 = vunpack.c.0.s8 %v2322
    %v2324 = vlaneseq
    %v2325 = vshrl.u32 %v2324, 7
    %v2326 = vsub.s32 %v2323, %v2325
    %v2327 = vrot.slane %v2318, %v2326
    %v2329 = vunpack.c.l.s4 1966171168
    %v2330 = vunpack.c.0.s8 %v2329
    %v2331 = vlaneseq
    %v2332 = vshrl.u32 %v2331, 7
    %v2333 = vsub.s32 %v2330, %v2332
    %v2334 = vrot.slane %v2319, %v2333
    %v2336 = vunpack.c.l.s4 1966171168
    %v2337 = vunpack.c.0.s8 %v2336
    %v2338 = vlaneseq
    %v2339 = vshrl.u32 %v2338, 7
    %v2340 = vsub.s32 %v2337, %v2339
    %v2341 = vrot.slane %v1972, %v2340
    %v2343 = vunpack.c.l.s4 1966171168
    %v2344 = vunpack.c.0.s8 %v2343
    %v2345 = vlaneseq
    %v2346 = vshrl.u32 %v2345, 7
    %v2347 = vsub.s32 %v2344, %v2346
    %v2348 = vrot.slane %v2320, %v2347
    %v2349 = vcombine.low %v2327, %v2341
    %v2350 = vcombine.high %v2327, %v2341
    %v2351 = vcombine.low %v2334, %v2348
    %v2352 = vcombine.high %v2334, %v2348
    %v2354 = vunpack.c.l.s4 1966171168
    %v2355 = vunpack.c.0.s8 %v2354
    %v2356 = vlaneseq
    %v2357 = vshrl.u32 %v2356, 7
    %v2358 = vsub.s32 %v2355, %v2357
    %v2359 = vrot.slane %v2349, %v2358
    %v2361 = vunpack.c.l.s4 1966171168
    %v2362 = vunpack.c.0.s8 %v2361
    %v2363 = vlaneseq
    %v2364 = vshrl.u32 %v2363, 7
    %v2365 = vsub.s32 %v2362, %v2364
    %v2366 = vrot.slane %v2351, %v2365
    %v2368 = vunpack.c.l.s4 1966171168
    %v2369 = vunpack.c.0.s8 %v2368
    %v2370 = vlaneseq
    %v2371 = vshrl.u32 %v2370, 7
    %v2372 = vsub.s32 %v2369, %v2371
    %v2373 = vrot.slane %v2350, %v2372
    %v2375 = vunpack.c.l.s4 1966171168
    %v2376 = vunpack.c.0.s8 %v2375
    %v2377 = vlaneseq
    %v2378 = vshrl.u32 %v2377, 7
    %v2379 = vsub.s32 %v2376, %v2378
    %v2380 = vrot.slane %v2352, %v2379
    %v2381 = vcombine.high %v2359, %v2359
    %v2382 = vcombine.high %v2366, %v2366
    %v2383 = vcombine.high %v2373, %v2373
    %v2384 = vcombine.low %v1973, %v1974
    %v2385 = vcombine.high %v1973, %v1974
    %v2386 = vcombine.high %v1975, %v1975
    %v2388 = vunpack.c.l.s4 1966171168
    %v2389 = vunpack.c.0.s8 %v2388
    %v2390 = vlaneseq
    %v2391 = vshrl.u32 %v2390, 7
    %v2392 = vsub.s32 %v2389, %v2391
    %v2393 = vrot.slane %v2384, %v2392
    %v2395 = vunpack.c.l.s4 1966171168
    %v2396 = vunpack.c.0.s8 %v2395
    %v2397 = vlaneseq
    %v2398 = vshrl.u32 %v2397, 7
    %v2399 = vsub.s32 %v2396, %v2398
    %v2400 = vrot.slane %v2385, %v2399
    %v2402 = vunpack.c.l.s4 1966171168
    %v2403 = vunpack.c.0.s8 %v2402
    %v2404 = vlaneseq
    %v2405 = vshrl.u32 %v2404, 7
    %v2406 = vsub.s32 %v2403, %v2405
    %v2407 = vrot.slane %v1975, %v2406
    %v2409 = vunpack.c.l.s4 1966171168
    %v2410 = vunpack.c.0.s8 %v2409
    %v2411 = vlaneseq
    %v2412 = vshrl.u32 %v2411, 7
    %v2413 = vsub.s32 %v2410, %v2412
    %v2414 = vrot.slane %v2386, %v2413
    %v2415 = vcombine.low %v2393, %v2407
    %v2416 = vcombine.high %v2393, %v2407
    %v2417 = vcombine.low %v2400, %v2414
    %v2418 = vcombine.high %v2400, %v2414
    %v2420 = vunpack.c.l.s4 1966171168
    %v2421 = vunpack.c.0.s8 %v2420
    %v2422 = vlaneseq
    %v2423 = vshrl.u32 %v2422, 7
    %v2424 = vsub.s32 %v2421, %v2423
    %v2425 = vrot.slane %v2415, %v2424
    %v2427 = vunpack.c.l.s4 1966171168
    %v2428 = vunpack.c.0.s8 %v2427
    %v2429 = vlaneseq
    %v2430 = vshrl.u32 %v2429, 7
    %v2431 = vsub.s32 %v2428, %v2430
    %v2432 = vrot.slane %v2417, %v2431
    %v2434 = vunpack.c.l.s4 1966171168
    %v2435 = vunpack.c.0.s8 %v2434
    %v2436 = vlaneseq
    %v2437 = vshrl.u32 %v2436, 7
    %v2438 = vsub.s32 %v2435, %v2437
    %v2439 = vrot.slane %v2416, %v2438
    %v2441 = vunpack.c.l.s4 1966171168
    %v2442 = vunpack.c.0.s8 %v2441
    %v2443 = vlaneseq
    %v2444 = vshrl.u32 %v2443, 7
    %v2445 = vsub.s32 %v2442, %v2444
    %v2446 = vrot.slane %v2418, %v2445
    %v2447 = vcombine.high %v2425, %v2425
    %v2448 = vcombine.high %v2432, %v2432
    %v2449 = vcombine.high %v2439, %v2439
    %v2450 = vcombine.low %v1976, %v1977
    %v2451 = vcombine.high %v1976, %v1977
    %v2452 = vcombine.high %v1978, %v1978
    %v2454 = vunpack.c.l.s4 1966171168
    %v2455 = vunpack.c.0.s8 %v2454
    %v2456 = vlaneseq
    %v2457 = vshrl.u32 %v2456, 7
    %v2458 = vsub.s32 %v2455, %v2457
    %v2459 = vrot.slane %v2450, %v2458
    %v2461 = vunpack.c.l.s4 1966171168
    %v2462 = vunpack.c.0.s8 %v2461
    %v2463 = vlaneseq
    %v2464 = vshrl.u32 %v2463, 7
    %v2465 = vsub.s32 %v2462, %v2464
    %v2466 = vrot.slane %v2451, %v2465
    %v2468 = vunpack.c.l.s4 1966171168
    %v2469 = vunpack.c.0.s8 %v2468
    %v2470 = vlaneseq
    %v2471 = vshrl.u32 %v2470, 7
    %v2472 = vsub.s32 %v2469, %v2471
    %v2473 = vrot.slane %v1978, %v2472
    %v2475 = vunpack.c.l.s4 1966171168
    %v2476 = vunpack.c.0.s8 %v2475
    %v2477 = vlaneseq
    %v2478 = vshrl.u32 %v2477, 7
    %v2479 = vsub.s32 %v2476, %v2478
    %v2480 = vrot.slane %v2452, %v2479
    %v2481 = vcombine.low %v2459, %v2473
    %v2482 = vcombine.high %v2459, %v2473
    %v2483 = vcombine.low %v2466, %v2480
    %v2484 = vcombine.high %v2466, %v2480
    %v2486 = vunpack.c.l.s4 1966171168
    %v2487 = vunpack.c.0.s8 %v2486
    %v2488 = vlaneseq
    %v2489 = vshrl.u32 %v2488, 7
    %v2490 = vsub.s32 %v2487, %v2489
    %v2491 = vrot.slane %v2481, %v2490
    %v2493 = vunpack.c.l.s4 1966171168
    %v2494 = vunpack.c.0.s8 %v2493
    %v2495 = vlaneseq
    %v2496 = vshrl.u32 %v2495, 7
    %v2497 = vsub.s32 %v2494, %v2496
    %v2498 = vrot.slane %v2483, %v2497
    %v2500 = vunpack.c.l.s4 1966171168
    %v2501 = vunpack.c.0.s8 %v2500
    %v2502 = vlaneseq
    %v2503 = vshrl.u32 %v2502, 7
    %v2504 = vsub.s32 %v2501, %v2503
    %v2505 = vrot.slane %v2482, %v2504
    %v2507 = vunpack.c.l.s4 1966171168
    %v2508 = vunpack.c.0.s8 %v2507
    %v2509 = vlaneseq
    %v2510 = vshrl.u32 %v2509, 7
    %v2511 = vsub.s32 %v2508, %v2510
    %v2512 = vrot.slane %v2484, %v2511
    %v2513 = vcombine.high %v2491, %v2491
    %v2514 = vcombine.high %v2498, %v2498
    %v2515 = vcombine.high %v2505, %v2505
    %v2516 = vcombine.low %v1979, %v1980
    %v2517 = vcombine.high %v1979, %v1980
    %v2518 = vcombine.high %v1981, %v1981
    %v2520 = vunpack.c.l.s4 1966171168
    %v2521 = vunpack.c.0.s8 %v2520
    %v2522 = vlaneseq
    %v2523 = vshrl.u32 %v2522, 7
    %v2524 = vsub.s32 %v2521, %v2523
    %v2525 = vrot.slane %v2516, %v2524
    %v2527 = vunpack.c.l.s4 1966171168
    %v2528 = vunpack.c.0.s8 %v2527
    %v2529 = vlaneseq
    %v2530 = vshrl.u32 %v2529, 7
    %v2531 = vsub.s32 %v2528, %v2530
    %v2532 = vrot.slane %v2517, %v2531
    %v2534 = vunpack.c.l.s4 1966171168
    %v2535 = vunpack.c.0.s8 %v2534
    %v2536 = vlaneseq
    %v2537 = vshrl.u32 %v2536, 7
    %v2538 = vsub.s32 %v2535, %v2537
    %v2539 = vrot.slane %v1981, %v2538
    %v2541 = vunpack.c.l.s4 1966171168
    %v2542 = vunpack.c.0.s8 %v2541
    %v2543 = vlaneseq
    %v2544 = vshrl.u32 %v2543, 7
    %v2545 = vsub.s32 %v2542, %v2544
    %v2546 = vrot.slane %v2518, %v2545
    %v2547 = vcombine.low %v2525, %v2539
    %v2548 = vcombine.high %v2525, %v2539
    %v2549 = vcombine.low %v2532, %v2546
    %v2550 = vcombine.high %v2532, %v2546
    %v2552 = vunpack.c.l.s4 1966171168
    %v2553 = vunpack.c.0.s8 %v2552
    %v2554 = vlaneseq
    %v2555 = vshrl.u32 %v2554, 7
    %v2556 = vsub.s32 %v2553, %v2555
    %v2557 = vrot.slane %v2547, %v2556
    %v2559 = vunpack.c.l.s4 1966171168
    %v2560 = vunpack.c.0.s8 %v2559
    %v2561 = vlaneseq
    %v2562 = vshrl.u32 %v2561, 7
    %v2563 = vsub.s32 %v2560, %v2562
    %v2564 = vrot.slane %v2549, %v2563
    %v2566 = vunpack.c.l.s4 1966171168
    %v2567 = vunpack.c.0.s8 %v2566
    %v2568 = vlaneseq
    %v2569 = vshrl.u32 %v2568, 7
    %v2570 = vsub.s32 %v2567, %v2569
    %v2571 = vrot.slane %v2548, %v2570
    %v2573 = vunpack.c.l.s4 1966171168
    %v2574 = vunpack.c.0.s8 %v2573
    %v2575 = vlaneseq
    %v2576 = vshrl.u32 %v2575, 7
    %v2577 = vsub.s32 %v2574, %v2576
    %v2578 = vrot.slane %v2550, %v2577
    %v2579 = vcombine.high %v2557, %v2557
    %v2580 = vcombine.high %v2564, %v2564
    %v2581 = vcombine.high %v2571, %v2571
    %v2582 = vcombine.low %v1982, %v1983
    %v2583 = vcombine.high %v1982, %v1983
    %v2584 = vcombine.high %v1984, %v1984
    %v2586 = vunpack.c.l.s4 1966171168
    %v2587 = vunpack.c.0.s8 %v2586
    %v2588 = vlaneseq
    %v2589 = vshrl.u32 %v2588, 7
    %v2590 = vsub.s32 %v2587, %v2589
    %v2591 = vrot.slane %v2582, %v2590
    %v2593 = vunpack.c.l.s4 1966171168
    %v2594 = vunpack.c.0.s8 %v2593
    %v2595 = vlaneseq
    %v2596 = vshrl.u32 %v2595, 7
    %v2597 = vsub.s32 %v2594, %v2596
    %v2598 = vrot.slane %v2583, %v2597
    %v2600 = vunpack.c.l.s4 1966171168
    %v2601 = vunpack.c.0.s8 %v2600
    %v2602 = vlaneseq
    %v2603 = vshrl.u32 %v2602, 7
    %v2604 = vsub.s32 %v2601, %v2603
    %v2605 = vrot.slane %v1984, %v2604
    %v2607 = vunpack.c.l.s4 1966171168
    %v2608 = vunpack.c.0.s8 %v2607
    %v2609 = vlaneseq
    %v2610 = vshrl.u32 %v2609, 7
    %v2611 = vsub.s32 %v2608, %v2610
    %v2612 = vrot.slane %v2584, %v2611
    %v2613 = vcombine.low %v2591, %v2605
    %v2614 = vcombine.high %v2591, %v2605
    %v2615 = vcombine.low %v2598, %v2612
    %v2616 = vcombine.high %v2598, %v2612
    %v2618 = vunpack.c.l.s4 1966171168
    %v2619 = vunpack.c.0.s8 %v2618
    %v2620 = vlaneseq
    %v2621 = vshrl.u32 %v2620, 7
    %v2622 = vsub.s32 %v2619, %v2621
    %v2623 = vrot.slane %v2613, %v2622
    %v2625 = vunpack.c.l.s4 1966171168
    %v2626 = vunpack.c.0.s8 %v2625
    %v2627 = vlaneseq
    %v2628 = vshrl.u32 %v2627, 7
    %v2629 = vsub.s32 %v2626, %v2628
    %v2630 = vrot.slane %v2615, %v2629
    %v2632 = vunpack.c.l.s4 1966171168
    %v2633 = vunpack.c.0.s8 %v2632
    %v2634 = vlaneseq
    %v2635 = vshrl.u32 %v2634, 7
    %v2636 = vsub.s32 %v2633, %v2635
    %v2637 = vrot.slane %v2614, %v2636
    %v2639 = vunpack.c.l.s4 1966171168
    %v2640 = vunpack.c.0.s8 %v2639
    %v2641 = vlaneseq
    %v2642 = vshrl.u32 %v2641, 7
    %v2643 = vsub.s32 %v2640, %v2642
    %v2644 = vrot.slane %v2616, %v2643
    %v2645 = vcombine.high %v2623, %v2623
    %v2646 = vcombine.high %v2630, %v2630
    %v2647 = vcombine.high %v2637, %v2637
    %v2648 = vcombine.low %v1985, %v1986
    %v2649 = vcombine.high %v1985, %v1986
    %v2650 = vcombine.high %v1987, %v1987
    %v2652 = vunpack.c.l.s4 1966171168
    %v2653 = vunpack.c.0.s8 %v2652
    %v2654 = vlaneseq
    %v2655 = vshrl.u32 %v2654, 7
    %v2656 = vsub.s32 %v2653, %v2655
    %v2657 = vrot.slane %v2648, %v2656
    %v2659 = vunpack.c.l.s4 1966171168
    %v2660 = vunpack.c.0.s8 %v2659
    %v2661 = vlaneseq
    %v2662 = vshrl.u32 %v2661, 7
    %v2663 = vsub.s32 %v2660, %v2662
    %v2664 = vrot.slane %v2649, %v2663
    %v2666 = vunpack.c.l.s4 1966171168
    %v2667 = vunpack.c.0.s8 %v2666
    %v2668 = vlaneseq
    %v2669 = vshrl.u32 %v2668, 7
    %v2670 = vsub.s32 %v2667, %v2669
    %v2671 = vrot.slane %v1987, %v2670
    %v2673 = vunpack.c.l.s4 1966171168
    %v2674 = vunpack.c.0.s8 %v2673
    %v2675 = vlaneseq
    %v2676 = vshrl.u32 %v2675, 7
    %v2677 = vsub.s32 %v2674, %v2676
    %v2678 = vrot.slane %v2650, %v2677
    %v2679 = vcombine.low %v2657, %v2671
    %v2680 = vcombine.high %v2657, %v2671
    %v2681 = vcombine.low %v2664, %v2678
    %v2682 = vcombine.high %v2664, %v2678
    %v2684 = vunpack.c.l.s4 1966171168
    %v2685 = vunpack.c.0.s8 %v2684
    %v2686 = vlaneseq
    %v2687 = vshrl.u32 %v2686, 7
    %v2688 = vsub.s32 %v2685, %v2687
    %v2689 = vrot.slane %v2679, %v2688
    %v2691 = vunpack.c.l.s4 1966171168
    %v2692 = vunpack.c.0.s8 %v2691
    %v2693 = vlaneseq
    %v2694 = vshrl.u32 %v2693, 7
    %v2695 = vsub.s32 %v2692, %v2694
    %v2696 = vrot.slane %v2681, %v2695
    %v2698 = vunpack.c.l.s4 1966171168
    %v2699 = vunpack.c.0.s8 %v2698
    %v2700 = vlaneseq
    %v2701 = vshrl.u32 %v2700, 7
    %v2702 = vsub.s32 %v2699, %v2701
    %v2703 = vrot.slane %v2680, %v2702
    %v2705 = vunpack.c.l.s4 1966171168
    %v2706 = vunpack.c.0.s8 %v2705
    %v2707 = vlaneseq
    %v2708 = vshrl.u32 %v2707, 7
    %v2709 = vsub.s32 %v2706, %v2708
    %v2710 = vrot.slane %v2682, %v2709
    %v2711 = vcombine.high %v2689, %v2689
    %v2712 = vcombine.high %v2696, %v2696
    %v2713 = vcombine.high %v2703, %v2703
    %v2714 = vcombine.low %v1988, %v1989
    %v2715 = vcombine.high %v1988, %v1989
    %v2716 = vcombine.high %v1990, %v1990
    %v2718 = vunpack.c.l.s4 1966171168
    %v2719 = vunpack.c.0.s8 %v2718
    %v2720 = vlaneseq
    %v2721 = vshrl.u32 %v2720, 7
    %v2722 = vsub.s32 %v2719, %v2721
    %v2723 = vrot.slane %v2714, %v2722
    %v2725 = vunpack.c.l.s4 1966171168
    %v2726 = vunpack.c.0.s8 %v2725
    %v2727 = vlaneseq
    %v2728 = vshrl.u32 %v2727, 7
    %v2729 = vsub.s32 %v2726, %v2728
    %v2730 = vrot.slane %v2715, %v2729
    %v2732 = vunpack.c.l.s4 1966171168
    %v2733 = vunpack.c.0.s8 %v2732
    %v2734 = vlaneseq
    %v2735 = vshrl.u32 %v2734, 7
    %v2736 = vsub.s32 %v2733, %v2735
    %v2737 = vrot.slane %v1990, %v2736
    %v2739 = vunpack.c.l.s4 1966171168
    %v2740 = vunpack.c.0.s8 %v2739
    %v2741 = vlaneseq
    %v2742 = vshrl.u32 %v2741, 7
    %v2743 = vsub.s32 %v2740, %v2742
    %v2744 = vrot.slane %v2716, %v2743
    %v2745 = vcombine.low %v2723, %v2737
    %v2746 = vcombine.high %v2723, %v2737
    %v2747 = vcombine.low %v2730, %v2744
    %v2748 = vcombine.high %v2730, %v2744
    %v2750 = vunpack.c.l.s4 1966171168
    %v2751 = vunpack.c.0.s8 %v2750
    %v2752 = vlaneseq
    %v2753 = vshrl.u32 %v2752, 7
    %v2754 = vsub.s32 %v2751, %v2753
    %v2755 = vrot.slane %v2745, %v2754
    %v2757 = vunpack.c.l.s4 1966171168
    %v2758 = vunpack.c.0.s8 %v2757
    %v2759 = vlaneseq
    %v2760 = vshrl.u32 %v2759, 7
    %v2761 = vsub.s32 %v2758, %v2760
    %v2762 = vrot.slane %v2747, %v2761
    %v2764 = vunpack.c.l.s4 1966171168
    %v2765 = vunpack.c.0.s8 %v2764
    %v2766 = vlaneseq
    %v2767 = vshrl.u32 %v2766, 7
    %v2768 = vsub.s32 %v2765, %v2767
    %v2769 = vrot.slane %v2746, %v2768
    %v2771 = vunpack.c.l.s4 1966171168
    %v2772 = vunpack.c.0.s8 %v2771
    %v2773 = vlaneseq
    %v2774 = vshrl.u32 %v2773, 7
    %v2775 = vsub.s32 %v2772, %v2774
    %v2776 = vrot.slane %v2748, %v2775
    %v2777 = vcombine.high %v2755, %v2755
    %v2778 = vcombine.high %v2762, %v2762
    %v2779 = vcombine.high %v2769, %v2769
    %v2780 = vcombine.low %v1991, %v1992
    %v2781 = vcombine.high %v1991, %v1992
    %v2782 = vcombine.high %v1993, %v1993
    %v2784 = vunpack.c.l.s4 1966171168
    %v2785 = vunpack.c.0.s8 %v2784
    %v2786 = vlaneseq
    %v2787 = vshrl.u32 %v2786, 7
    %v2788 = vsub.s32 %v2785, %v2787
    %v2789 = vrot.slane %v2780, %v2788
    %v2791 = vunpack.c.l.s4 1966171168
    %v2792 = vunpack.c.0.s8 %v2791
    %v2793 = vlaneseq
    %v2794 = vshrl.u32 %v2793, 7
    %v2795 = vsub.s32 %v2792, %v2794
    %v2796 = vrot.slane %v2781, %v2795
    %v2798 = vunpack.c.l.s4 1966171168
    %v2799 = vunpack.c.0.s8 %v2798
    %v2800 = vlaneseq
    %v2801 = vshrl.u32 %v2800, 7
    %v2802 = vsub.s32 %v2799, %v2801
    %v2803 = vrot.slane %v1993, %v2802
    %v2805 = vunpack.c.l.s4 1966171168
    %v2806 = vunpack.c.0.s8 %v2805
    %v2807 = vlaneseq
    %v2808 = vshrl.u32 %v2807, 7
    %v2809 = vsub.s32 %v2806, %v2808
    %v2810 = vrot.slane %v2782, %v2809
    %v2811 = vcombine.low %v2789, %v2803
    %v2812 = vcombine.high %v2789, %v2803
    %v2813 = vcombine.low %v2796, %v2810
    %v2814 = vcombine.high %v2796, %v2810
    %v2816 = vunpack.c.l.s4 1966171168
    %v2817 = vunpack.c.0.s8 %v2816
    %v2818 = vlaneseq
    %v2819 = vshrl.u32 %v2818, 7
    %v2820 = vsub.s32 %v2817, %v2819
    %v2821 = vrot.slane %v2811, %v2820
    %v2823 = vunpack.c.l.s4 1966171168
    %v2824 = vunpack.c.0.s8 %v2823
    %v2825 = vlaneseq
    %v2826 = vshrl.u32 %v2825, 7
    %v2827 = vsub.s32 %v2824, %v2826
    %v2828 = vrot.slane %v2813, %v2827
    %v2830 = vunpack.c.l.s4 1966171168
    %v2831 = vunpack.c.0.s8 %v2830
    %v2832 = vlaneseq
    %v2833 = vshrl.u32 %v2832, 7
    %v2834 = vsub.s32 %v2831, %v2833
    %v2835 = vrot.slane %v2812, %v2834
    %v2837 = vunpack.c.l.s4 1966171168
    %v2838 = vunpack.c.0.s8 %v2837
    %v2839 = vlaneseq
    %v2840 = vshrl.u32 %v2839, 7
    %v2841 = vsub.s32 %v2838, %v2840
    %v2842 = vrot.slane %v2814, %v2841
    %v2843 = vcombine.high %v2821, %v2821
    %v2844 = vcombine.high %v2828, %v2828
    %v2845 = vcombine.high %v2835, %v2835
    %v2846 = vcombine.low %v1994, %v1995
    %v2847 = vcombine.high %v1994, %v1995
    %v2848 = vcombine.high %v1996, %v1996
    %v2850 = vunpack.c.l.s4 1966171168
    %v2851 = vunpack.c.0.s8 %v2850
    %v2852 = vlaneseq
    %v2853 = vshrl.u32 %v2852, 7
    %v2854 = vsub.s32 %v2851, %v2853
    %v2855 = vrot.slane %v2846, %v2854
    %v2857 = vunpack.c.l.s4 1966171168
    %v2858 = vunpack.c.0.s8 %v2857
    %v2859 = vlaneseq
    %v2860 = vshrl.u32 %v2859, 7
    %v2861 = vsub.s32 %v2858, %v2860
    %v2862 = vrot.slane %v2847, %v2861
    %v2864 = vunpack.c.l.s4 1966171168
    %v2865 = vunpack.c.0.s8 %v2864
    %v2866 = vlaneseq
    %v2867 = vshrl.u32 %v2866, 7
    %v2868 = vsub.s32 %v2865, %v2867
    %v2869 = vrot.slane %v1996, %v2868
    %v2871 = vunpack.c.l.s4 1966171168
    %v2872 = vunpack.c.0.s8 %v2871
    %v2873 = vlaneseq
    %v2874 = vshrl.u32 %v2873, 7
    %v2875 = vsub.s32 %v2872, %v2874
    %v2876 = vrot.slane %v2848, %v2875
    %v2877 = vcombine.low %v2855, %v2869
    %v2878 = vcombine.high %v2855, %v2869
    %v2879 = vcombine.low %v2862, %v2876
    %v2880 = vcombine.high %v2862, %v2876
    %v2882 = vunpack.c.l.s4 1966171168
    %v2883 = vunpack.c.0.s8 %v2882
    %v2884 = vlaneseq
    %v2885 = vshrl.u32 %v2884, 7
    %v2886 = vsub.s32 %v2883, %v2885
    %v2887 = vrot.slane %v2877, %v2886
    %v2889 = vunpack.c.l.s4 1966171168
    %v2890 = vunpack.c.0.s8 %v2889
    %v2891 = vlaneseq
    %v2892 = vshrl.u32 %v2891, 7
    %v2893 = vsub.s32 %v2890, %v2892
    %v2894 = vrot.slane %v2879, %v2893
    %v2896 = vunpack.c.l.s4 1966171168
    %v2897 = vunpack.c.0.s8 %v2896
    %v2898 = vlaneseq
    %v2899 = vshrl.u32 %v2898, 7
    %v2900 = vsub.s32 %v2897, %v2899
    %v2901 = vrot.slane %v2878, %v2900
    %v2903 = vunpack.c.l.s4 1966171168
    %v2904 = vunpack.c.0.s8 %v2903
    %v2905 = vlaneseq
    %v2906 = vshrl.u32 %v2905, 7
    %v2907 = vsub.s32 %v2904, %v2906
    %v2908 = vrot.slane %v2880, %v2907
    %v2909 = vcombine.high %v2887, %v2887
    %v2910 = vcombine.high %v2894, %v2894
    %v2911 = vcombine.high %v2901, %v2901
    %v2912 = vcombine.low %v1997, %v1998
    %v2913 = vcombine.high %v1997, %v1998
    %v2914 = vcombine.high %v1999, %v1999
    %v2916 = vunpack.c.l.s4 1966171168
    %v2917 = vunpack.c.0.s8 %v2916
    %v2918 = vlaneseq
    %v2919 = vshrl.u32 %v2918, 7
    %v2920 = vsub.s32 %v2917, %v2919
    %v2921 = vrot.slane %v2912, %v2920
    %v2923 = vunpack.c.l.s4 1966171168
    %v2924 = vunpack.c.0.s8 %v2923
    %v2925 = vlaneseq
    %v2926 = vshrl.u32 %v2925, 7
    %v2927 = vsub.s32 %v2924, %v2926
    %v2928 = vrot.slane %v2913, %v2927
    %v2930 = vunpack.c.l.s4 1966171168
    %v2931 = vunpack.c.0.s8 %v2930
    %v2932 = vlaneseq
    %v2933 = vshrl.u32 %v2932, 7
    %v2934 = vsub.s32 %v2931, %v2933
    %v2935 = vrot.slane %v1999, %v2934
    %v2937 = vunpack.c.l.s4 1966171168
    %v2938 = vunpack.c.0.s8 %v2937
    %v2939 = vlaneseq
    %v2940 = vshrl.u32 %v2939, 7
    %v2941 = vsub.s32 %v2938, %v2940
    %v2942 = vrot.slane %v2914, %v2941
    %v2943 = vcombine.low %v2921, %v2935
    %v2944 = vcombine.high %v2921, %v2935
    %v2945 = vcombine.low %v2928, %v2942
    %v2946 = vcombine.high %v2928, %v2942
    %v2948 = vunpack.c.l.s4 1966171168
    %v2949 = vunpack.c.0.s8 %v2948
    %v2950 = vlaneseq
    %v2951 = vshrl.u32 %v2950, 7
    %v2952 = vsub.s32 %v2949, %v2951
    %v2953 = vrot.slane %v2943, %v2952
    %v2955 = vunpack.c.l.s4 1966171168
    %v2956 = vunpack.c.0.s8 %v2955
    %v2957 = vlaneseq
    %v2958 = vshrl.u32 %v2957, 7
    %v2959 = vsub.s32 %v2956, %v2958
    %v2960 = vrot.slane %v2945, %v2959
    %v2962 = vunpack.c.l.s4 1966171168
    %v2963 = vunpack.c.0.s8 %v2962
    %v2964 = vlaneseq
    %v2965 = vshrl.u32 %v2964, 7
    %v2966 = vsub.s32 %v2963, %v2965
    %v2967 = vrot.slane %v2944, %v2966
    %v2969 = vunpack.c.l.s4 1966171168
    %v2970 = vunpack.c.0.s8 %v2969
    %v2971 = vlaneseq
    %v2972 = vshrl.u32 %v2971, 7
    %v2973 = vsub.s32 %v2970, %v2972
    %v2974 = vrot.slane %v2946, %v2973
    %v2975 = vcombine.high %v2953, %v2953
    %v2976 = vcombine.high %v2960, %v2960
    %v2977 = vcombine.high %v2967, %v2967
    %v2978 = vcombine.low %v2000, %v2001
    %v2979 = vcombine.high %v2000, %v2001
    %v2980 = vcombine.high %v2002, %v2002
    %v2982 = vunpack.c.l.s4 1966171168
    %v2983 = vunpack.c.0.s8 %v2982
    %v2984 = vlaneseq
    %v2985 = vshrl.u32 %v2984, 7
    %v2986 = vsub.s32 %v2983, %v2985
    %v2987 = vrot.slane %v2978, %v2986
    %v2989 = vunpack.c.l.s4 1966171168
    %v2990 = vunpack.c.0.s8 %v2989
    %v2991 = vlaneseq
    %v2992 = vshrl.u32 %v2991, 7
    %v2993 = vsub.s32 %v2990, %v2992
    %v2994 = vrot.slane %v2979, %v2993
    %v2996 = vunpack.c.l.s4 1966171168
    %v2997 = vunpack.c.0.s8 %v2996
    %v2998 = vlaneseq
    %v2999 = vshrl.u32 %v2998, 7
    %v3000 = vsub.s32 %v2997, %v2999
    %v3001 = vrot.slane %v2002, %v3000
    %v3003 = vunpack.c.l.s4 1966171168
    %v3004 = vunpack.c.0.s8 %v3003
    %v3005 = vlaneseq
    %v3006 = vshrl.u32 %v3005, 7
    %v3007 = vsub.s32 %v3004, %v3006
    %v3008 = vrot.slane %v2980, %v3007
    %v3009 = vcombine.low %v2987, %v3001
    %v3010 = vcombine.high %v2987, %v3001
    %v3011 = vcombine.low %v2994, %v3008
    %v3012 = vcombine.high %v2994, %v3008
    %v3014 = vunpack.c.l.s4 1966171168
    %v3015 = vunpack.c.0.s8 %v3014
    %v3016 = vlaneseq
    %v3017 = vshrl.u32 %v3016, 7
    %v3018 = vsub.s32 %v3015, %v3017
    %v3019 = vrot.slane %v3009, %v3018
    %v3021 = vunpack.c.l.s4 1966171168
    %v3022 = vunpack.c.0.s8 %v3021
    %v3023 = vlaneseq
    %v3024 = vshrl.u32 %v3023, 7
    %v3025 = vsub.s32 %v3022, %v3024
    %v3026 = vrot.slane %v3011, %v3025
    %v3028 = vunpack.c.l.s4 1966171168
    %v3029 = vunpack.c.0.s8 %v3028
    %v3030 = vlaneseq
    %v3031 = vshrl.u32 %v3030, 7
    %v3032 = vsub.s32 %v3029, %v3031
    %v3033 = vrot.slane %v3010, %v3032
    %v3035 = vunpack.c.l.s4 1966171168
    %v3036 = vunpack.c.0.s8 %v3035
    %v3037 = vlaneseq
    %v3038 = vshrl.u32 %v3037, 7
    %v3039 = vsub.s32 %v3036, %v3038
    %v3040 = vrot.slane %v3012, %v3039
    %v3041 = vcombine.high %v3019, %v3019
    %v3042 = vcombine.high %v3026, %v3026
    %v3043 = vcombine.high %v3033, %v3033
    %v3044 = vcombine.low %v2003, %v2004
    %v3045 = vcombine.high %v2003, %v2004
    %v3046 = vcombine.high %v2005, %v2005
    %v3048 = vunpack.c.l.s4 1966171168
    %v3049 = vunpack.c.0.s8 %v3048
    %v3050 = vlaneseq
    %v3051 = vshrl.u32 %v3050, 7
    %v3052 = vsub.s32 %v3049, %v3051
    %v3053 = vrot.slane %v3044, %v3052
    %v3055 = vunpack.c.l.s4 1966171168
    %v3056 = vunpack.c.0.s8 %v3055
    %v3057 = vlaneseq
    %v3058 = vshrl.u32 %v3057, 7
    %v3059 = vsub.s32 %v3056, %v3058
    %v3060 = vrot.slane %v3045, %v3059
    %v3062 = vunpack.c.l.s4 1966171168
    %v3063 = vunpack.c.0.s8 %v3062
    %v3064 = vlaneseq
    %v3065 = vshrl.u32 %v3064, 7
    %v3066 = vsub.s32 %v3063, %v3065
    %v3067 = vrot.slane %v2005, %v3066
    %v3069 = vunpack.c.l.s4 1966171168
    %v3070 = vunpack.c.0.s8 %v3069
    %v3071 = vlaneseq
    %v3072 = vshrl.u32 %v3071, 7
    %v3073 = vsub.s32 %v3070, %v3072
    %v3074 = vrot.slane %v3046, %v3073
    %v3075 = vcombine.low %v3053, %v3067
    %v3076 = vcombine.high %v3053, %v3067
    %v3077 = vcombine.low %v3060, %v3074
    %v3078 = vcombine.high %v3060, %v3074
    %v3080 = vunpack.c.l.s4 1966171168
    %v3081 = vunpack.c.0.s8 %v3080
    %v3082 = vlaneseq
    %v3083 = vshrl.u32 %v3082, 7
    %v3084 = vsub.s32 %v3081, %v3083
    %v3085 = vrot.slane %v3075, %v3084
    %v3087 = vunpack.c.l.s4 1966171168
    %v3088 = vunpack.c.0.s8 %v3087
    %v3089 = vlaneseq
    %v3090 = vshrl.u32 %v3089, 7
    %v3091 = vsub.s32 %v3088, %v3090
    %v3092 = vrot.slane %v3077, %v3091
    %v3094 = vunpack.c.l.s4 1966171168
    %v3095 = vunpack.c.0.s8 %v3094
    %v3096 = vlaneseq
    %v3097 = vshrl.u32 %v3096, 7
    %v3098 = vsub.s32 %v3095, %v3097
    %v3099 = vrot.slane %v3076, %v3098
    %v3101 = vunpack.c.l.s4 1966171168
    %v3102 = vunpack.c.0.s8 %v3101
    %v3103 = vlaneseq
    %v3104 = vshrl.u32 %v3103, 7
    %v3105 = vsub.s32 %v3102, %v3104
    %v3106 = vrot.slane %v3078, %v3105
    %v3107 = vcombine.high %v3085, %v3085
    %v3108 = vcombine.high %v3092, %v3092
    %v3109 = vcombine.high %v3099, %v3099
    %v3110 = vld [vmem:[#allocation5] sm:$0xf]
    %v3111 = vld [vmem:[#allocation5 + $0x4] sm:$0xf]
    %v3112 = vld [vmem:[#allocation5 + $0x8] sm:$0xf]
    %v3113 = vld [vmem:[#allocation5 + $0xc] sm:$0xf]
    %v3114 = vld [vmem:[#allocation5 + $0x10] sm:$0xf]
    %v3115 = vld [vmem:[#allocation5 + $0x14] sm:$0xf]
    %v3116 = vld [vmem:[#allocation5 + $0x18] sm:$0xf]
    %v3117 = vld [vmem:[#allocation5 + $0x1c] sm:$0xf]
    %v3118 = vld [vmem:[#allocation5 + $0x20] sm:$0xf]
    %v3119 = vld [vmem:[#allocation5 + $0x24] sm:$0xf]
    %v3120 = vld [vmem:[#allocation5 + $0x28] sm:$0xf]
    %v3121 = vld [vmem:[#allocation5 + $0x2c] sm:$0xf]
    %v3122 = vld [vmem:[#allocation5 + $0x30] sm:$0xf]
    %v3123 = vld [vmem:[#allocation5 + $0x34] sm:$0xf]
    %v3124 = vld [vmem:[#allocation5 + $0x38] sm:$0xf]
    %v3125 = vld [vmem:[#allocation5 + $0x3c] sm:$0xf]
    %v3126 = vld [vmem:[#allocation5 + $0x40] sm:$0xf]
    %v3127 = vld [vmem:[#allocation5 + $0x44] sm:$0xf]
    %v3128 = vld [vmem:[#allocation5 + $0x48] sm:$0xf]
    %v3129 = vld [vmem:[#allocation5 + $0x4c] sm:$0xf]
    %v3130 = vld [vmem:[#allocation5 + $0x50] sm:$0xf]
    %v3131 = vld [vmem:[#allocation5 + $0x54] sm:$0xf]
    %v3132 = vld [vmem:[#allocation5 + $0x58] sm:$0xf]
    %v3133 = vld [vmem:[#allocation5 + $0x5c] sm:$0xf]
    %v3134 = vld [vmem:[#allocation5 + $0x60] sm:$0xf]
    %v3135 = vld [vmem:[#allocation5 + $0x64] sm:$0xf]
    %v3136 = vld [vmem:[#allocation5 + $0x68] sm:$0xf]
    %v3137 = vld [vmem:[#allocation5 + $0x6c] sm:$0xf]
    %v3138 = vld [vmem:[#allocation5 + $0x70] sm:$0xf]
    %v3139 = vld [vmem:[#allocation5 + $0x74] sm:$0xf]
    %v3140 = vld [vmem:[#allocation5 + $0x78] sm:$0xf]
    %v3141 = vld [vmem:[#allocation5 + $0x7c] sm:$0xf]
    %v3142 = vld [vmem:[#allocation5 + $0x80] sm:$0xf]
    %v3143 = vld [vmem:[#allocation5 + $0x84] sm:$0xf]
    %v3144 = vld [vmem:[#allocation5 + $0x88] sm:$0xf]
    %v3145 = vld [vmem:[#allocation5 + $0x8c] sm:$0xf]
    %v3146 = vld [vmem:[#allocation5 + $0x90] sm:$0xf]
    %v3147 = vld [vmem:[#allocation5 + $0x94] sm:$0xf]
    %v3148 = vld [vmem:[#allocation5 + $0x98] sm:$0xf]
    %v3149 = vld [vmem:[#allocation5 + $0x9c] sm:$0xf]
    %v3150 = vld [vmem:[%s2] sm:$0x1]
    %v3152 = vlaneseq
    %v3153 = vshrl.u32 %v3152, 7
    %v3154 = vsub.s32 0, %v3153
    %v3155 = vrot.slane %v3150, %v3154
    %v3157 = vcombine.low %v2095, %v2109
    %v3158 = vcombine.low %v2117, %v2119
    %v3159 = vcombine.low %v2102, %v2116
    %v3160 = vcombine.low %v2118, %v2161
    %v3162 = vunpack.c.l.s4 1966171168
    %v3163 = vunpack.c.0.s8 %v3162
    %v3164 = vlaneseq
    %v3165 = vshrl.u32 %v3164, 7
    %v3166 = vsub.s32 %v3163, %v3165
    %v3167 = vrot.slane %v3157, %v3166
    %v3169 = vunpack.c.l.s4 1966171168
    %v3170 = vunpack.c.0.s8 %v3169
    %v3171 = vlaneseq
    %v3172 = vshrl.u32 %v3171, 7
    %v3173 = vsub.s32 %v3170, %v3172
    %v3174 = vrot.slane %v3158, %v3173
    %v3176 = vunpack.c.l.s4 1966171168
    %v3177 = vunpack.c.0.s8 %v3176
    %v3178 = vlaneseq
    %v3179 = vshrl.u32 %v3178, 7
    %v3180 = vsub.s32 %v3177, %v3179
    %v3181 = vrot.slane %v3159, %v3180
    %v3183 = vunpack.c.l.s4 1966171168
    %v3184 = vunpack.c.0.s8 %v3183
    %v3185 = vlaneseq
    %v3186 = vshrl.u32 %v3185, 7
    %v3187 = vsub.s32 %v3184, %v3186
    %v3188 = vrot.slane %v3160, %v3187
    %v3189 = vcombine.low %v3167, %v3174
    %v3190 = vcombine.high %v3167, %v3174
    %v3191 = vcombine.low %v3181, %v3188
    %v3192 = vcombine.high %v3181, %v3188
    %v3194 = vunpack.c.l.s4 1966171168
    %v3195 = vunpack.c.0.s8 %v3194
    %v3196 = vlaneseq
    %v3197 = vshrl.u32 %v3196, 7
    %v3198 = vsub.s32 %v3195, %v3197
    %v3199 = vrot.slane %v3189, %v3198
    %v3201 = vunpack.c.l.s4 1966171168
    %v3202 = vunpack.c.0.s8 %v3201
    %v3203 = vlaneseq
    %v3204 = vshrl.u32 %v3203, 7
    %v3205 = vsub.s32 %v3202, %v3204
    %v3206 = vrot.slane %v3190, %v3205
    %v3208 = vunpack.c.l.s4 1966171168
    %v3209 = vunpack.c.0.s8 %v3208
    %v3210 = vlaneseq
    %v3211 = vshrl.u32 %v3210, 7
    %v3212 = vsub.s32 %v3209, %v3211
    %v3213 = vrot.slane %v3191, %v3212
    %v3215 = vunpack.c.l.s4 1966171168
    %v3216 = vunpack.c.0.s8 %v3215
    %v3217 = vlaneseq
    %v3218 = vshrl.u32 %v3217, 7
    %v3219 = vsub.s32 %v3216, %v3218
    %v3220 = vrot.slane %v3192, %v3219
    %v3221 = vcombine.low %v3199, %v3213
    %v3222 = vcombine.high %v3199, %v3213
    %v3223 = vcombine.low %v3206, %v3220
    %v3224 = vcombine.low %v2175, %v2183
    %v3225 = vcombine.low %v2185, %v2168
    %v3226 = vcombine.low %v2182, %v2184
    %v3227 = vcombine.low %v2227, %v2241
    %v3229 = vunpack.c.l.s4 1966171168
    %v3230 = vunpack.c.0.s8 %v3229
    %v3231 = vlaneseq
    %v3232 = vshrl.u32 %v3231, 7
    %v3233 = vsub.s32 %v3230, %v3232
    %v3234 = vrot.slane %v3224, %v3233
    %v3236 = vunpack.c.l.s4 1966171168
    %v3237 = vunpack.c.0.s8 %v3236
    %v3238 = vlaneseq
    %v3239 = vshrl.u32 %v3238, 7
    %v3240 = vsub.s32 %v3237, %v3239
    %v3241 = vrot.slane %v3225, %v3240
    %v3243 = vunpack.c.l.s4 1966171168
    %v3244 = vunpack.c.0.s8 %v3243
    %v3245 = vlaneseq
    %v3246 = vshrl.u32 %v3245, 7
    %v3247 = vsub.s32 %v3244, %v3246
    %v3248 = vrot.slane %v3226, %v3247
    %v3250 = vunpack.c.l.s4 1966171168
    %v3251 = vunpack.c.0.s8 %v3250
    %v3252 = vlaneseq
    %v3253 = vshrl.u32 %v3252, 7
    %v3254 = vsub.s32 %v3251, %v3253
    %v3255 = vrot.slane %v3227, %v3254
    %v3256 = vcombine.low %v3234, %v3241
    %v3257 = vcombine.high %v3234, %v3241
    %v3258 = vcombine.low %v3248, %v3255
    %v3259 = vcombine.high %v3248, %v3255
    %v3261 = vunpack.c.l.s4 1966171168
    %v3262 = vunpack.c.0.s8 %v3261
    %v3263 = vlaneseq
    %v3264 = vshrl.u32 %v3263, 7
    %v3265 = vsub.s32 %v3262, %v3264
    %v3266 = vrot.slane %v3256, %v3265
    %v3268 = vunpack.c.l.s4 1966171168
    %v3269 = vunpack.c.0.s8 %v3268
    %v3270 = vlaneseq
    %v3271 = vshrl.u32 %v3270, 7
    %v3272 = vsub.s32 %v3269, %v3271
    %v3273 = vrot.slane %v3257, %v3272
    %v3275 = vunpack.c.l.s4 1966171168
    %v3276 = vunpack.c.0.s8 %v3275
    %v3277 = vlaneseq
    %v3278 = vshrl.u32 %v3277, 7
    %v3279 = vsub.s32 %v3276, %v3278
    %v3280 = vrot.slane %v3258, %v3279
    %v3282 = vunpack.c.l.s4 1966171168
    %v3283 = vunpack.c.0.s8 %v3282
    %v3284 = vlaneseq
    %v3285 = vshrl.u32 %v3284, 7
    %v3286 = vsub.s32 %v3283, %v3285
    %v3287 = vrot.slane %v3259, %v3286
    %v3288 = vcombine.low %v3266, %v3280
    %v3289 = vcombine.high %v3266, %v3280
    %v3290 = vcombine.low %v3273, %v3287
    %v3291 = vcombine.low %v2249, %v2251
    %v3292 = vcombine.low %v2234, %v2248
    %v3293 = vcombine.low %v2250, %v2293
    %v3294 = vcombine.low %v2307, %v2315
    %v3296 = vunpack.c.l.s4 1966171168
    %v3297 = vunpack.c.0.s8 %v3296
    %v3298 = vlaneseq
    %v3299 = vshrl.u32 %v3298, 7
    %v3300 = vsub.s32 %v3297, %v3299
    %v3301 = vrot.slane %v3291, %v3300
    %v3303 = vunpack.c.l.s4 1966171168
    %v3304 = vunpack.c.0.s8 %v3303
    %v3305 = vlaneseq
    %v3306 = vshrl.u32 %v3305, 7
    %v3307 = vsub.s32 %v3304, %v3306
    %v3308 = vrot.slane %v3292, %v3307
    %v3310 = vunpack.c.l.s4 1966171168
    %v3311 = vunpack.c.0.s8 %v3310
    %v3312 = vlaneseq
    %v3313 = vshrl.u32 %v3312, 7
    %v3314 = vsub.s32 %v3311, %v3313
    %v3315 = vrot.slane %v3293, %v3314
    %v3317 = vunpack.c.l.s4 1966171168
    %v3318 = vunpack.c.0.s8 %v3317
    %v3319 = vlaneseq
    %v3320 = vshrl.u32 %v3319, 7
    %v3321 = vsub.s32 %v3318, %v3320
    %v3322 = vrot.slane %v3294, %v3321
    %v3323 = vcombine.low %v3301, %v3308
    %v3324 = vcombine.high %v3301, %v3308
    %v3325 = vcombine.low %v3315, %v3322
    %v3326 = vcombine.high %v3315, %v3322
    %v3328 = vunpack.c.l.s4 1966171168
    %v3329 = vunpack.c.0.s8 %v3328
    %v3330 = vlaneseq
    %v3331 = vshrl.u32 %v3330, 7
    %v3332 = vsub.s32 %v3329, %v3331
    %v3333 = vrot.slane %v3323, %v3332
    %v3335 = vunpack.c.l.s4 1966171168
    %v3336 = vunpack.c.0.s8 %v3335
    %v3337 = vlaneseq
    %v3338 = vshrl.u32 %v3337, 7
    %v3339 = vsub.s32 %v3336, %v3338
    %v3340 = vrot.slane %v3324, %v3339
    %v3342 = vunpack.c.l.s4 1966171168
    %v3343 = vunpack.c.0.s8 %v3342
    %v3344 = vlaneseq
    %v3345 = vshrl.u32 %v3344, 7
    %v3346 = vsub.s32 %v3343, %v3345
    %v3347 = vrot.slane %v3325, %v3346
    %v3349 = vunpack.c.l.s4 1966171168
    %v3350 = vunpack.c.0.s8 %v3349
    %v3351 = vlaneseq
    %v3352 = vshrl.u32 %v3351, 7
    %v3353 = vsub.s32 %v3350, %v3352
    %v3354 = vrot.slane %v3326, %v3353
    %v3355 = vcombine.low %v3333, %v3347
    %v3356 = vcombine.high %v3333, %v3347
    %v3357 = vcombine.low %v3340, %v3354
    %v3358 = vcombine.low %v2317, %v2300
    %v3359 = vcombine.low %v2314, %v2316
    %v3360 = vcombine.low %v2359, %v2373
    %v3361 = vcombine.low %v2381, %v2383
    %v3363 = vunpack.c.l.s4 1966171168
    %v3364 = vunpack.c.0.s8 %v3363
    %v3365 = vlaneseq
    %v3366 = vshrl.u32 %v3365, 7
    %v3367 = vsub.s32 %v3364, %v3366
    %v3368 = vrot.slane %v3358, %v3367
    %v3370 = vunpack.c.l.s4 1966171168
    %v3371 = vunpack.c.0.s8 %v3370
    %v3372 = vlaneseq
    %v3373 = vshrl.u32 %v3372, 7
    %v3374 = vsub.s32 %v3371, %v3373
    %v3375 = vrot.slane %v3359, %v3374
    %v3377 = vunpack.c.l.s4 1966171168
    %v3378 = vunpack.c.0.s8 %v3377
    %v3379 = vlaneseq
    %v3380 = vshrl.u32 %v3379, 7
    %v3381 = vsub.s32 %v3378, %v3380
    %v3382 = vrot.slane %v3360, %v3381
    %v3384 = vunpack.c.l.s4 1966171168
    %v3385 = vunpack.c.0.s8 %v3384
    %v3386 = vlaneseq
    %v3387 = vshrl.u32 %v3386, 7
    %v3388 = vsub.s32 %v3385, %v3387
    %v3389 = vrot.slane %v3361, %v3388
    %v3390 = vcombine.low %v3368, %v3375
    %v3391 = vcombine.high %v3368, %v3375
    %v3392 = vcombine.low %v3382, %v3389
    %v3393 = vcombine.high %v3382, %v3389
    %v3395 = vunpack.c.l.s4 1966171168
    %v3396 = vunpack.c.0.s8 %v3395
    %v3397 = vlaneseq
    %v3398 = vshrl.u32 %v3397, 7
    %v3399 = vsub.s32 %v3396, %v3398
    %v3400 = vrot.slane %v3390, %v3399
    %v3402 = vunpack.c.l.s4 1966171168
    %v3403 = vunpack.c.0.s8 %v3402
    %v3404 = vlaneseq
    %v3405 = vshrl.u32 %v3404, 7
    %v3406 = vsub.s32 %v3403, %v3405
    %v3407 = vrot.slane %v3391, %v3406
    %v3409 = vunpack.c.l.s4 1966171168
    %v3410 = vunpack.c.0.s8 %v3409
    %v3411 = vlaneseq
    %v3412 = vshrl.u32 %v3411, 7
    %v3413 = vsub.s32 %v3410, %v3412
    %v3414 = vrot.slane %v3392, %v3413
    %v3416 = vunpack.c.l.s4 1966171168
    %v3417 = vunpack.c.0.s8 %v3416
    %v3418 = vlaneseq
    %v3419 = vshrl.u32 %v3418, 7
    %v3420 = vsub.s32 %v3417, %v3419
    %v3421 = vrot.slane %v3393, %v3420
    %v3422 = vcombine.low %v3400, %v3414
    %v3423 = vcombine.high %v3400, %v3414
    %v3424 = vcombine.low %v3407, %v3421
    %v3425 = vcombine.low %v2366, %v2380
    %v3426 = vcombine.low %v2382, %v2425
    %v3427 = vcombine.low %v2439, %v2447
    %v3428 = vcombine.low %v2449, %v2432
    %v3430 = vunpack.c.l.s4 1966171168
    %v3431 = vunpack.c.0.s8 %v3430
    %v3432 = vlaneseq
    %v3433 = vshrl.u32 %v3432, 7
    %v3434 = vsub.s32 %v3431, %v3433
    %v3435 = vrot.slane %v3425, %v3434
    %v3437 = vunpack.c.l.s4 1966171168
    %v3438 = vunpack.c.0.s8 %v3437
    %v3439 = vlaneseq
    %v3440 = vshrl.u32 %v3439, 7
    %v3441 = vsub.s32 %v3438, %v3440
    %v3442 = vrot.slane %v3426, %v3441
    %v3444 = vunpack.c.l.s4 1966171168
    %v3445 = vunpack.c.0.s8 %v3444
    %v3446 = vlaneseq
    %v3447 = vshrl.u32 %v3446, 7
    %v3448 = vsub.s32 %v3445, %v3447
    %v3449 = vrot.slane %v3427, %v3448
    %v3451 = vunpack.c.l.s4 1966171168
    %v3452 = vunpack.c.0.s8 %v3451
    %v3453 = vlaneseq
    %v3454 = vshrl.u32 %v3453, 7
    %v3455 = vsub.s32 %v3452, %v3454
    %v3456 = vrot.slane %v3428, %v3455
    %v3457 = vcombine.low %v3435, %v3442
    %v3458 = vcombine.high %v3435, %v3442
    %v3459 = vcombine.low %v3449, %v3456
    %v3460 = vcombine.high %v3449, %v3456
    %v3462 = vunpack.c.l.s4 1966171168
    %v3463 = vunpack.c.0.s8 %v3462
    %v3464 = vlaneseq
    %v3465 = vshrl.u32 %v3464, 7
    %v3466 = vsub.s32 %v3463, %v3465
    %v3467 = vrot.slane %v3457, %v3466
    %v3469 = vunpack.c.l.s4 1966171168
    %v3470 = vunpack.c.0.s8 %v3469
    %v3471 = vlaneseq
    %v3472 = vshrl.u32 %v3471, 7
    %v3473 = vsub.s32 %v3470, %v3472
    %v3474 = vrot.slane %v3458, %v3473
    %v3476 = vunpack.c.l.s4 1966171168
    %v3477 = vunpack.c.0.s8 %v3476
    %v3478 = vlaneseq
    %v3479 = vshrl.u32 %v3478, 7
    %v3480 = vsub.s32 %v3477, %v3479
    %v3481 = vrot.slane %v3459, %v3480
    %v3483 = vunpack.c.l.s4 1966171168
    %v3484 = vunpack.c.0.s8 %v3483
    %v3485 = vlaneseq
    %v3486 = vshrl.u32 %v3485, 7
    %v3487 = vsub.s32 %v3484, %v3486
    %v3488 = vrot.slane %v3460, %v3487
    %v3489 = vcombine.low %v3467, %v3481
    %v3490 = vcombine.high %v3467, %v3481
    %v3491 = vcombine.low %v3474, %v3488
    %v3492 = vcombine.low %v2446, %v2448
    %v3493 = vcombine.low %v2491, %v2505
    %v3494 = vcombine.low %v2513, %v2515
    %v3495 = vcombine.low %v2498, %v2512
    %v3497 = vunpack.c.l.s4 1966171168
    %v3498 = vunpack.c.0.s8 %v3497
    %v3499 = vlaneseq
    %v3500 = vshrl.u32 %v3499, 7
    %v3501 = vsub.s32 %v3498, %v3500
    %v3502 = vrot.slane %v3492, %v3501
    %v3504 = vunpack.c.l.s4 1966171168
    %v3505 = vunpack.c.0.s8 %v3504
    %v3506 = vlaneseq
    %v3507 = vshrl.u32 %v3506, 7
    %v3508 = vsub.s32 %v3505, %v3507
    %v3509 = vrot.slane %v3493, %v3508
    %v3511 = vunpack.c.l.s4 1966171168
    %v3512 = vunpack.c.0.s8 %v3511
    %v3513 = vlaneseq
    %v3514 = vshrl.u32 %v3513, 7
    %v3515 = vsub.s32 %v3512, %v3514
    %v3516 = vrot.slane %v3494, %v3515
    %v3518 = vunpack.c.l.s4 1966171168
    %v3519 = vunpack.c.0.s8 %v3518
    %v3520 = vlaneseq
    %v3521 = vshrl.u32 %v3520, 7
    %v3522 = vsub.s32 %v3519, %v3521
    %v3523 = vrot.slane %v3495, %v3522
    %v3524 = vcombine.low %v3502, %v3509
    %v3525 = vcombine.high %v3502, %v3509
    %v3526 = vcombine.low %v3516, %v3523
    %v3527 = vcombine.high %v3516, %v3523
    %v3529 = vunpack.c.l.s4 1966171168
    %v3530 = vunpack.c.0.s8 %v3529
    %v3531 = vlaneseq
    %v3532 = vshrl.u32 %v3531, 7
    %v3533 = vsub.s32 %v3530, %v3532
    %v3534 = vrot.slane %v3524, %v3533
    %v3536 = vunpack.c.l.s4 1966171168
    %v3537 = vunpack.c.0.s8 %v3536
    %v3538 = vlaneseq
    %v3539 = vshrl.u32 %v3538, 7
    %v3540 = vsub.s32 %v3537, %v3539
    %v3541 = vrot.slane %v3525, %v3540
    %v3543 = vunpack.c.l.s4 1966171168
    %v3544 = vunpack.c.0.s8 %v3543
    %v3545 = vlaneseq
    %v3546 = vshrl.u32 %v3545, 7
    %v3547 = vsub.s32 %v3544, %v3546
    %v3548 = vrot.slane %v3526, %v3547
    %v3550 = vunpack.c.l.s4 1966171168
    %v3551 = vunpack.c.0.s8 %v3550
    %v3552 = vlaneseq
    %v3553 = vshrl.u32 %v3552, 7
    %v3554 = vsub.s32 %v3551, %v3553
    %v3555 = vrot.slane %v3527, %v3554
    %v3556 = vcombine.low %v3534, %v3548
    %v3557 = vcombine.high %v3534, %v3548
    %v3558 = vcombine.low %v3541, %v3555
    %v3559 = vcombine.low %v2514, %v2557
    %v3560 = vcombine.low %v2571, %v2579
    %v3561 = vcombine.low %v2581, %v2564
    %v3562 = vcombine.low %v2578, %v2580
    %v3564 = vunpack.c.l.s4 1966171168
    %v3565 = vunpack.c.0.s8 %v3564
    %v3566 = vlaneseq
    %v3567 = vshrl.u32 %v3566, 7
    %v3568 = vsub.s32 %v3565, %v3567
    %v3569 = vrot.slane %v3559, %v3568
    %v3571 = vunpack.c.l.s4 1966171168
    %v3572 = vunpack.c.0.s8 %v3571
    %v3573 = vlaneseq
    %v3574 = vshrl.u32 %v3573, 7
    %v3575 = vsub.s32 %v3572, %v3574
    %v3576 = vrot.slane %v3560, %v3575
    %v3578 = vunpack.c.l.s4 1966171168
    %v3579 = vunpack.c.0.s8 %v3578
    %v3580 = vlaneseq
    %v3581 = vshrl.u32 %v3580, 7
    %v3582 = vsub.s32 %v3579, %v3581
    %v3583 = vrot.slane %v3561, %v3582
    %v3585 = vunpack.c.l.s4 1966171168
    %v3586 = vunpack.c.0.s8 %v3585
    %v3587 = vlaneseq
    %v3588 = vshrl.u32 %v3587, 7
    %v3589 = vsub.s32 %v3586, %v3588
    %v3590 = vrot.slane %v3562, %v3589
    %v3591 = vcombine.low %v3569, %v3576
    %v3592 = vcombine.high %v3569, %v3576
    %v3593 = vcombine.low %v3583, %v3590
    %v3594 = vcombine.high %v3583, %v3590
    %v3596 = vunpack.c.l.s4 1966171168
    %v3597 = vunpack.c.0.s8 %v3596
    %v3598 = vlaneseq
    %v3599 = vshrl.u32 %v3598, 7
    %v3600 = vsub.s32 %v3597, %v3599
    %v3601 = vrot.slane %v3591, %v3600
    %v3603 = vunpack.c.l.s4 1966171168
    %v3604 = vunpack.c.0.s8 %v3603
    %v3605 = vlaneseq
    %v3606 = vshrl.u32 %v3605, 7
    %v3607 = vsub.s32 %v3604, %v3606
    %v3608 = vrot.slane %v3592, %v3607
    %v3610 = vunpack.c.l.s4 1966171168
    %v3611 = vunpack.c.0.s8 %v3610
    %v3612 = vlaneseq
    %v3613 = vshrl.u32 %v3612, 7
    %v3614 = vsub.s32 %v3611, %v3613
    %v3615 = vrot.slane %v3593, %v3614
    %v3617 = vunpack.c.l.s4 1966171168
    %v3618 = vunpack.c.0.s8 %v3617
    %v3619 = vlaneseq
    %v3620 = vshrl.u32 %v3619, 7
    %v3621 = vsub.s32 %v3618, %v3620
    %v3622 = vrot.slane %v3594, %v3621
    %v3623 = vcombine.low %v3601, %v3615
    %v3624 = vcombine.high %v3601, %v3615
    %v3625 = vcombine.low %v3608, %v3622
    %v3626 = vcombine.low %v2623, %v2637
    %v3627 = vcombine.low %v2645, %v2647
    %v3628 = vcombine.low %v2630, %v2644
    %v3629 = vcombine.low %v2646, %v2689
    %v3631 = vunpack.c.l.s4 1966171168
    %v3632 = vunpack.c.0.s8 %v3631
    %v3633 = vlaneseq
    %v3634 = vshrl.u32 %v3633, 7
    %v3635 = vsub.s32 %v3632, %v3634
    %v3636 = vrot.slane %v3626, %v3635
    %v3638 = vunpack.c.l.s4 1966171168
    %v3639 = vunpack.c.0.s8 %v3638
    %v3640 = vlaneseq
    %v3641 = vshrl.u32 %v3640, 7
    %v3642 = vsub.s32 %v3639, %v3641
    %v3643 = vrot.slane %v3627, %v3642
    %v3645 = vunpack.c.l.s4 1966171168
    %v3646 = vunpack.c.0.s8 %v3645
    %v3647 = vlaneseq
    %v3648 = vshrl.u32 %v3647, 7
    %v3649 = vsub.s32 %v3646, %v3648
    %v3650 = vrot.slane %v3628, %v3649
    %v3652 = vunpack.c.l.s4 1966171168
    %v3653 = vunpack.c.0.s8 %v3652
    %v3654 = vlaneseq
    %v3655 = vshrl.u32 %v3654, 7
    %v3656 = vsub.s32 %v3653, %v3655
    %v3657 = vrot.slane %v3629, %v3656
    %v3658 = vcombine.low %v3636, %v3643
    %v3659 = vcombine.high %v3636, %v3643
    %v3660 = vcombine.low %v3650, %v3657
    %v3661 = vcombine.high %v3650, %v3657
    %v3663 = vunpack.c.l.s4 1966171168
    %v3664 = vunpack.c.0.s8 %v3663
    %v3665 = vlaneseq
    %v3666 = vshrl.u32 %v3665, 7
    %v3667 = vsub.s32 %v3664, %v3666
    %v3668 = vrot.slane %v3658, %v3667
    %v3670 = vunpack.c.l.s4 1966171168
    %v3671 = vunpack.c.0.s8 %v3670
    %v3672 = vlaneseq
    %v3673 = vshrl.u32 %v3672, 7
    %v3674 = vsub.s32 %v3671, %v3673
    %v3675 = vrot.slane %v3659, %v3674
    %v3677 = vunpack.c.l.s4 1966171168
    %v3678 = vunpack.c.0.s8 %v3677
    %v3679 = vlaneseq
    %v3680 = vshrl.u32 %v3679, 7
    %v3681 = vsub.s32 %v3678, %v3680
    %v3682 = vrot.slane %v3660, %v3681
    %v3684 = vunpack.c.l.s4 1966171168
    %v3685 = vunpack.c.0.s8 %v3684
    %v3686 = vlaneseq
    %v3687 = vshrl.u32 %v3686, 7
    %v3688 = vsub.s32 %v3685, %v3687
    %v3689 = vrot.slane %v3661, %v3688
    %v3690 = vcombine.low %v3668, %v3682
    %v3691 = vcombine.high %v3668, %v3682
    %v3692 = vcombine.low %v3675, %v3689
    %v3693 = vcombine.low %v2703, %v2711
    %v3694 = vcombine.low %v2713, %v2696
    %v3695 = vcombine.low %v2710, %v2712
    %v3696 = vcombine.low %v2755, %v2769
    %v3698 = vunpack.c.l.s4 1966171168
    %v3699 = vunpack.c.0.s8 %v3698
    %v3700 = vlaneseq
    %v3701 = vshrl.u32 %v3700, 7
    %v3702 = vsub.s32 %v3699, %v3701
    %v3703 = vrot.slane %v3693, %v3702
    %v3705 = vunpack.c.l.s4 1966171168
    %v3706 = vunpack.c.0.s8 %v3705
    %v3707 = vlaneseq
    %v3708 = vshrl.u32 %v3707, 7
    %v3709 = vsub.s32 %v3706, %v3708
    %v3710 = vrot.slane %v3694, %v3709
    %v3712 = vunpack.c.l.s4 1966171168
    %v3713 = vunpack.c.0.s8 %v3712
    %v3714 = vlaneseq
    %v3715 = vshrl.u32 %v3714, 7
    %v3716 = vsub.s32 %v3713, %v3715
    %v3717 = vrot.slane %v3695, %v3716
    %v3719 = vunpack.c.l.s4 1966171168
    %v3720 = vunpack.c.0.s8 %v3719
    %v3721 = vlaneseq
    %v3722 = vshrl.u32 %v3721, 7
    %v3723 = vsub.s32 %v3720, %v3722
    %v3724 = vrot.slane %v3696, %v3723
    %v3725 = vcombine.low %v3703, %v3710
    %v3726 = vcombine.high %v3703, %v3710
    %v3727 = vcombine.low %v3717, %v3724
    %v3728 = vcombine.high %v3717, %v3724
    %v3730 = vunpack.c.l.s4 1966171168
    %v3731 = vunpack.c.0.s8 %v3730
    %v3732 = vlaneseq
    %v3733 = vshrl.u32 %v3732, 7
    %v3734 = vsub.s32 %v3731, %v3733
    %v3735 = vrot.slane %v3725, %v3734
    %v3737 = vunpack.c.l.s4 1966171168
    %v3738 = vunpack.c.0.s8 %v3737
    %v3739 = vlaneseq
    %v3740 = vshrl.u32 %v3739, 7
    %v3741 = vsub.s32 %v3738, %v3740
    %v3742 = vrot.slane %v3726, %v3741
    %v3744 = vunpack.c.l.s4 1966171168
    %v3745 = vunpack.c.0.s8 %v3744
    %v3746 = vlaneseq
    %v3747 = vshrl.u32 %v3746, 7
    %v3748 = vsub.s32 %v3745, %v3747
    %v3749 = vrot.slane %v3727, %v3748
    %v3751 = vunpack.c.l.s4 1966171168
    %v3752 = vunpack.c.0.s8 %v3751
    %v3753 = vlaneseq
    %v3754 = vshrl.u32 %v3753, 7
    %v3755 = vsub.s32 %v3752, %v3754
    %v3756 = vrot.slane %v3728, %v3755
    %v3757 = vcombine.low %v3735, %v3749
    %v3758 = vcombine.high %v3735, %v3749
    %v3759 = vcombine.low %v3742, %v3756
    %v3760 = vcombine.low %v2777, %v2779
    %v3761 = vcombine.low %v2762, %v2776
    %v3762 = vcombine.low %v2778, %v2821
    %v3763 = vcombine.low %v2835, %v2843
    %v3765 = vunpack.c.l.s4 1966171168
    %v3766 = vunpack.c.0.s8 %v3765
    %v3767 = vlaneseq
    %v3768 = vshrl.u32 %v3767, 7
    %v3769 = vsub.s32 %v3766, %v3768
    %v3770 = vrot.slane %v3760, %v3769
    %v3772 = vunpack.c.l.s4 1966171168
    %v3773 = vunpack.c.0.s8 %v3772
    %v3774 = vlaneseq
    %v3775 = vshrl.u32 %v3774, 7
    %v3776 = vsub.s32 %v3773, %v3775
    %v3777 = vrot.slane %v3761, %v3776
    %v3779 = vunpack.c.l.s4 1966171168
    %v3780 = vunpack.c.0.s8 %v3779
    %v3781 = vlaneseq
    %v3782 = vshrl.u32 %v3781, 7
    %v3783 = vsub.s32 %v3780, %v3782
    %v3784 = vrot.slane %v3762, %v3783
    %v3786 = vunpack.c.l.s4 1966171168
    %v3787 = vunpack.c.0.s8 %v3786
    %v3788 = vlaneseq
    %v3789 = vshrl.u32 %v3788, 7
    %v3790 = vsub.s32 %v3787, %v3789
    %v3791 = vrot.slane %v3763, %v3790
    %v3792 = vcombine.low %v3770, %v3777
    %v3793 = vcombine.high %v3770, %v3777
    %v3794 = vcombine.low %v3784, %v3791
    %v3795 = vcombine.high %v3784, %v3791
    %v3797 = vunpack.c.l.s4 1966171168
    %v3798 = vunpack.c.0.s8 %v3797
    %v3799 = vlaneseq
    %v3800 = vshrl.u32 %v3799, 7
    %v3801 = vsub.s32 %v3798, %v3800
    %v3802 = vrot.slane %v3792, %v3801
    %v3804 = vunpack.c.l.s4 1966171168
    %v3805 = vunpack.c.0.s8 %v3804
    %v3806 = vlaneseq
    %v3807 = vshrl.u32 %v3806, 7
    %v3808 = vsub.s32 %v3805, %v3807
    %v3809 = vrot.slane %v3793, %v3808
    %v3811 = vunpack.c.l.s4 1966171168
    %v3812 = vunpack.c.0.s8 %v3811
    %v3813 = vlaneseq
    %v3814 = vshrl.u32 %v3813, 7
    %v3815 = vsub.s32 %v3812, %v3814
    %v3816 = vrot.slane %v3794, %v3815
    %v3818 = vunpack.c.l.s4 1966171168
    %v3819 = vunpack.c.0.s8 %v3818
    %v3820 = vlaneseq
    %v3821 = vshrl.u32 %v3820, 7
    %v3822 = vsub.s32 %v3819, %v3821
    %v3823 = vrot.slane %v3795, %v3822
    %v3824 = vcombine.low %v3802, %v3816
    %v3825 = vcombine.high %v3802, %v3816
    %v3826 = vcombine.low %v3809, %v3823
    %v3827 = vcombine.low %v2845, %v2828
    %v3828 = vcombine.low %v2842, %v2844
    %v3829 = vcombine.low %v2887, %v2901
    %v3830 = vcombine.low %v2909, %v2911
    %v3832 = vunpack.c.l.s4 1966171168
    %v3833 = vunpack.c.0.s8 %v3832
    %v3834 = vlaneseq
    %v3835 = vshrl.u32 %v3834, 7
    %v3836 = vsub.s32 %v3833, %v3835
    %v3837 = vrot.slane %v3827, %v3836
    %v3839 = vunpack.c.l.s4 1966171168
    %v3840 = vunpack.c.0.s8 %v3839
    %v3841 = vlaneseq
    %v3842 = vshrl.u32 %v3841, 7
    %v3843 = vsub.s32 %v3840, %v3842
    %v3844 = vrot.slane %v3828, %v3843
    %v3846 = vunpack.c.l.s4 1966171168
    %v3847 = vunpack.c.0.s8 %v3846
    %v3848 = vlaneseq
    %v3849 = vshrl.u32 %v3848, 7
    %v3850 = vsub.s32 %v3847, %v3849
    %v3851 = vrot.slane %v3829, %v3850
    %v3853 = vunpack.c.l.s4 1966171168
    %v3854 = vunpack.c.0.s8 %v3853
    %v3855 = vlaneseq
    %v3856 = vshrl.u32 %v3855, 7
    %v3857 = vsub.s32 %v3854, %v3856
    %v3858 = vrot.slane %v3830, %v3857
    %v3859 = vcombine.low %v3837, %v3844
    %v3860 = vcombine.high %v3837, %v3844
    %v3861 = vcombine.low %v3851, %v3858
    %v3862 = vcombine.high %v3851, %v3858
    %v3864 = vunpack.c.l.s4 1966171168
    %v3865 = vunpack.c.0.s8 %v3864
    %v3866 = vlaneseq
    %v3867 = vshrl.u32 %v3866, 7
    %v3868 = vsub.s32 %v3865, %v3867
    %v3869 = vrot.slane %v3859, %v3868
    %v3871 = vunpack.c.l.s4 1966171168
    %v3872 = vunpack.c.0.s8 %v3871
    %v3873 = vlaneseq
    %v3874 = vshrl.u32 %v3873, 7
    %v3875 = vsub.s32 %v3872, %v3874
    %v3876 = vrot.slane %v3860, %v3875
    %v3878 = vunpack.c.l.s4 1966171168
    %v3879 = vunpack.c.0.s8 %v3878
    %v3880 = vlaneseq
    %v3881 = vshrl.u32 %v3880, 7
    %v3882 = vsub.s32 %v3879, %v3881
    %v3883 = vrot.slane %v3861, %v3882
    %v3885 = vunpack.c.l.s4 1966171168
    %v3886 = vunpack.c.0.s8 %v3885
    %v3887 = vlaneseq
    %v3888 = vshrl.u32 %v3887, 7
    %v3889 = vsub.s32 %v3886, %v3888
    %v3890 = vrot.slane %v3862, %v3889
    %v3891 = vcombine.low %v3869, %v3883
    %v3892 = vcombine.high %v3869, %v3883
    %v3893 = vcombine.low %v3876, %v3890
    %v3894 = vcombine.low %v2894, %v2908
    %v3895 = vcombine.low %v2910, %v2953
    %v3896 = vcombine.low %v2967, %v2975
    %v3897 = vcombine.low %v2977, %v2960
    %v3899 = vunpack.c.l.s4 1966171168
    %v3900 = vunpack.c.0.s8 %v3899
    %v3901 = vlaneseq
    %v3902 = vshrl.u32 %v3901, 7
    %v3903 = vsub.s32 %v3900, %v3902
    %v3904 = vrot.slane %v3894, %v3903
    %v3906 = vunpack.c.l.s4 1966171168
    %v3907 = vunpack.c.0.s8 %v3906
    %v3908 = vlaneseq
    %v3909 = vshrl.u32 %v3908, 7
    %v3910 = vsub.s32 %v3907, %v3909
    %v3911 = vrot.slane %v3895, %v3910
    %v3913 = vunpack.c.l.s4 1966171168
    %v3914 = vunpack.c.0.s8 %v3913
    %v3915 = vlaneseq
    %v3916 = vshrl.u32 %v3915, 7
    %v3917 = vsub.s32 %v3914, %v3916
    %v3918 = vrot.slane %v3896, %v3917
    %v3920 = vunpack.c.l.s4 1966171168
    %v3921 = vunpack.c.0.s8 %v3920
    %v3922 = vlaneseq
    %v3923 = vshrl.u32 %v3922, 7
    %v3924 = vsub.s32 %v3921, %v3923
    %v3925 = vrot.slane %v3897, %v3924
    %v3926 = vcombine.low %v3904, %v3911
    %v3927 = vcombine.high %v3904, %v3911
    %v3928 = vcombine.low %v3918, %v3925
    %v3929 = vcombine.high %v3918, %v3925
    %v3931 = vunpack.c.l.s4 1966171168
    %v3932 = vunpack.c.0.s8 %v3931
    %v3933 = vlaneseq
    %v3934 = vshrl.u32 %v3933, 7
    %v3935 = vsub.s32 %v3932, %v3934
    %v3936 = vrot.slane %v3926, %v3935
    %v3938 = vunpack.c.l.s4 1966171168
    %v3939 = vunpack.c.0.s8 %v3938
    %v3940 = vlaneseq
    %v3941 = vshrl.u32 %v3940, 7
    %v3942 = vsub.s32 %v3939, %v3941
    %v3943 = vrot.slane %v3927, %v3942
    %v3945 = vunpack.c.l.s4 1966171168
    %v3946 = vunpack.c.0.s8 %v3945
    %v3947 = vlaneseq
    %v3948 = vshrl.u32 %v3947, 7
    %v3949 = vsub.s32 %v3946, %v3948
    %v3950 = vrot.slane %v3928, %v3949
    %v3952 = vunpack.c.l.s4 1966171168
    %v3953 = vunpack.c.0.s8 %v3952
    %v3954 = vlaneseq
    %v3955 = vshrl.u32 %v3954, 7
    %v3956 = vsub.s32 %v3953, %v3955
    %v3957 = vrot.slane %v3929, %v3956
    %v3958 = vcombine.low %v3936, %v3950
    %v3959 = vcombine.high %v3936, %v3950
    %v3960 = vcombine.low %v3943, %v3957
    %v3961 = vcombine.low %v2974, %v2976
    %v3962 = vcombine.low %v3019, %v3033
    %v3963 = vcombine.low %v3041, %v3043
    %v3964 = vcombine.low %v3026, %v3040
    %v3966 = vunpack.c.l.s4 1966171168
    %v3967 = vunpack.c.0.s8 %v3966
    %v3968 = vlaneseq
    %v3969 = vshrl.u32 %v3968, 7
    %v3970 = vsub.s32 %v3967, %v3969
    %v3971 = vrot.slane %v3961, %v3970
    %v3973 = vunpack.c.l.s4 1966171168
    %v3974 = vunpack.c.0.s8 %v3973
    %v3975 = vlaneseq
    %v3976 = vshrl.u32 %v3975, 7
    %v3977 = vsub.s32 %v3974, %v3976
    %v3978 = vrot.slane %v3962, %v3977
    %v3980 = vunpack.c.l.s4 1966171168
    %v3981 = vunpack.c.0.s8 %v3980
    %v3982 = vlaneseq
    %v3983 = vshrl.u32 %v3982, 7
    %v3984 = vsub.s32 %v3981, %v3983
    %v3985 = vrot.slane %v3963, %v3984
    %v3987 = vunpack.c.l.s4 1966171168
    %v3988 = vunpack.c.0.s8 %v3987
    %v3989 = vlaneseq
    %v3990 = vshrl.u32 %v3989, 7
    %v3991 = vsub.s32 %v3988, %v3990
    %v3992 = vrot.slane %v3964, %v3991
    %v3993 = vcombine.low %v3971, %v3978
    %v3994 = vcombine.high %v3971, %v3978
    %v3995 = vcombine.low %v3985, %v3992
    %v3996 = vcombine.high %v3985, %v3992
    %v3998 = vunpack.c.l.s4 1966171168
    %v3999 = vunpack.c.0.s8 %v3998
    %v4000 = vlaneseq
    %v4001 = vshrl.u32 %v4000, 7
    %v4002 = vsub.s32 %v3999, %v4001
    %v4003 = vrot.slane %v3993, %v4002
    %v4005 = vunpack.c.l.s4 1966171168
    %v4006 = vunpack.c.0.s8 %v4005
    %v4007 = vlaneseq
    %v4008 = vshrl.u32 %v4007, 7
    %v4009 = vsub.s32 %v4006, %v4008
    %v4010 = vrot.slane %v3994, %v4009
    %v4012 = vunpack.c.l.s4 1966171168
    %v4013 = vunpack.c.0.s8 %v4012
    %v4014 = vlaneseq
    %v4015 = vshrl.u32 %v4014, 7
    %v4016 = vsub.s32 %v4013, %v4015
    %v4017 = vrot.slane %v3995, %v4016
    %v4019 = vunpack.c.l.s4 1966171168
    %v4020 = vunpack.c.0.s8 %v4019
    %v4021 = vlaneseq
    %v4022 = vshrl.u32 %v4021, 7
    %v4023 = vsub.s32 %v4020, %v4022
    %v4024 = vrot.slane %v3996, %v4023
    %v4025 = vcombine.low %v4003, %v4017
    %v4026 = vcombine.high %v4003, %v4017
    %v4027 = vcombine.low %v4010, %v4024
    %v4028 = vcombine.low %v3042, %v3085
    %v4029 = vcombine.low %v3099, %v3107
    %v4030 = vcombine.low %v3109, %v3092
    %v4031 = vcombine.low %v3106, %v3108
    %v4033 = vunpack.c.l.s4 1966171168
    %v4034 = vunpack.c.0.s8 %v4033
    %v4035 = vlaneseq
    %v4036 = vshrl.u32 %v4035, 7
    %v4037 = vsub.s32 %v4034, %v4036
    %v4038 = vrot.slane %v4028, %v4037
    %v4040 = vunpack.c.l.s4 1966171168
    %v4041 = vunpack.c.0.s8 %v4040
    %v4042 = vlaneseq
    %v4043 = vshrl.u32 %v4042, 7
    %v4044 = vsub.s32 %v4041, %v4043
    %v4045 = vrot.slane %v4029, %v4044
    %v4047 = vunpack.c.l.s4 1966171168
    %v4048 = vunpack.c.0.s8 %v4047
    %v4049 = vlaneseq
    %v4050 = vshrl.u32 %v4049, 7
    %v4051 = vsub.s32 %v4048, %v4050
    %v4052 = vrot.slane %v4030, %v4051
    %v4054 = vunpack.c.l.s4 1966171168
    %v4055 = vunpack.c.0.s8 %v4054
    %v4056 = vlaneseq
    %v4057 = vshrl.u32 %v4056, 7
    %v4058 = vsub.s32 %v4055, %v4057
    %v4059 = vrot.slane %v4031, %v4058
    %v4060 = vcombine.low %v4038, %v4045
    %v4061 = vcombine.high %v4038, %v4045
    %v4062 = vcombine.low %v4052, %v4059
    %v4063 = vcombine.high %v4052, %v4059
    %v4065 = vunpack.c.l.s4 1966171168
    %v4066 = vunpack.c.0.s8 %v4065
    %v4067 = vlaneseq
    %v4068 = vshrl.u32 %v4067, 7
    %v4069 = vsub.s32 %v4066, %v4068
    %v4070 = vrot.slane %v4060, %v4069
    %v4072 = vunpack.c.l.s4 1966171168
    %v4073 = vunpack.c.0.s8 %v4072
    %v4074 = vlaneseq
    %v4075 = vshrl.u32 %v4074, 7
    %v4076 = vsub.s32 %v4073, %v4075
    %v4077 = vrot.slane %v4061, %v4076
    %v4079 = vunpack.c.l.s4 1966171168
    %v4080 = vunpack.c.0.s8 %v4079
    %v4081 = vlaneseq
    %v4082 = vshrl.u32 %v4081, 7
    %v4083 = vsub.s32 %v4080, %v4082
    %v4084 = vrot.slane %v4062, %v4083
    %v4086 = vunpack.c.l.s4 1966171168
    %v4087 = vunpack.c.0.s8 %v4086
    %v4088 = vlaneseq
    %v4089 = vshrl.u32 %v4088, 7
    %v4090 = vsub.s32 %v4087, %v4089
    %v4091 = vrot.slane %v4063, %v4090
    %v4092 = vcombine.low %v4070, %v4084
    %v4093 = vcombine.high %v4070, %v4084
    %v4094 = vcombine.low %v4077, %v4091
    %v4163 = vunpack.c.l.b16 %v3110
    %v4164 = vunpack.c.l.b16 %v3111
    %v4165 = vunpack.c.l.b16 %v3112
    %v4166 = vunpack.c.l.b16 %v3113
    %v4167 = vunpack.c.l.b16 %v3114
    %v4168 = vunpack.c.l.b16 %v3115
    %v4169 = vunpack.c.l.b16 %v3116
    %v4170 = vunpack.c.l.b16 %v3117
    %v4171 = vunpack.c.l.b16 %v3118
    %v4172 = vunpack.c.l.b16 %v3119
    %v4173 = vunpack.c.l.b16 %v3120
    %v4174 = vunpack.c.l.b16 %v3121
    %v4175 = vunpack.c.l.b16 %v3122
    %v4176 = vunpack.c.l.b16 %v3123
    %v4177 = vunpack.c.l.b16 %v3124
    %v4178 = vunpack.c.l.b16 %v3125
    %v4179 = vunpack.c.l.b16 %v3126
    %v4180 = vunpack.c.l.b16 %v3127
    %v4181 = vunpack.c.l.b16 %v3128
    %v4182 = vunpack.c.l.b16 %v3129
    %v4183 = vunpack.c.l.b16 %v3130
    %v4184 = vunpack.c.l.b16 %v3131
    %v4185 = vunpack.c.l.b16 %v3132
    %v4186 = vunpack.c.l.b16 %v3133
    %v4187 = vunpack.c.l.b16 %v3134
    %v4188 = vunpack.c.l.b16 %v3135
    %v4189 = vunpack.c.l.b16 %v3136
    %v4190 = vunpack.c.l.b16 %v3137
    %v4191 = vunpack.c.l.b16 %v3138
    %v4192 = vunpack.c.l.b16 %v3139
    %v4193 = vunpack.c.l.b16 %v3140
    %v4194 = vunpack.c.l.b16 %v3141
    %v4195 = vunpack.c.l.b16 %v3142
    %v4196 = vunpack.c.l.b16 %v3143
    %v4197 = vunpack.c.l.b16 %v3144
    %v4198 = vunpack.c.l.b16 %v3145
    %v4199 = vunpack.c.l.b16 %v3146
    %v4200 = vunpack.c.l.b16 %v3147
    %v4201 = vunpack.c.l.b16 %v3148
    %v4202 = vunpack.c.l.b16 %v3149
    %v4203 = vpack.c.b16 %v4164, %v4163
    %v4204 = vpack.c.b16 %v4166, %v4165
    %v4205 = vpack.c.b16 %v4168, %v4167
    %v4206 = vpack.c.b16 %v4170, %v4169
    %v4207 = vpack.c.b16 %v4172, %v4171
    %v4208 = vpack.c.b16 %v4174, %v4173
    %v4209 = vpack.c.b16 %v4176, %v4175
    %v4210 = vpack.c.b16 %v4178, %v4177
    %v4211 = vpack.c.b16 %v4180, %v4179
    %v4212 = vpack.c.b16 %v4182, %v4181
    %v4213 = vpack.c.b16 %v4184, %v4183
    %v4214 = vpack.c.b16 %v4186, %v4185
    %v4215 = vpack.c.b16 %v4188, %v4187
    %v4216 = vpack.c.b16 %v4190, %v4189
    %v4217 = vpack.c.b16 %v4192, %v4191
    %v4218 = vpack.c.b16 %v4194, %v4193
    %v4219 = vpack.c.b16 %v4196, %v4195
    %v4220 = vpack.c.b16 %v4198, %v4197
    %v4221 = vpack.c.b16 %v4200, %v4199
    %v4222 = vpack.c.b16 %v4202, %v4201
    %vm4243 = vcmask 523264
    %v4245 = vsel %vm4243, %v3222, 0
    %v4248 = vsel %vm4243, %v3289, 0
    %v4251 = vsel %vm4243, %v3356, 0
    %v4254 = vsel %vm4243, %v3423, 0
    %v4257 = vsel %vm4243, %v3490, 0
    %v4260 = vsel %vm4243, %v3557, 0
    %v4263 = vsel %vm4243, %v3624, 0
    %v4266 = vsel %vm4243, %v3691, 0
    %v4269 = vsel %vm4243, %v3758, 0
    %v4272 = vsel %vm4243, %v3825, 0
    %v4275 = vsel %vm4243, %v3892, 0
    %v4278 = vsel %vm4243, %v3959, 0
    %v4281 = vsel %vm4243, %v4026, 0
    %v4284 = vsel %vm4243, %v4093, 0
    %4286 = vmatprep.subr.bf16.mxu0 0
    %4287 = vmatpush1.bf16.msra.mxu0 %v4203
    %4288 = vmatprep.subr.bf16.mxu0 0
    %4289 = vmatpush1.bf16.msra.mxu0 %v4204
    %4290 = vmatprep.subr.bf16.mxu0 0
    %4291 = vmatpush1.bf16.msra.mxu0 %v4205
    %4292 = vmatprep.subr.bf16.mxu0 0
    %4293 = vmatpush1.bf16.msra.mxu0 %v4206
    %4294 = vmatprep.subr.bf16.mxu0 0
    %4295 = vmatpush1.bf16.msra.mxu0 %v4207
    %4296 = vmatprep.subr.bf16.mxu0 0
    %4297 = vmatpush1.bf16.msra.mxu0 %v4208
    %4298 = vmatprep.subr.bf16.mxu0 0
    %4299 = vmatpush1.bf16.msra.mxu0 %v4209
    %4300 = vmatprep.subr.bf16.mxu0 0
    %4301 = vmatpush1.bf16.msra.mxu0 %v4210
    %4302 = vmatprep.subr.bf16.mxu0 0
    %4303 = vmatpush1.bf16.msra.mxu0 %v4211
    %4304 = vmatprep.subr.bf16.mxu0 0
    %4305 = vmatpush1.bf16.msra.mxu0 %v4212
    %4306 = vmatprep.subr.bf16.mxu0 0
    %4307 = vmatpush1.bf16.msra.mxu0 %v4213
    %4308 = vmatprep.subr.bf16.mxu0 0
    %4309 = vmatpush1.bf16.msra.mxu0 %v4214
    %4310 = vmatprep.subr.bf16.mxu0 0
    %4311 = vmatpush1.bf16.msra.mxu0 %v4215
    %4312 = vmatprep.subr.bf16.mxu0 0
    %4313 = vmatpush1.bf16.msra.mxu0 %v4216
    %4314 = vmatprep.subr.bf16.mxu0 0
    %4315 = vmatpush1.bf16.msra.mxu0 %v4217
    %4316 = vmatprep.subr.bf16.mxu0 0
    %4317 = vmatpush1.bf16.msra.mxu0 %v4218
    %4318 = vmatprep.mubr.bf16.mxu0 %v3223
    %4319 = vmatmul.mubr.bf16.gmra.mrb[0].mxu0 %v3221
    %v4320 = vpop.f32.mrb[0].mxu0
    %v4321 = vadd.f32 %v3155, %v4320
    %v4322 = vpop.f32.mrb[0].mxu0
    %v4323 = vpop.f32.mrb[0].mxu0
    %v4324 = vadd.f32 %v3155, %v4323
    %v4325 = vpop.f32.mrb[0].mxu0
    %4326 = vmatprep.mubr.bf16.mxu0 %v3290
    %4327 = vmatmul.mubr.bf16.gmra.mrb[0].mxu0 %v3288
    %v4328 = vpop.f32.mrb[0].mxu0
    %v4329 = vadd.f32 %v3155, %v4328
    %v4330 = vpop.f32.mrb[0].mxu0
    %v4331 = vpop.f32.mrb[0].mxu0
    %v4332 = vadd.f32 %v3155, %v4331
    %v4333 = vpop.f32.mrb[0].mxu0
    %4334 = vmatprep.mubr.bf16.mxu0 %v3357
    %4335 = vmatmul.mubr.bf16.gmra.mrb[0].mxu0 %v3355
    %v4336 = vpop.f32.mrb[0].mxu0
    %v4337 = vadd.f32 %v3155, %v4336
    %v4338 = vpop.f32.mrb[0].mxu0
    %v4339 = vpop.f32.mrb[0].mxu0
    %v4340 = vadd.f32 %v3155, %v4339
    %v4341 = vpop.f32.mrb[0].mxu0
    %4342 = vmatprep.mubr.bf16.mxu0 %v3424
    %4343 = vmatmul.mubr.bf16.gmra.mrb[0].mxu0 %v3422
    %v4344 = vpop.f32.mrb[0].mxu0
    %v4345 = vadd.f32 %v3155, %v4344
    %v4346 = vpop.f32.mrb[0].mxu0
    %v4347 = vpop.f32.mrb[0].mxu0
    %v4348 = vadd.f32 %v3155, %v4347
    %v4349 = vpop.f32.mrb[0].mxu0
    %4350 = vmatprep.mubr.bf16.mxu0 %v3491
    %4351 = vmatmul.mubr.bf16.gmra.mrb[0].mxu0 %v3489
    %v4352 = vpop.f32.mrb[0].mxu0
    %v4353 = vadd.f32 %v3155, %v4352
    %v4354 = vpop.f32.mrb[0].mxu0
    %v4355 = vpop.f32.mrb[0].mxu0
    %v4356 = vadd.f32 %v3155, %v4355
    %v4357 = vpop.f32.mrb[0].mxu0
    %4358 = vmatprep.mubr.bf16.mxu0 %v3558
    %4359 = vmatmul.mubr.bf16.gmra.mrb[0].mxu0 %v3556
    %v4360 = vpop.f32.mrb[0].mxu0
    %v4361 = vadd.f32 %v3155, %v4360
    %v4362 = vpop.f32.mrb[0].mxu0
    %v4363 = vpop.f32.mrb[0].mxu0
    %v4364 = vadd.f32 %v3155, %v4363
    %v4365 = vpop.f32.mrb[0].mxu0
    %4366 = vmatprep.mubr.bf16.mxu0 %v3625
    %4367 = vmatmul.mubr.bf16.gmra.mrb[0].mxu0 %v3623
    %v4368 = vpop.f32.mrb[0].mxu0
    %v4369 = vadd.f32 %v3155, %v4368
    %v4370 = vpop.f32.mrb[0].mxu0
    %v4371 = vpop.f32.mrb[0].mxu0
    %v4372 = vadd.f32 %v3155, %v4371
    %v4373 = vpop.f32.mrb[0].mxu0
    %4374 = vmatprep.mubr.bf16.mxu0 %v3692
    %4375 = vmatmul.mubr.bf16.gmra.mrb[0].mxu0 %v3690
    %v4376 = vpop.f32.mrb[0].mxu0
    %v4377 = vadd.f32 %v3155, %v4376
    %v4378 = vpop.f32.mrb[0].mxu0
    %v4379 = vpop.f32.mrb[0].mxu0
    %v4380 = vadd.f32 %v3155, %v4379
    %v4381 = vpop.f32.mrb[0].mxu0
    %4382 = vmatprep.mubr.bf16.mxu0 %v3759
    %4383 = vmatmul.mubr.bf16.gmra.mrb[0].mxu0 %v3757
    %v4384 = vpop.f32.mrb[0].mxu0
    %v4385 = vadd.f32 %v3155, %v4384
    %v4386 = vpop.f32.mrb[0].mxu0
    %v4387 = vpop.f32.mrb[0].mxu0
    %v4388 = vadd.f32 %v3155, %v4387
    %v4389 = vpop.f32.mrb[0].mxu0
    %4390 = vmatprep.mubr.bf16.mxu0 %v3826
    %4391 = vmatmul.mubr.bf16.gmra.mrb[0].mxu0 %v3824
    %v4392 = vpop.f32.mrb[0].mxu0
    %v4393 = vadd.f32 %v3155, %v4392
    %v4394 = vpop.f32.mrb[0].mxu0
    %v4395 = vpop.f32.mrb[0].mxu0
    %v4396 = vadd.f32 %v3155, %v4395
    %v4397 = vpop.f32.mrb[0].mxu0
    %4398 = vmatprep.mubr.bf16.mxu0 %v3893
    %4399 = vmatmul.mubr.bf16.gmra.mrb[0].mxu0 %v3891
    %v4400 = vpop.f32.mrb[0].mxu0
    %v4401 = vadd.f32 %v3155, %v4400
    %v4402 = vpop.f32.mrb[0].mxu0
    %v4403 = vpop.f32.mrb[0].mxu0
    %v4404 = vadd.f32 %v3155, %v4403
    %v4405 = vpop.f32.mrb[0].mxu0
    %4406 = vmatprep.mubr.bf16.mxu0 %v3960
    %4407 = vmatmul.mubr.bf16.gmra.mrb[0].mxu0 %v3958
    %v4408 = vpop.f32.mrb[0].mxu0
    %v4409 = vadd.f32 %v3155, %v4408
    %v4410 = vpop.f32.mrb[0].mxu0
    %v4411 = vpop.f32.mrb[0].mxu0
    %v4412 = vadd.f32 %v3155, %v4411
    %v4413 = vpop.f32.mrb[0].mxu0
    %4414 = vmatprep.mubr.bf16.mxu0 %v4027
    %4415 = vmatmul.mubr.bf16.gmra.mrb[0].mxu0 %v4025
    %v4416 = vpop.f32.mrb[0].mxu0
    %v4417 = vadd.f32 %v3155, %v4416
    %v4418 = vpop.f32.mrb[0].mxu0
    %v4419 = vpop.f32.mrb[0].mxu0
    %v4420 = vadd.f32 %v3155, %v4419
    %v4421 = vpop.f32.mrb[0].mxu0
    %4422 = vmatprep.mubr.bf16.mxu0 %v4094
    %4423 = vmatmul.mubr.bf16.gmra.mrb[0].mxu0 %v4092
    %v4424 = vpop.f32.mrb[0].mxu0
    %v4425 = vadd.f32 %v3155, %v4424
    %v4426 = vpop.f32.mrb[0].mxu0
    %v4427 = vpop.f32.mrb[0].mxu0
    %v4428 = vadd.f32 %v3155, %v4427
    %v4429 = vpop.f32.mrb[0].mxu0
    %4430 = vdwg.mxu0
    %4431 = vmatprep.subr.bf16.mxu0 0
    %4432 = vmatpush1.bf16.msra.mxu0 %v4219
    %4433 = vmatprep.subr.bf16.mxu0 0
    %4434 = vmatpush1.bf16.msra.mxu0 %v4220
    %4435 = vmatprep.subr.bf16.mxu0 0
    %4436 = vmatpush1.bf16.msra.mxu0 %v4221
    %4437 = vmatprep.subr.bf16.mxu0 0
    %4438 = vmatpush1.bf16.msra.mxu0 %v4222
    %4439 = vmatprep.subr.bf16.mxu0 0
    %4440 = vmatpush1.bf16.msra.mxu0 0
    %4441 = vmatprep.subr.bf16.mxu0 0
    %4442 = vmatpush1.bf16.msra.mxu0 0
    %4443 = vmatprep.subr.bf16.mxu0 0
    %4444 = vmatpush1.bf16.msra.mxu0 0
    %4445 = vmatprep.subr.bf16.mxu0 0
    %4446 = vmatpush1.bf16.msra.mxu0 0
    %4447 = vmatprep.subr.bf16.mxu0 0
    %4448 = vmatpush1.bf16.msra.mxu0 0
    %4449 = vmatprep.subr.bf16.mxu0 0
    %4450 = vmatpush1.bf16.msra.mxu0 0
    %4451 = vmatprep.subr.bf16.mxu0 0
    %4452 = vmatpush1.bf16.msra.mxu0 0
    %4453 = vmatprep.subr.bf16.mxu0 0
    %4454 = vmatpush1.bf16.msra.mxu0 0
    %4455 = vmatprep.subr.bf16.mxu0 0
    %4456 = vmatpush1.bf16.msra.mxu0 0
    %4457 = vmatprep.subr.bf16.mxu0 0
    %4458 = vmatpush1.bf16.msra.mxu0 0
    %4459 = vmatprep.subr.bf16.mxu0 0
    %4460 = vmatpush1.bf16.msra.mxu0 0
    %4461 = vmatprep.subr.bf16.mxu0 0
    %4462 = vmatpush1.bf16.msra.mxu0 0
    %4463 = vmatprep.mubr.bf16.mxu0 0
    %4464 = vmatmul.mubr.bf16.gmra.mrb[0].mxu0 %v4245
    %v4465 = vpop.f32.mrb[0].mxu0
    %v4466 = vadd.f32 %v4321, %v4465
    %v4467 = vpop.f32.mrb[0].mxu0
    %v4468 = vpop.f32.mrb[0].mxu0
    %v4469 = vadd.f32 %v4324, %v4468
    %v4470 = vpop.f32.mrb[0].mxu0
    %4471 = vmatprep.mubr.bf16.mxu0 0
    %4472 = vmatmul.mubr.bf16.gmra.mrb[0].mxu0 %v4248
    %v4473 = vpop.f32.mrb[0].mxu0
    %v4474 = vadd.f32 %v4329, %v4473
    %v4475 = vpop.f32.mrb[0].mxu0
    %v4476 = vpop.f32.mrb[0].mxu0
    %v4477 = vadd.f32 %v4332, %v4476
    %v4478 = vpop.f32.mrb[0].mxu0
    %4479 = vmatprep.mubr.bf16.mxu0 0
    %4480 = vmatmul.mubr.bf16.gmra.mrb[0].mxu0 %v4251
    %v4481 = vpop.f32.mrb[0].mxu0
    %v4482 = vadd.f32 %v4337, %v4481
    %v4483 = vpop.f32.mrb[0].mxu0
    %v4484 = vpop.f32.mrb[0].mxu0
    %v4485 = vadd.f32 %v4340, %v4484
    %v4486 = vpop.f32.mrb[0].mxu0
    %4487 = vmatprep.mubr.bf16.mxu0 0
    %4488 = vmatmul.mubr.bf16.gmra.mrb[0].mxu0 %v4254
    %v4489 = vpop.f32.mrb[0].mxu0
    %v4490 = vadd.f32 %v4345, %v4489
    %v4491 = vpop.f32.mrb[0].mxu0
    %v4492 = vpop.f32.mrb[0].mxu0
    %v4493 = vadd.f32 %v4348, %v4492
    %v4494 = vpop.f32.mrb[0].mxu0
    %4495 = vmatprep.mubr.bf16.mxu0 0
    %4496 = vmatmul.mubr.bf16.gmra.mrb[0].mxu0 %v4257
    %v4497 = vpop.f32.mrb[0].mxu0
    %v4498 = vadd.f32 %v4353, %v4497
    %v4499 = vpop.f32.mrb[0].mxu0
    %v4500 = vpop.f32.mrb[0].mxu0
    %v4501 = vadd.f32 %v4356, %v4500
    %v4502 = vpop.f32.mrb[0].mxu0
    %4503 = vmatprep.mubr.bf16.mxu0 0
    %4504 = vmatmul.mubr.bf16.gmra.mrb[0].mxu0 %v4260
    %v4505 = vpop.f32.mrb[0].mxu0
    %v4506 = vadd.f32 %v4361, %v4505
    %v4507 = vpop.f32.mrb[0].mxu0
    %v4508 = vpop.f32.mrb[0].mxu0
    %v4509 = vadd.f32 %v4364, %v4508
    %v4510 = vpop.f32.mrb[0].mxu0
    %4511 = vmatprep.mubr.bf16.mxu0 0
    %4512 = vmatmul.mubr.bf16.gmra.mrb[0].mxu0 %v4263
    %v4513 = vpop.f32.mrb[0].mxu0
    %v4514 = vadd.f32 %v4369, %v4513
    %v4515 = vpop.f32.mrb[0].mxu0
    %v4516 = vpop.f32.mrb[0].mxu0
    %v4517 = vadd.f32 %v4372, %v4516
    %v4518 = vpop.f32.mrb[0].mxu0
    %4519 = vmatprep.mubr.bf16.mxu0 0
    %4520 = vmatmul.mubr.bf16.gmra.mrb[0].mxu0 %v4266
    %v4521 = vpop.f32.mrb[0].mxu0
    %v4522 = vadd.f32 %v4377, %v4521
    %v4523 = vpop.f32.mrb[0].mxu0
    %v4524 = vpop.f32.mrb[0].mxu0
    %v4525 = vadd.f32 %v4380, %v4524
    %v4526 = vpop.f32.mrb[0].mxu0
    %4527 = vmatprep.mubr.bf16.mxu0 0
    %4528 = vmatmul.mubr.bf16.gmra.mrb[0].mxu0 %v4269
    %v4529 = vpop.f32.mrb[0].mxu0
    %v4530 = vadd.f32 %v4385, %v4529
    %v4531 = vpop.f32.mrb[0].mxu0
    %v4532 = vpop.f32.mrb[0].mxu0
    %v4533 = vadd.f32 %v4388, %v4532
    %v4534 = vpop.f32.mrb[0].mxu0
    %4535 = vmatprep.mubr.bf16.mxu0 0
    %4536 = vmatmul.mubr.bf16.gmra.mrb[0].mxu0 %v4272
    %v4537 = vpop.f32.mrb[0].mxu0
    %v4538 = vadd.f32 %v4393, %v4537
    %v4539 = vpop.f32.mrb[0].mxu0
    %v4540 = vpop.f32.mrb[0].mxu0
    %v4541 = vadd.f32 %v4396, %v4540
    %v4542 = vpop.f32.mrb[0].mxu0
    %4543 = vmatprep.mubr.bf16.mxu0 0
    %4544 = vmatmul.mubr.bf16.gmra.mrb[0].mxu0 %v4275
    %v4545 = vpop.f32.mrb[0].mxu0
    %v4546 = vadd.f32 %v4401, %v4545
    %v4547 = vpop.f32.mrb[0].mxu0
    %v4548 = vpop.f32.mrb[0].mxu0
    %v4549 = vadd.f32 %v4404, %v4548
    %v4550 = vpop.f32.mrb[0].mxu0
    %4551 = vmatprep.mubr.bf16.mxu0 0
    %4552 = vmatmul.mubr.bf16.gmra.mrb[0].mxu0 %v4278
    %v4553 = vpop.f32.mrb[0].mxu0
    %v4554 = vadd.f32 %v4409, %v4553
    %v4555 = vpop.f32.mrb[0].mxu0
    %v4556 = vpop.f32.mrb[0].mxu0
    %v4557 = vadd.f32 %v4412, %v4556
    %v4558 = vpop.f32.mrb[0].mxu0
    %4559 = vmatprep.mubr.bf16.mxu0 0
    %4560 = vmatmul.mubr.bf16.gmra.mrb[0].mxu0 %v4281
    %v4561 = vpop.f32.mrb[0].mxu0
    %v4562 = vadd.f32 %v4417, %v4561
    %v4563 = vpop.f32.mrb[0].mxu0
    %v4564 = vpop.f32.mrb[0].mxu0
    %v4565 = vadd.f32 %v4420, %v4564
    %v4566 = vpop.f32.mrb[0].mxu0
    %4567 = vmatprep.mubr.bf16.mxu0 0
    %4568 = vmatmul.mubr.bf16.gmra.mrb[0].mxu0 %v4284
    %v4569 = vpop.f32.mrb[0].mxu0
    %v4570 = vadd.f32 %v4425, %v4569
    %v4571 = vpop.f32.mrb[0].mxu0
    %v4572 = vpop.f32.mrb[0].mxu0
    %v4573 = vadd.f32 %v4428, %v4572
    %v4574 = vpop.f32.mrb[0].mxu0
    %4575 = vdwg.mxu0
    %v4576 = vmax.f32 %v4466, 0.0
    %v4577 = vmax.f32 %v4469, 0.0
    %v4578 = vmax.f32 %v4474, 0.0
    %v4579 = vmax.f32 %v4477, 0.0
    %v4580 = vmax.f32 %v4482, 0.0
    %v4581 = vmax.f32 %v4485, 0.0
    %v4582 = vmax.f32 %v4490, 0.0
    %v4583 = vmax.f32 %v4493, 0.0
    %v4584 = vmax.f32 %v4498, 0.0
    %v4585 = vmax.f32 %v4501, 0.0
    %v4586 = vmax.f32 %v4506, 0.0
    %v4587 = vmax.f32 %v4509, 0.0
    %v4588 = vmax.f32 %v4514, 0.0
    %v4589 = vmax.f32 %v4517, 0.0
    %v4590 = vmax.f32 %v4522, 0.0
    %v4591 = vmax.f32 %v4525, 0.0
    %v4592 = vmax.f32 %v4530, 0.0
    %v4593 = vmax.f32 %v4533, 0.0
    %v4594 = vmax.f32 %v4538, 0.0
    %v4595 = vmax.f32 %v4541, 0.0
    %v4596 = vmax.f32 %v4546, 0.0
    %v4597 = vmax.f32 %v4549, 0.0
    %v4598 = vmax.f32 %v4554, 0.0
    %v4599 = vmax.f32 %v4557, 0.0
    %v4600 = vmax.f32 %v4562, 0.0
    %v4601 = vmax.f32 %v4565, 0.0
    %v4602 = vmax.f32 %v4570, 0.0
    %v4603 = vmax.f32 %v4573, 0.0
    %v4632 = vcombine.high %v4576, %v4576
    %v4634 = vunpack.c.l.s4 1983009808
    %v4635 = vunpack.c.0.s8 %v4634
    %v4636 = vlaneseq
    %v4637 = vshrl.u32 %v4636, 7
    %v4638 = vsub.s32 %v4635, %v4637
    %v4639 = vrot.slane %v4576, %v4638
    %v4641 = vunpack.c.l.s4 1983009808
    %v4642 = vunpack.c.0.s8 %v4641
    %v4643 = vlaneseq
    %v4644 = vshrl.u32 %v4643, 7
    %v4645 = vsub.s32 %v4642, %v4644
    %v4646 = vrot.slane %v4632, %v4645
    %v4647 = vcombine.high %v4639, %v4639
    %v4648 = vcombine.high %v4646, %v4646
    %v4649 = vcombine.high %v4577, %v4577
    %v4651 = vunpack.c.l.s4 1983009808
    %v4652 = vunpack.c.0.s8 %v4651
    %v4653 = vlaneseq
    %v4654 = vshrl.u32 %v4653, 7
    %v4655 = vsub.s32 %v4652, %v4654
    %v4656 = vrot.slane %v4577, %v4655
    %v4658 = vunpack.c.l.s4 1983009808
    %v4659 = vunpack.c.0.s8 %v4658
    %v4660 = vlaneseq
    %v4661 = vshrl.u32 %v4660, 7
    %v4662 = vsub.s32 %v4659, %v4661
    %v4663 = vrot.slane %v4649, %v4662
    %v4664 = vcombine.high %v4656, %v4656
    %v4665 = vcombine.high %v4663, %v4663
    %v4666 = vcombine.high %v4578, %v4578
    %v4668 = vunpack.c.l.s4 1983009808
    %v4669 = vunpack.c.0.s8 %v4668
    %v4670 = vlaneseq
    %v4671 = vshrl.u32 %v4670, 7
    %v4672 = vsub.s32 %v4669, %v4671
    %v4673 = vrot.slane %v4578, %v4672
    %v4675 = vunpack.c.l.s4 1983009808
    %v4676 = vunpack.c.0.s8 %v4675
    %v4677 = vlaneseq
    %v4678 = vshrl.u32 %v4677, 7
    %v4679 = vsub.s32 %v4676, %v4678
    %v4680 = vrot.slane %v4666, %v4679
    %v4681 = vcombine.high %v4673, %v4673
    %v4682 = vcombine.high %v4680, %v4680
    %v4683 = vcombine.high %v4579, %v4579
    %v4685 = vunpack.c.l.s4 1983009808
    %v4686 = vunpack.c.0.s8 %v4685
    %v4687 = vlaneseq
    %v4688 = vshrl.u32 %v4687, 7
    %v4689 = vsub.s32 %v4686, %v4688
    %v4690 = vrot.slane %v4579, %v4689
    %v4692 = vunpack.c.l.s4 1983009808
    %v4693 = vunpack.c.0.s8 %v4692
    %v4694 = vlaneseq
    %v4695 = vshrl.u32 %v4694, 7
    %v4696 = vsub.s32 %v4693, %v4695
    %v4697 = vrot.slane %v4683, %v4696
    %v4698 = vcombine.high %v4690, %v4690
    %v4699 = vcombine.high %v4697, %v4697
    %v4700 = vcombine.high %v4580, %v4580
    %v4702 = vunpack.c.l.s4 1983009808
    %v4703 = vunpack.c.0.s8 %v4702
    %v4704 = vlaneseq
    %v4705 = vshrl.u32 %v4704, 7
    %v4706 = vsub.s32 %v4703, %v4705
    %v4707 = vrot.slane %v4580, %v4706
    %v4709 = vunpack.c.l.s4 1983009808
    %v4710 = vunpack.c.0.s8 %v4709
    %v4711 = vlaneseq
    %v4712 = vshrl.u32 %v4711, 7
    %v4713 = vsub.s32 %v4710, %v4712
    %v4714 = vrot.slane %v4700, %v4713
    %v4715 = vcombine.high %v4707, %v4707
    %v4716 = vcombine.high %v4714, %v4714
    %v4717 = vcombine.high %v4581, %v4581
    %v4719 = vunpack.c.l.s4 1983009808
    %v4720 = vunpack.c.0.s8 %v4719
    %v4721 = vlaneseq
    %v4722 = vshrl.u32 %v4721, 7
    %v4723 = vsub.s32 %v4720, %v4722
    %v4724 = vrot.slane %v4581, %v4723
    %v4726 = vunpack.c.l.s4 1983009808
    %v4727 = vunpack.c.0.s8 %v4726
    %v4728 = vlaneseq
    %v4729 = vshrl.u32 %v4728, 7
    %v4730 = vsub.s32 %v4727, %v4729
    %v4731 = vrot.slane %v4717, %v4730
    %v4732 = vcombine.high %v4724, %v4724
    %v4733 = vcombine.high %v4731, %v4731
    %v4734 = vcombine.high %v4582, %v4582
    %v4736 = vunpack.c.l.s4 1983009808
    %v4737 = vunpack.c.0.s8 %v4736
    %v4738 = vlaneseq
    %v4739 = vshrl.u32 %v4738, 7
    %v4740 = vsub.s32 %v4737, %v4739
    %v4741 = vrot.slane %v4582, %v4740
    %v4743 = vunpack.c.l.s4 1983009808
    %v4744 = vunpack.c.0.s8 %v4743
    %v4745 = vlaneseq
    %v4746 = vshrl.u32 %v4745, 7
    %v4747 = vsub.s32 %v4744, %v4746
    %v4748 = vrot.slane %v4734, %v4747
    %v4749 = vcombine.high %v4741, %v4741
    %v4750 = vcombine.high %v4748, %v4748
    %v4751 = vcombine.high %v4583, %v4583
    %v4753 = vunpack.c.l.s4 1983009808
    %v4754 = vunpack.c.0.s8 %v4753
    %v4755 = vlaneseq
    %v4756 = vshrl.u32 %v4755, 7
    %v4757 = vsub.s32 %v4754, %v4756
    %v4758 = vrot.slane %v4583, %v4757
    %v4760 = vunpack.c.l.s4 1983009808
    %v4761 = vunpack.c.0.s8 %v4760
    %v4762 = vlaneseq
    %v4763 = vshrl.u32 %v4762, 7
    %v4764 = vsub.s32 %v4761, %v4763
    %v4765 = vrot.slane %v4751, %v4764
    %v4766 = vcombine.high %v4758, %v4758
    %v4767 = vcombine.high %v4765, %v4765
    %v4768 = vcombine.high %v4584, %v4584
    %v4770 = vunpack.c.l.s4 1983009808
    %v4771 = vunpack.c.0.s8 %v4770
    %v4772 = vlaneseq
    %v4773 = vshrl.u32 %v4772, 7
    %v4774 = vsub.s32 %v4771, %v4773
    %v4775 = vrot.slane %v4584, %v4774
    %v4777 = vunpack.c.l.s4 1983009808
    %v4778 = vunpack.c.0.s8 %v4777
    %v4779 = vlaneseq
    %v4780 = vshrl.u32 %v4779, 7
    %v4781 = vsub.s32 %v4778, %v4780
    %v4782 = vrot.slane %v4768, %v4781
    %v4783 = vcombine.high %v4775, %v4775
    %v4784 = vcombine.high %v4782, %v4782
    %v4785 = vcombine.high %v4585, %v4585
    %v4787 = vunpack.c.l.s4 1983009808
    %v4788 = vunpack.c.0.s8 %v4787
    %v4789 = vlaneseq
    %v4790 = vshrl.u32 %v4789, 7
    %v4791 = vsub.s32 %v4788, %v4790
    %v4792 = vrot.slane %v4585, %v4791
    %v4794 = vunpack.c.l.s4 1983009808
    %v4795 = vunpack.c.0.s8 %v4794
    %v4796 = vlaneseq
    %v4797 = vshrl.u32 %v4796, 7
    %v4798 = vsub.s32 %v4795, %v4797
    %v4799 = vrot.slane %v4785, %v4798
    %v4800 = vcombine.high %v4792, %v4792
    %v4801 = vcombine.high %v4799, %v4799
    %v4802 = vcombine.high %v4586, %v4586
    %v4804 = vunpack.c.l.s4 1983009808
    %v4805 = vunpack.c.0.s8 %v4804
    %v4806 = vlaneseq
    %v4807 = vshrl.u32 %v4806, 7
    %v4808 = vsub.s32 %v4805, %v4807
    %v4809 = vrot.slane %v4586, %v4808
    %v4811 = vunpack.c.l.s4 1983009808
    %v4812 = vunpack.c.0.s8 %v4811
    %v4813 = vlaneseq
    %v4814 = vshrl.u32 %v4813, 7
    %v4815 = vsub.s32 %v4812, %v4814
    %v4816 = vrot.slane %v4802, %v4815
    %v4817 = vcombine.high %v4809, %v4809
    %v4818 = vcombine.high %v4816, %v4816
    %v4819 = vcombine.high %v4587, %v4587
    %v4821 = vunpack.c.l.s4 1983009808
    %v4822 = vunpack.c.0.s8 %v4821
    %v4823 = vlaneseq
    %v4824 = vshrl.u32 %v4823, 7
    %v4825 = vsub.s32 %v4822, %v4824
    %v4826 = vrot.slane %v4587, %v4825
    %v4828 = vunpack.c.l.s4 1983009808
    %v4829 = vunpack.c.0.s8 %v4828
    %v4830 = vlaneseq
    %v4831 = vshrl.u32 %v4830, 7
    %v4832 = vsub.s32 %v4829, %v4831
    %v4833 = vrot.slane %v4819, %v4832
    %v4834 = vcombine.high %v4826, %v4826
    %v4835 = vcombine.high %v4833, %v4833
    %v4836 = vcombine.high %v4588, %v4588
    %v4838 = vunpack.c.l.s4 1983009808
    %v4839 = vunpack.c.0.s8 %v4838
    %v4840 = vlaneseq
    %v4841 = vshrl.u32 %v4840, 7
    %v4842 = vsub.s32 %v4839, %v4841
    %v4843 = vrot.slane %v4588, %v4842
    %v4845 = vunpack.c.l.s4 1983009808
    %v4846 = vunpack.c.0.s8 %v4845
    %v4847 = vlaneseq
    %v4848 = vshrl.u32 %v4847, 7
    %v4849 = vsub.s32 %v4846, %v4848
    %v4850 = vrot.slane %v4836, %v4849
    %v4851 = vcombine.high %v4843, %v4843
    %v4852 = vcombine.high %v4850, %v4850
    %v4853 = vcombine.high %v4589, %v4589
    %v4855 = vunpack.c.l.s4 1983009808
    %v4856 = vunpack.c.0.s8 %v4855
    %v4857 = vlaneseq
    %v4858 = vshrl.u32 %v4857, 7
    %v4859 = vsub.s32 %v4856, %v4858
    %v4860 = vrot.slane %v4589, %v4859
    %v4862 = vunpack.c.l.s4 1983009808
    %v4863 = vunpack.c.0.s8 %v4862
    %v4864 = vlaneseq
    %v4865 = vshrl.u32 %v4864, 7
    %v4866 = vsub.s32 %v4863, %v4865
    %v4867 = vrot.slane %v4853, %v4866
    %v4868 = vcombine.high %v4860, %v4860
    %v4869 = vcombine.high %v4867, %v4867
    %v4870 = vcombine.high %v4590, %v4590
    %v4872 = vunpack.c.l.s4 1983009808
    %v4873 = vunpack.c.0.s8 %v4872
    %v4874 = vlaneseq
    %v4875 = vshrl.u32 %v4874, 7
    %v4876 = vsub.s32 %v4873, %v4875
    %v4877 = vrot.slane %v4590, %v4876
    %v4879 = vunpack.c.l.s4 1983009808
    %v4880 = vunpack.c.0.s8 %v4879
    %v4881 = vlaneseq
    %v4882 = vshrl.u32 %v4881, 7
    %v4883 = vsub.s32 %v4880, %v4882
    %v4884 = vrot.slane %v4870, %v4883
    %v4885 = vcombine.high %v4877, %v4877
    %v4886 = vcombine.high %v4884, %v4884
    %v4887 = vcombine.high %v4591, %v4591
    %v4889 = vunpack.c.l.s4 1983009808
    %v4890 = vunpack.c.0.s8 %v4889
    %v4891 = vlaneseq
    %v4892 = vshrl.u32 %v4891, 7
    %v4893 = vsub.s32 %v4890, %v4892
    %v4894 = vrot.slane %v4591, %v4893
    %v4896 = vunpack.c.l.s4 1983009808
    %v4897 = vunpack.c.0.s8 %v4896
    %v4898 = vlaneseq
    %v4899 = vshrl.u32 %v4898, 7
    %v4900 = vsub.s32 %v4897, %v4899
    %v4901 = vrot.slane %v4887, %v4900
    %v4902 = vcombine.high %v4894, %v4894
    %v4903 = vcombine.high %v4901, %v4901
    %v4904 = vcombine.high %v4592, %v4592
    %v4906 = vunpack.c.l.s4 1983009808
    %v4907 = vunpack.c.0.s8 %v4906
    %v4908 = vlaneseq
    %v4909 = vshrl.u32 %v4908, 7
    %v4910 = vsub.s32 %v4907, %v4909
    %v4911 = vrot.slane %v4592, %v4910
    %v4913 = vunpack.c.l.s4 1983009808
    %v4914 = vunpack.c.0.s8 %v4913
    %v4915 = vlaneseq
    %v4916 = vshrl.u32 %v4915, 7
    %v4917 = vsub.s32 %v4914, %v4916
    %v4918 = vrot.slane %v4904, %v4917
    %v4919 = vcombine.high %v4911, %v4911
    %v4920 = vcombine.high %v4918, %v4918
    %v4921 = vcombine.high %v4593, %v4593
    %v4923 = vunpack.c.l.s4 1983009808
    %v4924 = vunpack.c.0.s8 %v4923
    %v4925 = vlaneseq
    %v4926 = vshrl.u32 %v4925, 7
    %v4927 = vsub.s32 %v4924, %v4926
    %v4928 = vrot.slane %v4593, %v4927
    %v4930 = vunpack.c.l.s4 1983009808
    %v4931 = vunpack.c.0.s8 %v4930
    %v4932 = vlaneseq
    %v4933 = vshrl.u32 %v4932, 7
    %v4934 = vsub.s32 %v4931, %v4933
    %v4935 = vrot.slane %v4921, %v4934
    %v4936 = vcombine.high %v4928, %v4928
    %v4937 = vcombine.high %v4935, %v4935
    %v4938 = vcombine.high %v4594, %v4594
    %v4940 = vunpack.c.l.s4 1983009808
    %v4941 = vunpack.c.0.s8 %v4940
    %v4942 = vlaneseq
    %v4943 = vshrl.u32 %v4942, 7
    %v4944 = vsub.s32 %v4941, %v4943
    %v4945 = vrot.slane %v4594, %v4944
    %v4947 = vunpack.c.l.s4 1983009808
    %v4948 = vunpack.c.0.s8 %v4947
    %v4949 = vlaneseq
    %v4950 = vshrl.u32 %v4949, 7
    %v4951 = vsub.s32 %v4948, %v4950
    %v4952 = vrot.slane %v4938, %v4951
    %v4953 = vcombine.high %v4945, %v4945
    %v4954 = vcombine.high %v4952, %v4952
    %v4955 = vcombine.high %v4595, %v4595
    %v4957 = vunpack.c.l.s4 1983009808
    %v4958 = vunpack.c.0.s8 %v4957
    %v4959 = vlaneseq
    %v4960 = vshrl.u32 %v4959, 7
    %v4961 = vsub.s32 %v4958, %v4960
    %v4962 = vrot.slane %v4595, %v4961
    %v4964 = vunpack.c.l.s4 1983009808
    %v4965 = vunpack.c.0.s8 %v4964
    %v4966 = vlaneseq
    %v4967 = vshrl.u32 %v4966, 7
    %v4968 = vsub.s32 %v4965, %v4967
    %v4969 = vrot.slane %v4955, %v4968
    %v4970 = vcombine.high %v4962, %v4962
    %v4971 = vcombine.high %v4969, %v4969
    %v4972 = vcombine.high %v4596, %v4596
    %v4974 = vunpack.c.l.s4 1983009808
    %v4975 = vunpack.c.0.s8 %v4974
    %v4976 = vlaneseq
    %v4977 = vshrl.u32 %v4976, 7
    %v4978 = vsub.s32 %v4975, %v4977
    %v4979 = vrot.slane %v4596, %v4978
    %v4981 = vunpack.c.l.s4 1983009808
    %v4982 = vunpack.c.0.s8 %v4981
    %v4983 = vlaneseq
    %v4984 = vshrl.u32 %v4983, 7
    %v4985 = vsub.s32 %v4982, %v4984
    %v4986 = vrot.slane %v4972, %v4985
    %v4987 = vcombine.high %v4979, %v4979
    %v4988 = vcombine.high %v4986, %v4986
    %v4989 = vcombine.high %v4597, %v4597
    %v4991 = vunpack.c.l.s4 1983009808
    %v4992 = vunpack.c.0.s8 %v4991
    %v4993 = vlaneseq
    %v4994 = vshrl.u32 %v4993, 7
    %v4995 = vsub.s32 %v4992, %v4994
    %v4996 = vrot.slane %v4597, %v4995
    %v4998 = vunpack.c.l.s4 1983009808
    %v4999 = vunpack.c.0.s8 %v4998
    %v5000 = vlaneseq
    %v5001 = vshrl.u32 %v5000, 7
    %v5002 = vsub.s32 %v4999, %v5001
    %v5003 = vrot.slane %v4989, %v5002
    %v5004 = vcombine.high %v4996, %v4996
    %v5005 = vcombine.high %v5003, %v5003
    %v5006 = vcombine.high %v4598, %v4598
    %v5008 = vunpack.c.l.s4 1983009808
    %v5009 = vunpack.c.0.s8 %v5008
    %v5010 = vlaneseq
    %v5011 = vshrl.u32 %v5010, 7
    %v5012 = vsub.s32 %v5009, %v5011
    %v5013 = vrot.slane %v4598, %v5012
    %v5015 = vunpack.c.l.s4 1983009808
    %v5016 = vunpack.c.0.s8 %v5015
    %v5017 = vlaneseq
    %v5018 = vshrl.u32 %v5017, 7
    %v5019 = vsub.s32 %v5016, %v5018
    %v5020 = vrot.slane %v5006, %v5019
    %v5021 = vcombine.high %v5013, %v5013
    %v5022 = vcombine.high %v5020, %v5020
    %v5023 = vcombine.high %v4599, %v4599
    %v5025 = vunpack.c.l.s4 1983009808
    %v5026 = vunpack.c.0.s8 %v5025
    %v5027 = vlaneseq
    %v5028 = vshrl.u32 %v5027, 7
    %v5029 = vsub.s32 %v5026, %v5028
    %v5030 = vrot.slane %v4599, %v5029
    %v5032 = vunpack.c.l.s4 1983009808
    %v5033 = vunpack.c.0.s8 %v5032
    %v5034 = vlaneseq
    %v5035 = vshrl.u32 %v5034, 7
    %v5036 = vsub.s32 %v5033, %v5035
    %v5037 = vrot.slane %v5023, %v5036
    %v5038 = vcombine.high %v5030, %v5030
    %v5039 = vcombine.high %v5037, %v5037
    %v5040 = vcombine.high %v4600, %v4600
    %v5042 = vunpack.c.l.s4 1983009808
    %v5043 = vunpack.c.0.s8 %v5042
    %v5044 = vlaneseq
    %v5045 = vshrl.u32 %v5044, 7
    %v5046 = vsub.s32 %v5043, %v5045
    %v5047 = vrot.slane %v4600, %v5046
    %v5049 = vunpack.c.l.s4 1983009808
    %v5050 = vunpack.c.0.s8 %v5049
    %v5051 = vlaneseq
    %v5052 = vshrl.u32 %v5051, 7
    %v5053 = vsub.s32 %v5050, %v5052
    %v5054 = vrot.slane %v5040, %v5053
    %v5055 = vcombine.high %v5047, %v5047
    %v5056 = vcombine.high %v5054, %v5054
    %v5057 = vcombine.high %v4601, %v4601
    %v5059 = vunpack.c.l.s4 1983009808
    %v5060 = vunpack.c.0.s8 %v5059
    %v5061 = vlaneseq
    %v5062 = vshrl.u32 %v5061, 7
    %v5063 = vsub.s32 %v5060, %v5062
    %v5064 = vrot.slane %v4601, %v5063
    %v5066 = vunpack.c.l.s4 1983009808
    %v5067 = vunpack.c.0.s8 %v5066
    %v5068 = vlaneseq
    %v5069 = vshrl.u32 %v5068, 7
    %v5070 = vsub.s32 %v5067, %v5069
    %v5071 = vrot.slane %v5057, %v5070
    %v5072 = vcombine.high %v5064, %v5064
    %v5073 = vcombine.high %v5071, %v5071
    %v5074 = vcombine.high %v4602, %v4602
    %v5076 = vunpack.c.l.s4 1983009808
    %v5077 = vunpack.c.0.s8 %v5076
    %v5078 = vlaneseq
    %v5079 = vshrl.u32 %v5078, 7
    %v5080 = vsub.s32 %v5077, %v5079
    %v5081 = vrot.slane %v4602, %v5080
    %v5083 = vunpack.c.l.s4 1983009808
    %v5084 = vunpack.c.0.s8 %v5083
    %v5085 = vlaneseq
    %v5086 = vshrl.u32 %v5085, 7
    %v5087 = vsub.s32 %v5084, %v5086
    %v5088 = vrot.slane %v5074, %v5087
    %v5089 = vcombine.high %v5081, %v5081
    %v5090 = vcombine.high %v5088, %v5088
    %v5091 = vcombine.high %v4603, %v4603
    %v5093 = vunpack.c.l.s4 1983009808
    %v5094 = vunpack.c.0.s8 %v5093
    %v5095 = vlaneseq
    %v5096 = vshrl.u32 %v5095, 7
    %v5097 = vsub.s32 %v5094, %v5096
    %v5098 = vrot.slane %v4603, %v5097
    %v5100 = vunpack.c.l.s4 1983009808
    %v5101 = vunpack.c.0.s8 %v5100
    %v5102 = vlaneseq
    %v5103 = vshrl.u32 %v5102, 7
    %v5104 = vsub.s32 %v5101, %v5103
    %v5105 = vrot.slane %v5091, %v5104
    %v5106 = vcombine.high %v5098, %v5098
    %v5107 = vcombine.high %v5105, %v5105
    %v5220 = vld [vmem:[#allocation7] sm:$0xff]
    %v5221 = vld [vmem:[#allocation7 + $0x8] sm:$0x3f]
    %v5224 = vcombine.high %v5220, %v5220
    %v5226 = vunpack.c.l.s4 1983009808
    %v5227 = vunpack.c.0.s8 %v5226
    %v5228 = vlaneseq
    %v5229 = vshrl.u32 %v5228, 7
    %v5230 = vsub.s32 %v5227, %v5229
    %v5231 = vrot.slane %v5220, %v5230
    %v5233 = vunpack.c.l.s4 1983009808
    %v5234 = vunpack.c.0.s8 %v5233
    %v5235 = vlaneseq
    %v5236 = vshrl.u32 %v5235, 7
    %v5237 = vsub.s32 %v5234, %v5236
    %v5238 = vrot.slane %v5224, %v5237
    %v5239 = vcombine.high %v5231, %v5231
    %v5240 = vcombine.high %v5238, %v5238
    %v5241 = vcombine.high %v5221, %v5221
    %v5243 = vunpack.c.l.s4 1983009808
    %v5244 = vunpack.c.0.s8 %v5243
    %v5245 = vlaneseq
    %v5246 = vshrl.u32 %v5245, 7
    %v5247 = vsub.s32 %v5244, %v5246
    %v5248 = vrot.slane %v5221, %v5247
    %v5250 = vunpack.c.l.s4 1983009808
    %v5251 = vunpack.c.0.s8 %v5250
    %v5252 = vlaneseq
    %v5253 = vshrl.u32 %v5252, 7
    %v5254 = vsub.s32 %v5251, %v5253
    %v5255 = vrot.slane %v5241, %v5254
    %v5256 = vcombine.high %v5248, %v5248
    %v5264 = vmul.f32 %v4639, %v5231
    %v5265 = vmul.f32 %v4647, %v5239
    %v5266 = vmul.f32 %v4646, %v5238
    %v5267 = vmul.f32 %v4648, %v5240
    %v5268 = vmul.f32 %v4656, %v5248
    %v5269 = vmul.f32 %v4664, %v5256
    %v5270 = vmul.f32 %v4663, %v5255
    %v5271 = vmul.f32 %v4665, %v5231
    %v5272 = vmul.f32 %v4673, %v5239
    %v5273 = vmul.f32 %v4681, %v5238
    %v5274 = vmul.f32 %v4680, %v5240
    %v5275 = vmul.f32 %v4682, %v5248
    %v5276 = vmul.f32 %v4690, %v5256
    %v5277 = vmul.f32 %v4698, %v5255
    %v5278 = vmul.f32 %v4697, %v5231
    %v5279 = vmul.f32 %v4699, %v5239
    %v5280 = vmul.f32 %v4707, %v5238
    %v5281 = vmul.f32 %v4715, %v5240
    %v5282 = vmul.f32 %v4714, %v5248
    %v5283 = vmul.f32 %v4716, %v5256
    %v5284 = vmul.f32 %v4724, %v5255
    %v5285 = vmul.f32 %v4732, %v5231
    %v5286 = vmul.f32 %v4731, %v5239
    %v5287 = vmul.f32 %v4733, %v5238
    %v5288 = vmul.f32 %v4741, %v5240
    %v5289 = vmul.f32 %v4749, %v5248
    %v5290 = vmul.f32 %v4748, %v5256
    %v5291 = vmul.f32 %v4750, %v5255
    %v5292 = vmul.f32 %v4758, %v5231
    %v5293 = vmul.f32 %v4766, %v5239
    %v5294 = vmul.f32 %v4765, %v5238
    %v5295 = vmul.f32 %v4767, %v5240
    %v5296 = vmul.f32 %v4775, %v5248
    %v5297 = vmul.f32 %v4783, %v5256
    %v5298 = vmul.f32 %v4782, %v5255
    %v5299 = vmul.f32 %v4784, %v5231
    %v5300 = vmul.f32 %v4792, %v5239
    %v5301 = vmul.f32 %v4800, %v5238
    %v5302 = vmul.f32 %v4799, %v5240
    %v5303 = vmul.f32 %v4801, %v5248
    %v5304 = vmul.f32 %v4809, %v5256
    %v5305 = vmul.f32 %v4817, %v5255
    %v5306 = vmul.f32 %v4816, %v5231
    %v5307 = vmul.f32 %v4818, %v5239
    %v5308 = vmul.f32 %v4826, %v5238
    %v5309 = vmul.f32 %v4834, %v5240
    %v5310 = vmul.f32 %v4833, %v5248
    %v5311 = vmul.f32 %v4835, %v5256
    %v5312 = vmul.f32 %v4843, %v5255
    %v5313 = vmul.f32 %v4851, %v5231
    %v5314 = vmul.f32 %v4850, %v5239
    %v5315 = vmul.f32 %v4852, %v5238
    %v5316 = vmul.f32 %v4860, %v5240
    %v5317 = vmul.f32 %v4868, %v5248
    %v5318 = vmul.f32 %v4867, %v5256
    %v5319 = vmul.f32 %v4869, %v5255
    %v5320 = vmul.f32 %v4877, %v5231
    %v5321 = vmul.f32 %v4885, %v5239
    %v5322 = vmul.f32 %v4884, %v5238
    %v5323 = vmul.f32 %v4886, %v5240
    %v5324 = vmul.f32 %v4894, %v5248
    %v5325 = vmul.f32 %v4902, %v5256
    %v5326 = vmul.f32 %v4901, %v5255
    %v5327 = vmul.f32 %v4903, %v5231
    %v5328 = vmul.f32 %v4911, %v5239
    %v5329 = vmul.f32 %v4919, %v5238
    %v5330 = vmul.f32 %v4918, %v5240
    %v5331 = vmul.f32 %v4920, %v5248
    %v5332 = vmul.f32 %v4928, %v5256
    %v5333 = vmul.f32 %v4936, %v5255
    %v5334 = vmul.f32 %v4935, %v5231
    %v5335 = vmul.f32 %v4937, %v5239
    %v5336 = vmul.f32 %v4945, %v5238
    %v5337 = vmul.f32 %v4953, %v5240
    %v5338 = vmul.f32 %v4952, %v5248
    %v5339 = vmul.f32 %v4954, %v5256
    %v5340 = vmul.f32 %v4962, %v5255
    %v5341 = vmul.f32 %v4970, %v5231
    %v5342 = vmul.f32 %v4969, %v5239
    %v5343 = vmul.f32 %v4971, %v5238
    %v5344 = vmul.f32 %v4979, %v5240
    %v5345 = vmul.f32 %v4987, %v5248
    %v5346 = vmul.f32 %v4986, %v5256
    %v5347 = vmul.f32 %v4988, %v5255
    %v5348 = vmul.f32 %v4996, %v5231
    %v5349 = vmul.f32 %v5004, %v5239
    %v5350 = vmul.f32 %v5003, %v5238
    %v5351 = vmul.f32 %v5005, %v5240
    %v5352 = vmul.f32 %v5013, %v5248
    %v5353 = vmul.f32 %v5021, %v5256
    %v5354 = vmul.f32 %v5020, %v5255
    %v5355 = vmul.f32 %v5022, %v5231
    %v5356 = vmul.f32 %v5030, %v5239
    %v5357 = vmul.f32 %v5038, %v5238
    %v5358 = vmul.f32 %v5037, %v5240
    %v5359 = vmul.f32 %v5039, %v5248
    %v5360 = vmul.f32 %v5047, %v5256
    %v5361 = vmul.f32 %v5055, %v5255
    %v5362 = vmul.f32 %v5054, %v5231
    %v5363 = vmul.f32 %v5056, %v5239
    %v5364 = vmul.f32 %v5064, %v5238
    %v5365 = vmul.f32 %v5072, %v5240
    %v5366 = vmul.f32 %v5071, %v5248
    %v5367 = vmul.f32 %v5073, %v5256
    %v5368 = vmul.f32 %v5081, %v5255
    %v5369 = vmul.f32 %v5089, %v5231
    %v5370 = vmul.f32 %v5088, %v5239
    %v5371 = vmul.f32 %v5090, %v5238
    %v5372 = vmul.f32 %v5098, %v5240
    %v5373 = vmul.f32 %v5106, %v5248
    %v5374 = vmul.f32 %v5105, %v5256
    %v5375 = vmul.f32 %v5107, %v5255
    %v5488 = vcombine.low %v5264, %v5265
    %v5489 = vcombine.low %v5266, %v5267
    %v5491 = vunpack.c.l.s4 1983009808
    %v5492 = vunpack.c.0.s8 %v5491
    %v5493 = vlaneseq
    %v5494 = vshrl.u32 %v5493, 7
    %v5495 = vsub.s32 %v5492, %v5494
    %v5496 = vrot.slane %v5488, %v5495
    %v5498 = vunpack.c.l.s4 1983009808
    %v5499 = vunpack.c.0.s8 %v5498
    %v5500 = vlaneseq
    %v5501 = vshrl.u32 %v5500, 7
    %v5502 = vsub.s32 %v5499, %v5501
    %v5503 = vrot.slane %v5489, %v5502
    %v5504 = vcombine.low %v5496, %v5503
    %v5505 = vcombine.low %v5268, %v5269
    %v5507 = vunpack.c.l.s4 1983009808
    %v5508 = vunpack.c.0.s8 %v5507
    %v5509 = vlaneseq
    %v5510 = vshrl.u32 %v5509, 7
    %v5511 = vsub.s32 %v5508, %v5510
    %v5512 = vrot.slane %v5505, %v5511
    %v5514 = vunpack.c.l.s4 1983009808
    %v5515 = vunpack.c.0.s8 %v5514
    %v5516 = vlaneseq
    %v5517 = vshrl.u32 %v5516, 7
    %v5518 = vsub.s32 %v5515, %v5517
    %v5519 = vrot.slane %v5270, %v5518
    %v5520 = vcombine.low %v5512, %v5519
    %v5521 = vcombine.low %v5271, %v5272
    %v5522 = vcombine.low %v5273, %v5274
    %v5524 = vunpack.c.l.s4 1983009808
    %v5525 = vunpack.c.0.s8 %v5524
    %v5526 = vlaneseq
    %v5527 = vshrl.u32 %v5526, 7
    %v5528 = vsub.s32 %v5525, %v5527
    %v5529 = vrot.slane %v5521, %v5528
    %v5531 = vunpack.c.l.s4 1983009808
    %v5532 = vunpack.c.0.s8 %v5531
    %v5533 = vlaneseq
    %v5534 = vshrl.u32 %v5533, 7
    %v5535 = vsub.s32 %v5532, %v5534
    %v5536 = vrot.slane %v5522, %v5535
    %v5537 = vcombine.low %v5529, %v5536
    %v5538 = vcombine.low %v5275, %v5276
    %v5540 = vunpack.c.l.s4 1983009808
    %v5541 = vunpack.c.0.s8 %v5540
    %v5542 = vlaneseq
    %v5543 = vshrl.u32 %v5542, 7
    %v5544 = vsub.s32 %v5541, %v5543
    %v5545 = vrot.slane %v5538, %v5544
    %v5547 = vunpack.c.l.s4 1983009808
    %v5548 = vunpack.c.0.s8 %v5547
    %v5549 = vlaneseq
    %v5550 = vshrl.u32 %v5549, 7
    %v5551 = vsub.s32 %v5548, %v5550
    %v5552 = vrot.slane %v5277, %v5551
    %v5553 = vcombine.low %v5545, %v5552
    %v5554 = vcombine.low %v5278, %v5279
    %v5555 = vcombine.low %v5280, %v5281
    %v5557 = vunpack.c.l.s4 1983009808
    %v5558 = vunpack.c.0.s8 %v5557
    %v5559 = vlaneseq
    %v5560 = vshrl.u32 %v5559, 7
    %v5561 = vsub.s32 %v5558, %v5560
    %v5562 = vrot.slane %v5554, %v5561
    %v5564 = vunpack.c.l.s4 1983009808
    %v5565 = vunpack.c.0.s8 %v5564
    %v5566 = vlaneseq
    %v5567 = vshrl.u32 %v5566, 7
    %v5568 = vsub.s32 %v5565, %v5567
    %v5569 = vrot.slane %v5555, %v5568
    %v5570 = vcombine.low %v5562, %v5569
    %v5571 = vcombine.low %v5282, %v5283
    %v5573 = vunpack.c.l.s4 1983009808
    %v5574 = vunpack.c.0.s8 %v5573
    %v5575 = vlaneseq
    %v5576 = vshrl.u32 %v5575, 7
    %v5577 = vsub.s32 %v5574, %v5576
    %v5578 = vrot.slane %v5571, %v5577
    %v5580 = vunpack.c.l.s4 1983009808
    %v5581 = vunpack.c.0.s8 %v5580
    %v5582 = vlaneseq
    %v5583 = vshrl.u32 %v5582, 7
    %v5584 = vsub.s32 %v5581, %v5583
    %v5585 = vrot.slane %v5284, %v5584
    %v5586 = vcombine.low %v5578, %v5585
    %v5587 = vcombine.low %v5285, %v5286
    %v5588 = vcombine.low %v5287, %v5288
    %v5590 = vunpack.c.l.s4 1983009808
    %v5591 = vunpack.c.0.s8 %v5590
    %v5592 = vlaneseq
    %v5593 = vshrl.u32 %v5592, 7
    %v5594 = vsub.s32 %v5591, %v5593
    %v5595 = vrot.slane %v5587, %v5594
    %v5597 = vunpack.c.l.s4 1983009808
    %v5598 = vunpack.c.0.s8 %v5597
    %v5599 = vlaneseq
    %v5600 = vshrl.u32 %v5599, 7
    %v5601 = vsub.s32 %v5598, %v5600
    %v5602 = vrot.slane %v5588, %v5601
    %v5603 = vcombine.low %v5595, %v5602
    %v5604 = vcombine.low %v5289, %v5290
    %v5606 = vunpack.c.l.s4 1983009808
    %v5607 = vunpack.c.0.s8 %v5606
    %v5608 = vlaneseq
    %v5609 = vshrl.u32 %v5608, 7
    %v5610 = vsub.s32 %v5607, %v5609
    %v5611 = vrot.slane %v5604, %v5610
    %v5613 = vunpack.c.l.s4 1983009808
    %v5614 = vunpack.c.0.s8 %v5613
    %v5615 = vlaneseq
    %v5616 = vshrl.u32 %v5615, 7
    %v5617 = vsub.s32 %v5614, %v5616
    %v5618 = vrot.slane %v5291, %v5617
    %v5619 = vcombine.low %v5611, %v5618
    %v5620 = vcombine.low %v5292, %v5293
    %v5621 = vcombine.low %v5294, %v5295
    %v5623 = vunpack.c.l.s4 1983009808
    %v5624 = vunpack.c.0.s8 %v5623
    %v5625 = vlaneseq
    %v5626 = vshrl.u32 %v5625, 7
    %v5627 = vsub.s32 %v5624, %v5626
    %v5628 = vrot.slane %v5620, %v5627
    %v5630 = vunpack.c.l.s4 1983009808
    %v5631 = vunpack.c.0.s8 %v5630
    %v5632 = vlaneseq
    %v5633 = vshrl.u32 %v5632, 7
    %v5634 = vsub.s32 %v5631, %v5633
    %v5635 = vrot.slane %v5621, %v5634
    %v5636 = vcombine.low %v5628, %v5635
    %v5637 = vcombine.low %v5296, %v5297
    %v5639 = vunpack.c.l.s4 1983009808
    %v5640 = vunpack.c.0.s8 %v5639
    %v5641 = vlaneseq
    %v5642 = vshrl.u32 %v5641, 7
    %v5643 = vsub.s32 %v5640, %v5642
    %v5644 = vrot.slane %v5637, %v5643
    %v5646 = vunpack.c.l.s4 1983009808
    %v5647 = vunpack.c.0.s8 %v5646
    %v5648 = vlaneseq
    %v5649 = vshrl.u32 %v5648, 7
    %v5650 = vsub.s32 %v5647, %v5649
    %v5651 = vrot.slane %v5298, %v5650
    %v5652 = vcombine.low %v5644, %v5651
    %v5653 = vcombine.low %v5299, %v5300
    %v5654 = vcombine.low %v5301, %v5302
    %v5656 = vunpack.c.l.s4 1983009808
    %v5657 = vunpack.c.0.s8 %v5656
    %v5658 = vlaneseq
    %v5659 = vshrl.u32 %v5658, 7
    %v5660 = vsub.s32 %v5657, %v5659
    %v5661 = vrot.slane %v5653, %v5660
    %v5663 = vunpack.c.l.s4 1983009808
    %v5664 = vunpack.c.0.s8 %v5663
    %v5665 = vlaneseq
    %v5666 = vshrl.u32 %v5665, 7
    %v5667 = vsub.s32 %v5664, %v5666
    %v5668 = vrot.slane %v5654, %v5667
    %v5669 = vcombine.low %v5661, %v5668
    %v5670 = vcombine.low %v5303, %v5304
    %v5672 = vunpack.c.l.s4 1983009808
    %v5673 = vunpack.c.0.s8 %v5672
    %v5674 = vlaneseq
    %v5675 = vshrl.u32 %v5674, 7
    %v5676 = vsub.s32 %v5673, %v5675
    %v5677 = vrot.slane %v5670, %v5676
    %v5679 = vunpack.c.l.s4 1983009808
    %v5680 = vunpack.c.0.s8 %v5679
    %v5681 = vlaneseq
    %v5682 = vshrl.u32 %v5681, 7
    %v5683 = vsub.s32 %v5680, %v5682
    %v5684 = vrot.slane %v5305, %v5683
    %v5685 = vcombine.low %v5677, %v5684
    %v5686 = vcombine.low %v5306, %v5307
    %v5687 = vcombine.low %v5308, %v5309
    %v5689 = vunpack.c.l.s4 1983009808
    %v5690 = vunpack.c.0.s8 %v5689
    %v5691 = vlaneseq
    %v5692 = vshrl.u32 %v5691, 7
    %v5693 = vsub.s32 %v5690, %v5692
    %v5694 = vrot.slane %v5686, %v5693
    %v5696 = vunpack.c.l.s4 1983009808
    %v5697 = vunpack.c.0.s8 %v5696
    %v5698 = vlaneseq
    %v5699 = vshrl.u32 %v5698, 7
    %v5700 = vsub.s32 %v5697, %v5699
    %v5701 = vrot.slane %v5687, %v5700
    %v5702 = vcombine.low %v5694, %v5701
    %v5703 = vcombine.low %v5310, %v5311
    %v5705 = vunpack.c.l.s4 1983009808
    %v5706 = vunpack.c.0.s8 %v5705
    %v5707 = vlaneseq
    %v5708 = vshrl.u32 %v5707, 7
    %v5709 = vsub.s32 %v5706, %v5708
    %v5710 = vrot.slane %v5703, %v5709
    %v5712 = vunpack.c.l.s4 1983009808
    %v5713 = vunpack.c.0.s8 %v5712
    %v5714 = vlaneseq
    %v5715 = vshrl.u32 %v5714, 7
    %v5716 = vsub.s32 %v5713, %v5715
    %v5717 = vrot.slane %v5312, %v5716
    %v5718 = vcombine.low %v5710, %v5717
    %v5719 = vcombine.low %v5313, %v5314
    %v5720 = vcombine.low %v5315, %v5316
    %v5722 = vunpack.c.l.s4 1983009808
    %v5723 = vunpack.c.0.s8 %v5722
    %v5724 = vlaneseq
    %v5725 = vshrl.u32 %v5724, 7
    %v5726 = vsub.s32 %v5723, %v5725
    %v5727 = vrot.slane %v5719, %v5726
    %v5729 = vunpack.c.l.s4 1983009808
    %v5730 = vunpack.c.0.s8 %v5729
    %v5731 = vlaneseq
    %v5732 = vshrl.u32 %v5731, 7
    %v5733 = vsub.s32 %v5730, %v5732
    %v5734 = vrot.slane %v5720, %v5733
    %v5735 = vcombine.low %v5727, %v5734
    %v5736 = vcombine.low %v5317, %v5318
    %v5738 = vunpack.c.l.s4 1983009808
    %v5739 = vunpack.c.0.s8 %v5738
    %v5740 = vlaneseq
    %v5741 = vshrl.u32 %v5740, 7
    %v5742 = vsub.s32 %v5739, %v5741
    %v5743 = vrot.slane %v5736, %v5742
    %v5745 = vunpack.c.l.s4 1983009808
    %v5746 = vunpack.c.0.s8 %v5745
    %v5747 = vlaneseq
    %v5748 = vshrl.u32 %v5747, 7
    %v5749 = vsub.s32 %v5746, %v5748
    %v5750 = vrot.slane %v5319, %v5749
    %v5751 = vcombine.low %v5743, %v5750
    %v5752 = vcombine.low %v5320, %v5321
    %v5753 = vcombine.low %v5322, %v5323
    %v5755 = vunpack.c.l.s4 1983009808
    %v5756 = vunpack.c.0.s8 %v5755
    %v5757 = vlaneseq
    %v5758 = vshrl.u32 %v5757, 7
    %v5759 = vsub.s32 %v5756, %v5758
    %v5760 = vrot.slane %v5752, %v5759
    %v5762 = vunpack.c.l.s4 1983009808
    %v5763 = vunpack.c.0.s8 %v5762
    %v5764 = vlaneseq
    %v5765 = vshrl.u32 %v5764, 7
    %v5766 = vsub.s32 %v5763, %v5765
    %v5767 = vrot.slane %v5753, %v5766
    %v5768 = vcombine.low %v5760, %v5767
    %v5769 = vcombine.low %v5324, %v5325
    %v5771 = vunpack.c.l.s4 1983009808
    %v5772 = vunpack.c.0.s8 %v5771
    %v5773 = vlaneseq
    %v5774 = vshrl.u32 %v5773, 7
    %v5775 = vsub.s32 %v5772, %v5774
    %v5776 = vrot.slane %v5769, %v5775
    %v5778 = vunpack.c.l.s4 1983009808
    %v5779 = vunpack.c.0.s8 %v5778
    %v5780 = vlaneseq
    %v5781 = vshrl.u32 %v5780, 7
    %v5782 = vsub.s32 %v5779, %v5781
    %v5783 = vrot.slane %v5326, %v5782
    %v5784 = vcombine.low %v5776, %v5783
    %v5785 = vcombine.low %v5327, %v5328
    %v5786 = vcombine.low %v5329, %v5330
    %v5788 = vunpack.c.l.s4 1983009808
    %v5789 = vunpack.c.0.s8 %v5788
    %v5790 = vlaneseq
    %v5791 = vshrl.u32 %v5790, 7
    %v5792 = vsub.s32 %v5789, %v5791
    %v5793 = vrot.slane %v5785, %v5792
    %v5795 = vunpack.c.l.s4 1983009808
    %v5796 = vunpack.c.0.s8 %v5795
    %v5797 = vlaneseq
    %v5798 = vshrl.u32 %v5797, 7
    %v5799 = vsub.s32 %v5796, %v5798
    %v5800 = vrot.slane %v5786, %v5799
    %v5801 = vcombine.low %v5793, %v5800
    %v5802 = vcombine.low %v5331, %v5332
    %v5804 = vunpack.c.l.s4 1983009808
    %v5805 = vunpack.c.0.s8 %v5804
    %v5806 = vlaneseq
    %v5807 = vshrl.u32 %v5806, 7
    %v5808 = vsub.s32 %v5805, %v5807
    %v5809 = vrot.slane %v5802, %v5808
    %v5811 = vunpack.c.l.s4 1983009808
    %v5812 = vunpack.c.0.s8 %v5811
    %v5813 = vlaneseq
    %v5814 = vshrl.u32 %v5813, 7
    %v5815 = vsub.s32 %v5812, %v5814
    %v5816 = vrot.slane %v5333, %v5815
    %v5817 = vcombine.low %v5809, %v5816
    %v5818 = vcombine.low %v5334, %v5335
    %v5819 = vcombine.low %v5336, %v5337
    %v5821 = vunpack.c.l.s4 1983009808
    %v5822 = vunpack.c.0.s8 %v5821
    %v5823 = vlaneseq
    %v5824 = vshrl.u32 %v5823, 7
    %v5825 = vsub.s32 %v5822, %v5824
    %v5826 = vrot.slane %v5818, %v5825
    %v5828 = vunpack.c.l.s4 1983009808
    %v5829 = vunpack.c.0.s8 %v5828
    %v5830 = vlaneseq
    %v5831 = vshrl.u32 %v5830, 7
    %v5832 = vsub.s32 %v5829, %v5831
    %v5833 = vrot.slane %v5819, %v5832
    %v5834 = vcombine.low %v5826, %v5833
    %v5835 = vcombine.low %v5338, %v5339
    %v5837 = vunpack.c.l.s4 1983009808
    %v5838 = vunpack.c.0.s8 %v5837
    %v5839 = vlaneseq
    %v5840 = vshrl.u32 %v5839, 7
    %v5841 = vsub.s32 %v5838, %v5840
    %v5842 = vrot.slane %v5835, %v5841
    %v5844 = vunpack.c.l.s4 1983009808
    %v5845 = vunpack.c.0.s8 %v5844
    %v5846 = vlaneseq
    %v5847 = vshrl.u32 %v5846, 7
    %v5848 = vsub.s32 %v5845, %v5847
    %v5849 = vrot.slane %v5340, %v5848
    %v5850 = vcombine.low %v5842, %v5849
    %v5851 = vcombine.low %v5341, %v5342
    %v5852 = vcombine.low %v5343, %v5344
    %v5854 = vunpack.c.l.s4 1983009808
    %v5855 = vunpack.c.0.s8 %v5854
    %v5856 = vlaneseq
    %v5857 = vshrl.u32 %v5856, 7
    %v5858 = vsub.s32 %v5855, %v5857
    %v5859 = vrot.slane %v5851, %v5858
    %v5861 = vunpack.c.l.s4 1983009808
    %v5862 = vunpack.c.0.s8 %v5861
    %v5863 = vlaneseq
    %v5864 = vshrl.u32 %v5863, 7
    %v5865 = vsub.s32 %v5862, %v5864
    %v5866 = vrot.slane %v5852, %v5865
    %v5867 = vcombine.low %v5859, %v5866
    %v5868 = vcombine.low %v5345, %v5346
    %v5870 = vunpack.c.l.s4 1983009808
    %v5871 = vunpack.c.0.s8 %v5870
    %v5872 = vlaneseq
    %v5873 = vshrl.u32 %v5872, 7
    %v5874 = vsub.s32 %v5871, %v5873
    %v5875 = vrot.slane %v5868, %v5874
    %v5877 = vunpack.c.l.s4 1983009808
    %v5878 = vunpack.c.0.s8 %v5877
    %v5879 = vlaneseq
    %v5880 = vshrl.u32 %v5879, 7
    %v5881 = vsub.s32 %v5878, %v5880
    %v5882 = vrot.slane %v5347, %v5881
    %v5883 = vcombine.low %v5875, %v5882
    %v5884 = vcombine.low %v5348, %v5349
    %v5885 = vcombine.low %v5350, %v5351
    %v5887 = vunpack.c.l.s4 1983009808
    %v5888 = vunpack.c.0.s8 %v5887
    %v5889 = vlaneseq
    %v5890 = vshrl.u32 %v5889, 7
    %v5891 = vsub.s32 %v5888, %v5890
    %v5892 = vrot.slane %v5884, %v5891
    %v5894 = vunpack.c.l.s4 1983009808
    %v5895 = vunpack.c.0.s8 %v5894
    %v5896 = vlaneseq
    %v5897 = vshrl.u32 %v5896, 7
    %v5898 = vsub.s32 %v5895, %v5897
    %v5899 = vrot.slane %v5885, %v5898
    %v5900 = vcombine.low %v5892, %v5899
    %v5901 = vcombine.low %v5352, %v5353
    %v5903 = vunpack.c.l.s4 1983009808
    %v5904 = vunpack.c.0.s8 %v5903
    %v5905 = vlaneseq
    %v5906 = vshrl.u32 %v5905, 7
    %v5907 = vsub.s32 %v5904, %v5906
    %v5908 = vrot.slane %v5901, %v5907
    %v5910 = vunpack.c.l.s4 1983009808
    %v5911 = vunpack.c.0.s8 %v5910
    %v5912 = vlaneseq
    %v5913 = vshrl.u32 %v5912, 7
    %v5914 = vsub.s32 %v5911, %v5913
    %v5915 = vrot.slane %v5354, %v5914
    %v5916 = vcombine.low %v5908, %v5915
    %v5917 = vcombine.low %v5355, %v5356
    %v5918 = vcombine.low %v5357, %v5358
    %v5920 = vunpack.c.l.s4 1983009808
    %v5921 = vunpack.c.0.s8 %v5920
    %v5922 = vlaneseq
    %v5923 = vshrl.u32 %v5922, 7
    %v5924 = vsub.s32 %v5921, %v5923
    %v5925 = vrot.slane %v5917, %v5924
    %v5927 = vunpack.c.l.s4 1983009808
    %v5928 = vunpack.c.0.s8 %v5927
    %v5929 = vlaneseq
    %v5930 = vshrl.u32 %v5929, 7
    %v5931 = vsub.s32 %v5928, %v5930
    %v5932 = vrot.slane %v5918, %v5931
    %v5933 = vcombine.low %v5925, %v5932
    %v5934 = vcombine.low %v5359, %v5360
    %v5936 = vunpack.c.l.s4 1983009808
    %v5937 = vunpack.c.0.s8 %v5936
    %v5938 = vlaneseq
    %v5939 = vshrl.u32 %v5938, 7
    %v5940 = vsub.s32 %v5937, %v5939
    %v5941 = vrot.slane %v5934, %v5940
    %v5943 = vunpack.c.l.s4 1983009808
    %v5944 = vunpack.c.0.s8 %v5943
    %v5945 = vlaneseq
    %v5946 = vshrl.u32 %v5945, 7
    %v5947 = vsub.s32 %v5944, %v5946
    %v5948 = vrot.slane %v5361, %v5947
    %v5949 = vcombine.low %v5941, %v5948
    %v5950 = vcombine.low %v5362, %v5363
    %v5951 = vcombine.low %v5364, %v5365
    %v5953 = vunpack.c.l.s4 1983009808
    %v5954 = vunpack.c.0.s8 %v5953
    %v5955 = vlaneseq
    %v5956 = vshrl.u32 %v5955, 7
    %v5957 = vsub.s32 %v5954, %v5956
    %v5958 = vrot.slane %v5950, %v5957
    %v5960 = vunpack.c.l.s4 1983009808
    %v5961 = vunpack.c.0.s8 %v5960
    %v5962 = vlaneseq
    %v5963 = vshrl.u32 %v5962, 7
    %v5964 = vsub.s32 %v5961, %v5963
    %v5965 = vrot.slane %v5951, %v5964
    %v5966 = vcombine.low %v5958, %v5965
    %v5967 = vcombine.low %v5366, %v5367
    %v5969 = vunpack.c.l.s4 1983009808
    %v5970 = vunpack.c.0.s8 %v5969
    %v5971 = vlaneseq
    %v5972 = vshrl.u32 %v5971, 7
    %v5973 = vsub.s32 %v5970, %v5972
    %v5974 = vrot.slane %v5967, %v5973
    %v5976 = vunpack.c.l.s4 1983009808
    %v5977 = vunpack.c.0.s8 %v5976
    %v5978 = vlaneseq
    %v5979 = vshrl.u32 %v5978, 7
    %v5980 = vsub.s32 %v5977, %v5979
    %v5981 = vrot.slane %v5368, %v5980
    %v5982 = vcombine.low %v5974, %v5981
    %v5983 = vcombine.low %v5369, %v5370
    %v5984 = vcombine.low %v5371, %v5372
    %v5986 = vunpack.c.l.s4 1983009808
    %v5987 = vunpack.c.0.s8 %v5986
    %v5988 = vlaneseq
    %v5989 = vshrl.u32 %v5988, 7
    %v5990 = vsub.s32 %v5987, %v5989
    %v5991 = vrot.slane %v5983, %v5990
    %v5993 = vunpack.c.l.s4 1983009808
    %v5994 = vunpack.c.0.s8 %v5993
    %v5995 = vlaneseq
    %v5996 = vshrl.u32 %v5995, 7
    %v5997 = vsub.s32 %v5994, %v5996
    %v5998 = vrot.slane %v5984, %v5997
    %v5999 = vcombine.low %v5991, %v5998
    %v6000 = vcombine.low %v5373, %v5374
    %v6002 = vunpack.c.l.s4 1983009808
    %v6003 = vunpack.c.0.s8 %v6002
    %v6004 = vlaneseq
    %v6005 = vshrl.u32 %v6004, 7
    %v6006 = vsub.s32 %v6003, %v6005
    %v6007 = vrot.slane %v6000, %v6006
    %v6009 = vunpack.c.l.s4 1983009808
    %v6010 = vunpack.c.0.s8 %v6009
    %v6011 = vlaneseq
    %v6012 = vshrl.u32 %v6011, 7
    %v6013 = vsub.s32 %v6010, %v6012
    %v6014 = vrot.slane %v5375, %v6013
    %v6015 = vcombine.low %v6007, %v6014
    %vm6048 = vcmask 1045504
    %v6049 = vsel %vm6048, %v5520, -inf
    %v6050 = vmax.f32 %v5504, %v6049
    %v6051 = vrot.slane %v6050, 4
    %v6052 = vmax.f32 %v6050, %v6051
    %v6053 = vrot.slane %v6052, 2
    %v6054 = vmax.f32 %v6052, %v6053
    %v6055 = vrot.slane %v6054, 1
    %v6056 = vmax.f32 %v6054, %v6055
    %v6057 = vsel %vm6048, %v5553, -inf
    %v6058 = vmax.f32 %v5537, %v6057
    %v6059 = vrot.slane %v6058, 4
    %v6060 = vmax.f32 %v6058, %v6059
    %v6061 = vrot.slane %v6060, 2
    %v6062 = vmax.f32 %v6060, %v6061
    %v6063 = vrot.slane %v6062, 1
    %v6064 = vmax.f32 %v6062, %v6063
    %v6065 = vsel %vm6048, %v5586, -inf
    %v6066 = vmax.f32 %v5570, %v6065
    %v6067 = vrot.slane %v6066, 4
    %v6068 = vmax.f32 %v6066, %v6067
    %v6069 = vrot.slane %v6068, 2
    %v6070 = vmax.f32 %v6068, %v6069
    %v6071 = vrot.slane %v6070, 1
    %v6072 = vmax.f32 %v6070, %v6071
    %v6073 = vsel %vm6048, %v5619, -inf
    %v6074 = vmax.f32 %v5603, %v6073
    %v6075 = vrot.slane %v6074, 4
    %v6076 = vmax.f32 %v6074, %v6075
    %v6077 = vrot.slane %v6076, 2
    %v6078 = vmax.f32 %v6076, %v6077
    %v6079 = vrot.slane %v6078, 1
    %v6080 = vmax.f32 %v6078, %v6079
    %v6081 = vsel %vm6048, %v5652, -inf
    %v6082 = vmax.f32 %v5636, %v6081
    %v6083 = vrot.slane %v6082, 4
    %v6084 = vmax.f32 %v6082, %v6083
    %v6085 = vrot.slane %v6084, 2
    %v6086 = vmax.f32 %v6084, %v6085
    %v6087 = vrot.slane %v6086, 1
    %v6088 = vmax.f32 %v6086, %v6087
    %v6089 = vsel %vm6048, %v5685, -inf
    %v6090 = vmax.f32 %v5669, %v6089
    %v6091 = vrot.slane %v6090, 4
    %v6092 = vmax.f32 %v6090, %v6091
    %v6093 = vrot.slane %v6092, 2
    %v6094 = vmax.f32 %v6092, %v6093
    %v6095 = vrot.slane %v6094, 1
    %v6096 = vmax.f32 %v6094, %v6095
    %v6097 = vsel %vm6048, %v5718, -inf
    %v6098 = vmax.f32 %v5702, %v6097
    %v6099 = vrot.slane %v6098, 4
    %v6100 = vmax.f32 %v6098, %v6099
    %v6101 = vrot.slane %v6100, 2
    %v6102 = vmax.f32 %v6100, %v6101
    %v6103 = vrot.slane %v6102, 1
    %v6104 = vmax.f32 %v6102, %v6103
    %v6105 = vsel %vm6048, %v5751, -inf
    %v6106 = vmax.f32 %v5735, %v6105
    %v6107 = vrot.slane %v6106, 4
    %v6108 = vmax.f32 %v6106, %v6107
    %v6109 = vrot.slane %v6108, 2
    %v6110 = vmax.f32 %v6108, %v6109
    %v6111 = vrot.slane %v6110, 1
    %v6112 = vmax.f32 %v6110, %v6111
    %v6113 = vsel %vm6048, %v5784, -inf
    %v6114 = vmax.f32 %v5768, %v6113
    %v6115 = vrot.slane %v6114, 4
    %v6116 = vmax.f32 %v6114, %v6115
    %v6117 = vrot.slane %v6116, 2
    %v6118 = vmax.f32 %v6116, %v6117
    %v6119 = vrot.slane %v6118, 1
    %v6120 = vmax.f32 %v6118, %v6119
    %v6121 = vsel %vm6048, %v5817, -inf
    %v6122 = vmax.f32 %v5801, %v6121
    %v6123 = vrot.slane %v6122, 4
    %v6124 = vmax.f32 %v6122, %v6123
    %v6125 = vrot.slane %v6124, 2
    %v6126 = vmax.f32 %v6124, %v6125
    %v6127 = vrot.slane %v6126, 1
    %v6128 = vmax.f32 %v6126, %v6127
    %v6129 = vsel %vm6048, %v5850, -inf
    %v6130 = vmax.f32 %v5834, %v6129
    %v6131 = vrot.slane %v6130, 4
    %v6132 = vmax.f32 %v6130, %v6131
    %v6133 = vrot.slane %v6132, 2
    %v6134 = vmax.f32 %v6132, %v6133
    %v6135 = vrot.slane %v6134, 1
    %v6136 = vmax.f32 %v6134, %v6135
    %v6137 = vsel %vm6048, %v5883, -inf
    %v6138 = vmax.f32 %v5867, %v6137
    %v6139 = vrot.slane %v6138, 4
    %v6140 = vmax.f32 %v6138, %v6139
    %v6141 = vrot.slane %v6140, 2
    %v6142 = vmax.f32 %v6140, %v6141
    %v6143 = vrot.slane %v6142, 1
    %v6144 = vmax.f32 %v6142, %v6143
    %v6145 = vsel %vm6048, %v5916, -inf
    %v6146 = vmax.f32 %v5900, %v6145
    %v6147 = vrot.slane %v6146, 4
    %v6148 = vmax.f32 %v6146, %v6147
    %v6149 = vrot.slane %v6148, 2
    %v6150 = vmax.f32 %v6148, %v6149
    %v6151 = vrot.slane %v6150, 1
    %v6152 = vmax.f32 %v6150, %v6151
    %v6153 = vsel %vm6048, %v5949, -inf
    %v6154 = vmax.f32 %v5933, %v6153
    %v6155 = vrot.slane %v6154, 4
    %v6156 = vmax.f32 %v6154, %v6155
    %v6157 = vrot.slane %v6156, 2
    %v6158 = vmax.f32 %v6156, %v6157
    %v6159 = vrot.slane %v6158, 1
    %v6160 = vmax.f32 %v6158, %v6159
    %v6161 = vsel %vm6048, %v5982, -inf
    %v6162 = vmax.f32 %v5966, %v6161
    %v6163 = vrot.slane %v6162, 4
    %v6164 = vmax.f32 %v6162, %v6163
    %v6165 = vrot.slane %v6164, 2
    %v6166 = vmax.f32 %v6164, %v6165
    %v6167 = vrot.slane %v6166, 1
    %v6168 = vmax.f32 %v6166, %v6167
    %v6169 = vsel %vm6048, %v6015, -inf
    %v6170 = vmax.f32 %v5999, %v6169
    %v6171 = vrot.slane %v6170, 4
    %v6172 = vmax.f32 %v6170, %v6171
    %v6173 = vrot.slane %v6172, 2
    %v6174 = vmax.f32 %v6172, %v6173
    %v6175 = vrot.slane %v6174, 1
    %v6176 = vmax.f32 %v6174, %v6175
    %v6177 = vpack.c.bf16 %v6056, %v6056
    %v6178 = vpack.c.bf16 %v6064, %v6064
    %v6179 = vpack.c.bf16 %v6072, %v6072
    %v6180 = vpack.c.bf16 %v6080, %v6080
    %v6181 = vpack.c.bf16 %v6088, %v6088
    %v6182 = vpack.c.bf16 %v6096, %v6096
    %v6183 = vpack.c.bf16 %v6104, %v6104
    %v6184 = vpack.c.bf16 %v6112, %v6112
    %v6185 = vpack.c.bf16 %v6120, %v6120
    %v6186 = vpack.c.bf16 %v6128, %v6128
    %v6187 = vpack.c.bf16 %v6136, %v6136
    %v6188 = vpack.c.bf16 %v6144, %v6144
    %v6189 = vpack.c.bf16 %v6152, %v6152
    %v6190 = vpack.c.bf16 %v6160, %v6160
    %v6191 = vpack.c.bf16 %v6168, %v6168
    %v6192 = vpack.c.bf16 %v6176, %v6176
    %v6193 = vld [vmem:[#allocation8] sm:$0xf]
    %v6194 = vld [vmem:[#allocation8 + $0x4] sm:$0xf]
    %v6195 = vld [vmem:[#allocation8 + $0x8] sm:$0xf]
    %v6196 = vld [vmem:[#allocation8 + $0xc] sm:$0xf]
    %v6197 = vld [vmem:[#allocation8 + $0x10] sm:$0xf]
    %v6198 = vld [vmem:[#allocation8 + $0x14] sm:$0xf]
    %v6199 = vld [vmem:[#allocation8 + $0x18] sm:$0xf]
    %v6200 = vld [vmem:[#allocation8 + $0x1c] sm:$0xf]
    %v6201 = vld [vmem:[#allocation8 + $0x20] sm:$0xf]
    %v6202 = vld [vmem:[#allocation8 + $0x24] sm:$0xf]
    %v6203 = vld [vmem:[#allocation8 + $0x28] sm:$0xf]
    %v6204 = vld [vmem:[#allocation8 + $0x2c] sm:$0xf]
    %v6205 = vld [vmem:[#allocation8 + $0x30] sm:$0xf]
    %v6206 = vld [vmem:[#allocation8 + $0x34] sm:$0xf]
    %v6207 = vld [vmem:[#allocation8 + $0x38] sm:$0xf]
    %v6208 = vld [vmem:[#allocation8 + $0x3c] sm:$0xf]
    %v6209 = vld [vmem:[%s5] sm:$0x1]
    %v6211 = vlaneseq
    %v6212 = vshrl.u32 %v6211, 7
    %v6213 = vsub.s32 0, %v6212
    %v6214 = vrot.slane %v6209, %v6213
    %v6232 = vunpack.c.l.b16 %v6177
    %v6233 = vunpack.c.l.b16 %v6178
    %v6234 = vunpack.c.l.b16 %v6179
    %v6235 = vunpack.c.l.b16 %v6180
    %v6236 = vunpack.c.l.b16 %v6181
    %v6237 = vunpack.c.l.b16 %v6182
    %v6238 = vunpack.c.l.b16 %v6183
    %v6239 = vunpack.c.l.b16 %v6184
    %v6240 = vunpack.c.l.b16 %v6185
    %v6241 = vunpack.c.l.b16 %v6186
    %v6242 = vunpack.c.l.b16 %v6187
    %v6243 = vunpack.c.l.b16 %v6188
    %v6244 = vunpack.c.l.b16 %v6189
    %v6245 = vunpack.c.l.b16 %v6190
    %v6246 = vunpack.c.l.b16 %v6191
    %v6247 = vunpack.c.l.b16 %v6192
    %vm6248 = vcmask 1041409
    %v6249 = vsel %vm6248, %v6233, %v6232
    %vm6250 = vcmask 1042434
    %v6251 = vsel %vm6250, %v6234, %v6249
    %vm6252 = vcmask 1043459
    %v6253 = vsel %vm6252, %v6235, %v6251
    %vm6254 = vcmask 1044484
    %v6255 = vsel %vm6254, %v6236, %v6253
    %vm6256 = vcmask 1045509
    %v6257 = vsel %vm6256, %v6237, %v6255
    %vm6258 = vcmask 1046534
    %v6259 = vsel %vm6258, %v6238, %v6257
    %vm6260 = vcmask 1047559
    %v6261 = vsel %vm6260, %v6239, %v6259
    %v6262 = vsel %vm6248, %v6241, %v6240
    %v6263 = vsel %vm6250, %v6242, %v6262
    %v6264 = vsel %vm6252, %v6243, %v6263
    %v6265 = vsel %vm6254, %v6244, %v6264
    %v6266 = vsel %vm6256, %v6245, %v6265
    %v6267 = vsel %vm6258, %v6246, %v6266
    %v6268 = vsel %vm6260, %v6247, %v6267
    %v6269 = vpack.c.b16 %v6268, %v6261
    %v6287 = vunpack.c.l.b16 %v6193
    %v6288 = vunpack.c.l.b16 %v6194
    %v6289 = vunpack.c.l.b16 %v6195
    %v6290 = vunpack.c.l.b16 %v6196
    %v6291 = vunpack.c.l.b16 %v6197
    %v6292 = vunpack.c.l.b16 %v6198
    %v6293 = vunpack.c.l.b16 %v6199
    %v6294 = vunpack.c.l.b16 %v6200
    %v6295 = vunpack.c.l.b16 %v6201
    %v6296 = vunpack.c.l.b16 %v6202
    %v6297 = vunpack.c.l.b16 %v6203
    %v6298 = vunpack.c.l.b16 %v6204
    %v6299 = vunpack.c.l.b16 %v6205
    %v6300 = vunpack.c.l.b16 %v6206
    %v6301 = vunpack.c.l.b16 %v6207
    %v6302 = vunpack.c.l.b16 %v6208
    %v6303 = vpack.c.b16 %v6288, %v6287
    %v6304 = vpack.c.b16 %v6290, %v6289
    %v6305 = vpack.c.b16 %v6292, %v6291
    %v6306 = vpack.c.b16 %v6294, %v6293
    %v6307 = vpack.c.b16 %v6296, %v6295
    %v6308 = vpack.c.b16 %v6298, %v6297
    %v6309 = vpack.c.b16 %v6300, %v6299
    %v6310 = vpack.c.b16 %v6302, %v6301
    %6319 = vmatprep.subr.bf16.mxu0 0
    %6320 = vmatpush1.bf16.msra.mxu0 %v6303
    %6321 = vmatprep.subr.bf16.mxu0 0
    %6322 = vmatpush1.bf16.msra.mxu0 %v6304
    %6323 = vmatprep.subr.bf16.mxu0 0
    %6324 = vmatpush1.bf16.msra.mxu0 %v6305
    %6325 = vmatprep.subr.bf16.mxu0 0
    %6326 = vmatpush1.bf16.msra.mxu0 %v6306
    %6327 = vmatprep.subr.bf16.mxu0 0
    %6328 = vmatpush1.bf16.msra.mxu0 %v6307
    %6329 = vmatprep.subr.bf16.mxu0 0
    %6330 = vmatpush1.bf16.msra.mxu0 %v6308
    %6331 = vmatprep.subr.bf16.mxu0 0
    %6332 = vmatpush1.bf16.msra.mxu0 %v6309
    %6333 = vmatprep.subr.bf16.mxu0 0
    %6334 = vmatpush1.bf16.msra.mxu0 %v6310
    %6335 = vmatprep.subr.bf16.mxu0 0
    %6336 = vmatpush1.bf16.msra.mxu0 0
    %6337 = vmatprep.subr.bf16.mxu0 0
    %6338 = vmatpush1.bf16.msra.mxu0 0
    %6339 = vmatprep.subr.bf16.mxu0 0
    %6340 = vmatpush1.bf16.msra.mxu0 0
    %6341 = vmatprep.subr.bf16.mxu0 0
    %6342 = vmatpush1.bf16.msra.mxu0 0
    %6343 = vmatprep.subr.bf16.mxu0 0
    %6344 = vmatpush1.bf16.msra.mxu0 0
    %6345 = vmatprep.subr.bf16.mxu0 0
    %6346 = vmatpush1.bf16.msra.mxu0 0
    %6347 = vmatprep.subr.bf16.mxu0 0
    %6348 = vmatpush1.bf16.msra.mxu0 0
    %6349 = vmatprep.subr.bf16.mxu0 0
    %6350 = vmatpush1.bf16.msra.mxu0 0
    %6351 = vmatprep.mubr.bf16.mxu0 0
    %6352 = vmatmul.mubr.bf16.gmra.mrb[0].mxu0 %v6269
    %v6353 = vpop.f32.mrb[0].mxu0
    %v6354 = vadd.f32 %v6214, %v6353
    %v6355 = vpop.f32.mrb[0].mxu0
    %v6356 = vpop.f32.mrb[0].mxu0
    %v6357 = vadd.f32 %v6214, %v6356
    %v6358 = vpop.f32.mrb[0].mxu0
    %6359 = vdwg.mxu0
    %6360 = vst [vmem:[#allocation10] sm:$0xff] %v6354
    %6361 = vst [vmem:[#allocation10 + $0x8] sm:$0xff] %v6357
    // Predicated region
    $region42: #{tpu_custom_call.1} parent=1 // pred_check
      _
    $region43: #{tpu_custom_call.1} parent=1 // pred_check_branch
      %6363 = sbr.rel (0) target = $region45
    $region44: #{tpu_custom_call.1} parent=1 // pred_region
      %s6365 = ssub.s32 256, 256
      %6366 = vsyncadd [#allocation4], %s6365
      %s6367 = sshll.u32 [#allocation10], 4
      %s6368 = int_to_ptr.vmem [resolvable:$true] %s6367
      %6373 = dma.vmem_to_hbm [thread:$0]  %s6368, 256, %s6, [#allocation4], 128, 128, 8
    $region45: #{tpu_custom_call.1} parent=1 // pred_fallthru
      _
    // Predicated region
    $region46: #{tpu_custom_call.1} parent=1 // pred_check
      _
    $region47: #{tpu_custom_call.1} parent=1 // pred_check_branch
      %6375 = sbr.rel (0) target = $region49
    $region48: #{tpu_custom_call.1} parent=1 // pred_region
      %6376 = dma.done [#allocation4], 256
    $region49: #{tpu_custom_call.1} parent=1 // pred_fallthru
      _
    %6377 = vsyncpa [#allocation3], 1
    %6378 = vsyncpa [#allocation6], 1
    %6379 = vsyncpa [#allocation9], 1
    %6380 = vsyncpa [#allocation4], 1

</llo_original>
